<compile_context>
chip_gen: v6e
topology: v6e:2x2x1
jax: 0.10.0
libtpu: 0.0.40
codegen_flags: <defaults>
</compile_context>

<pallas_src>
import math
import jax
import jax.numpy as jnp
from jax import lax
from jax.experimental import pallas as pl
from jax.experimental.pallas import tpu as pltpu

# ----------------------- configuration (small shapes) -----------------------
B = 2                                # batch
C = 3                                # image channels
IMG = 32                             # image height/width
P = 16                               # patch size (ViT-B/16 patching)
N_PATCH = (IMG // P) * (IMG // P)    # 4
S = N_PATCH + 1                      # seq length incl. class token = 5
S_PAD = 8                            # sublane-aligned padded seq length
D = 64                               # hidden dim (scaled down from 768)
HEADS = 4
HD = D // HEADS                      # 16
MLP = 128                            # mlp dim (scaled down from 3072)
LAYERS = 2                           # encoder depth (scaled down from 12)
EPS = 1e-6                           # ViT LayerNorm eps
LANE = 128                           # lane-padded head output width
CPP = C * P * P                      # 768
SCALE = 1.0 / math.sqrt(HD)
NT_DIMS = (((1,), (1,)), ((), ()))   # contract last dim of lhs & rhs (q @ k^T)


# ------------------------------- Pallas kernel -------------------------------
def _rep_spec(shape):
    # same (whole-array) block for every batch grid step -> stays VMEM-resident
    zeros = (0,) * len(shape)
    return pl.BlockSpec(shape, lambda i, _z=zeros: _z)


def _layer_norm(v, g, b):
    mu = jnp.mean(v, axis=-1, keepdims=True)
    var = jnp.mean((v - mu) ** 2, axis=-1, keepdims=True)
    return (v - mu) * lax.rsqrt(var + EPS) * g + b


def _gelu(v):
    # TODO(synk): PyTorch nn.GELU() uses the exact erf form; tanh approximation
    # kept here for Mosaic-safe lowering (small numerical divergence).
    c = 0.7978845608028654  # sqrt(2/pi)
    return 0.5 * v * (1.0 + jnp.tanh(c * (v + 0.044715 * v * v * v)))


def fused_vit_kernel(
    patches_ref, posadd_ref, patch_w_ref,
    ln_f_g_ref, ln_f_b_ref, head_w_ref, head_b_ref,
    ln1_g_ref, ln1_b_ref,
    q_w_ref, q_b_ref, k_w_ref, k_b_ref, v_w_ref, v_b_ref,
    out_w_ref, out_b_ref,
    ln2_g_ref, ln2_b_ref, mlp_w1_ref, mlp_b1_ref, mlp_w2_ref, mlp_b2_ref,
    o_ref,
):
    f32 = jnp.float32

    # ---- patch embedding (conv_proj as one GEMM); cls/pos/conv-bias add is a
    # single precomputed additive tensor (zero patch rows handle the cls slot) ----
    x = jnp.dot(patches_ref[...], patch_w_ref[...], preferred_element_type=f32)
    x = x + posadd_ref[...]                                 # (S_PAD, D)

    # key-padding mask: columns >= S are padded tokens (rows never leak back)
    col_id = lax.broadcasted_iota(jnp.int32, (S_PAD, S_PAD), 1)
    key_mask = col_id < S
    neg = jnp.float32(-1e30)

    for l in range(LAYERS):
        # --- MHA block (pre-LN; lane-aligned q/k/v projections) ---
        y = _layer_norm(x, ln1_g_ref[l], ln1_b_ref[l])
        q = jnp.dot(y, q_w_ref[l], preferred_element_type=f32) + q_b_ref[l]
        k = jnp.dot(y, k_w_ref[l], preferred_element_type=f32) + k_b_ref[l]
        v = jnp.dot(y, v_w_ref[l], preferred_element_type=f32) + v_b_ref[l]
        ow = out_w_ref[l]                                   # (D, D)
        acc = jnp.zeros((S_PAD, D), f32)
        for h in range(HEADS):
            lo = h * HD
            qh = q[:, lo:lo + HD]
            kh = k[:, lo:lo + HD]
            vh = v[:, lo:lo + HD]
            # q @ k^T without materializing a transpose (contract HD axis)
            s = lax.dot_general(qh, kh, NT_DIMS, preferred_element_type=f32)
            s = s * SCALE
            s = jnp.where(key_mask, s, neg)
            s = s - jnp.max(s, axis=-1, keepdims=True)
            p = jnp.exp(s)
            p = p / jnp.sum(p, axis=-1, keepdims=True)      # exact softmax denom
            oh = jnp.dot(p, vh, preferred_element_type=f32)           # (S_PAD, HD)
            # head merge folded into the output projection
            acc = acc + jnp.dot(oh, ow[lo:lo + HD, :], preferred_element_type=f32)
        x = x + acc + out_b_ref[l]                          # residual fused

        # --- MLP block (LN + GELU + residual fused) ---
        z = _layer_norm(x, ln2_g_ref[l], ln2_b_ref[l])
        z = jnp.dot(z, mlp_w1_ref[l], preferred_element_type=f32) + mlp_b1_ref[l]
        z = _gelu(z)
        x = x + jnp.dot(z, mlp_w2_ref[l], preferred_element_type=f32) + mlp_b2_ref[l]

    # --- final LN + head Linear(D,1) (lane-replicated) + sigmoid*18 ---
    x = _layer_norm(x, ln_f_g_ref[...], ln_f_b_ref[...])
    logit = jnp.dot(x, head_w_ref[...], preferred_element_type=f32) + head_b_ref[...]
    o_ref[...] = (18.0 * jax.nn.sigmoid(logit)).astype(o_ref.dtype)   # (8, 128) store


# ------------------------------ parameter setup ------------------------------
def init_params(key):
    def nrm(k, shape, scale=0.02):
        return scale * jax.random.normal(k, shape, dtype=jnp.float32)

    keys = iter(jax.random.split(key, 8 + LAYERS * 16))
    p = {}
    # conv_proj: Conv2d(C, D, kernel=P, stride=P) -> matmul form (C*P*P, D)
    w_conv = nrm(next(keys), (D, C, P, P))
    p["patch_w"] = w_conv.reshape(D, CPP).T                        # (CPP, D)
    p["patch_b"] = nrm(next(keys), (1, D))
    p["class_token"] = jnp.zeros((1, D), jnp.float32)              # torchvision init
    p["pos_embedding"] = nrm(next(keys), (S, D))

    stacks = {n: [] for n in
              ("ln1_g", "ln1_b", "q_w", "q_b", "k_w", "k_b", "v_w", "v_b",
               "out_w", "out_b", "ln2_g", "ln2_b",
               "mlp_w1", "mlp_b1", "mlp_w2", "mlp_b2")}
    for _ in range(LAYERS):
        stacks["ln1_g"].append(jnp.ones((1, D), jnp.float32))
        stacks["ln1_b"].append(jnp.zeros((1, D), jnp.float32))
        stacks["q_w"].append(nrm(next(keys), (D, D)))
        stacks["q_b"].append(nrm(next(keys), (1, D)))
        stacks["k_w"].append(nrm(next(keys), (D, D)))
        stacks["k_b"].append(nrm(next(keys), (1, D)))
        stacks["v_w"].append(nrm(next(keys), (D, D)))
        stacks["v_b"].append(nrm(next(keys), (1, D)))
        stacks["out_w"].append(nrm(next(keys), (D, D)))
        stacks["out_b"].append(nrm(next(keys), (1, D)))
        stacks["ln2_g"].append(jnp.ones((1, D), jnp.float32))
        stacks["ln2_b"].append(jnp.zeros((1, D), jnp.float32))
        stacks["mlp_w1"].append(nrm(next(keys), (D, MLP)))
        stacks["mlp_b1"].append(nrm(next(keys), (1, MLP)))
        stacks["mlp_w2"].append(nrm(next(keys), (MLP, D)))
        stacks["mlp_b2"].append(nrm(next(keys), (1, D)))
    for n, lst in stacks.items():
        p[n] = jnp.stack(lst)

    p["ln_f_g"] = jnp.ones((1, D), jnp.float32)
    p["ln_f_b"] = jnp.zeros((1, D), jnp.float32)
    head_w = nrm(next(keys), (D, 1))                               # Linear(D, 1)
    head_b = nrm(next(keys), (1, 1))
    p["head_w"] = jnp.tile(head_w, (1, LANE))                      # lane-replicated
    p["head_b"] = jnp.tile(head_b, (1, LANE))
    return p


# --------------------------------- forward -----------------------------------
def covid_vit_forward(params, x):
    # x: (B, C, IMG, IMG) NCHW
    b, c, h, w = x.shape
    gh, gw = h // P, w // P

    # patchify = Conv2d(kernel=P, stride=P) operands (pure layout, done once),
    # pre-padded so row 0 (cls slot) and rows S..S_PAD-1 of each image are zero.
    patches = x.reshape(b, c, gh, P, gw, P)
    patches = patches.transpose(0, 2, 4, 1, 3, 5).reshape(b, gh * gw, c * P * P)
    patches_pad = jnp.zeros((b, S_PAD, CPP), jnp.float32)
    patches_pad = patches_pad.at[:, 1:S, :].set(patches)
    patches_pad = patches_pad.reshape(b * S_PAD, CPP)

    # additive tensor: cls+pos[0] at the cls row, pos[1:S]+conv_bias at patch
    # rows, zeros at pad rows (conv bias folded here so the kernel needs no bias).
    posadd = jnp.zeros((S_PAD, D), jnp.float32)
    posadd = posadd.at[0:1, :].set(params["class_token"]
                                   + params["pos_embedding"][0:1, :])
    posadd = posadd.at[1:S, :].set(params["pos_embedding"][1:S, :]
                                   + params["patch_b"])
    posadd = jnp.tile(posadd[None], (b, 1, 1)).reshape(b * S_PAD, D)

    in_specs = [
        pl.BlockSpec((S_PAD, CPP), lambda i: (i, 0)),   # patches (per-batch block)
        pl.BlockSpec((S_PAD, D), lambda i: (i, 0)),     # posadd  (per-batch block)
        _rep_spec((CPP, D)),                            # patch_w
        _rep_spec((1, D)),                              # ln_f_g
        _rep_spec((1, D)),                              # ln_f_b
        _rep_spec((D, LANE)),                           # head_w (lane-replicated)
        _rep_spec((1, LANE)),                           # head_b
        _rep_spec((LAYERS, 1, D)),                      # ln1_g
        _rep_spec((LAYERS, 1, D)),                      # ln1_b
        _rep_spec((LAYERS, D, D)),                      # q_w
        _rep_spec((LAYERS, 1, D)),                      # q_b
        _rep_spec((LAYERS, D, D)),                      # k_w
        _rep_spec((LAYERS, 1, D)),                      # k_b
        _rep_spec((LAYERS, D, D)),                      # v_w
        _rep_spec((LAYERS, 1, D)),                      # v_b
        _rep_spec((LAYERS, D, D)),                      # out_w
        _rep_spec((LAYERS, 1, D)),                      # out_b
        _rep_spec((LAYERS, 1, D)),                      # ln2_g
        _rep_spec((LAYERS, 1, D)),                      # ln2_b
        _rep_spec((LAYERS, D, MLP)),                    # mlp_w1
        _rep_spec((LAYERS, 1, MLP)),                    # mlp_b1
        _rep_spec((LAYERS, MLP, D)),                    # mlp_w2
        _rep_spec((LAYERS, 1, D)),                      # mlp_b2
    ]

    out = pl.pallas_call(
        fused_vit_kernel,
        out_shape=jax.ShapeDtypeStruct((b * S_PAD, LANE), jnp.float32),
        grid=(b,),
        in_specs=in_specs,
        out_specs=pl.BlockSpec((S_PAD, LANE), lambda i: (i, 0)),
        compiler_params=pltpu.CompilerParams(dimension_semantics=("parallel",)),
    )(patches_pad, posadd,
      params["patch_w"], params["ln_f_g"], params["ln_f_b"],
      params["head_w"], params["head_b"],
      params["ln1_g"], params["ln1_b"],
      params["q_w"], params["q_b"], params["k_w"], params["k_b"],
      params["v_w"], params["v_b"], params["out_w"], params["out_b"],
      params["ln2_g"], params["ln2_b"],
      params["mlp_w1"], params["mlp_b1"], params["mlp_w2"], params["mlp_b2"])

    # class-token row (row 0 of each batch block), lane 0 == sigmoid(head)*18
    return out.reshape(b, S_PAD, LANE)[:, 0, 0]             # (B,)


# ----------------------------------- main -------------------------------------
if __name__ == "__main__":
    key = jax.random.PRNGKey(0)
    pkey, xkey = jax.random.split(key)
    params = init_params(pkey)
    x = jax.random.normal(xkey, (B, C, IMG, IMG), dtype=jnp.float32)

    out = jax.jit(covid_vit_forward)(params, x)
    out = jax.block_until_ready(out)

    assert out.shape == (B,), out.shape
    assert bool(jnp.all(jnp.isfinite(out)))
    assert bool(jnp.all((out >= 0.0) & (out <= 18.0)))
    print("KERNEL_OK")
</pallas_src>

<mosaic_0001>
module attributes {stable_mosaic.version = 11 : i64} {
  func.func @fused_vit_kernel(%arg0: i32, %arg1: memref<8x768xf32, #tpu.memory_space<vmem>>, %arg2: memref<8x64xf32, #tpu.memory_space<vmem>>, %arg3: memref<768x64xf32, #tpu.memory_space<vmem>>, %arg4: memref<1x64xf32, #tpu.memory_space<vmem>>, %arg5: memref<1x64xf32, #tpu.memory_space<vmem>>, %arg6: memref<64x128xf32, #tpu.memory_space<vmem>>, %arg7: memref<1x128xf32, #tpu.memory_space<vmem>>, %arg8: memref<2x1x64xf32, #tpu.memory_space<vmem>>, %arg9: memref<2x1x64xf32, #tpu.memory_space<vmem>>, %arg10: memref<2x64x64xf32, #tpu.memory_space<vmem>>, %arg11: memref<2x1x64xf32, #tpu.memory_space<vmem>>, %arg12: memref<2x64x64xf32, #tpu.memory_space<vmem>>, %arg13: memref<2x1x64xf32, #tpu.memory_space<vmem>>, %arg14: memref<2x64x64xf32, #tpu.memory_space<vmem>>, %arg15: memref<2x1x64xf32, #tpu.memory_space<vmem>>, %arg16: memref<2x64x64xf32, #tpu.memory_space<vmem>>, %arg17: memref<2x1x64xf32, #tpu.memory_space<vmem>>, %arg18: memref<2x1x64xf32, #tpu.memory_space<vmem>>, %arg19: memref<2x1x64xf32, #tpu.memory_space<vmem>>, %arg20: memref<2x64x128xf32, #tpu.memory_space<vmem>>, %arg21: memref<2x1x128xf32, #tpu.memory_space<vmem>>, %arg22: memref<2x128x64xf32, #tpu.memory_space<vmem>>, %arg23: memref<2x1x64xf32, #tpu.memory_space<vmem>>, %arg24: memref<8x128xf32, #tpu.memory_space<vmem>>) attributes {dimension_semantics = [#tpu.dimension_semantics<parallel>], iteration_bounds = array<i64: 2>, scalar_prefetch = 0 : i64, scratch_operands = 0 : i64, tpu.core_type = #tpu.core_type<tc>, window_params = [{transform_indices = @transform_0, window_bounds = array<i64: 8, 768>}, {transform_indices = @transform_1, window_bounds = array<i64: 8, 64>}, {pipeline_mode = #tpu.pipeline_mode<synchronous>, transform_indices = @transform_2, window_bounds = array<i64: 768, 64>}, {pipeline_mode = #tpu.pipeline_mode<synchronous>, transform_indices = @transform_3, window_bounds = array<i64: 1, 64>}, {pipeline_mode = #tpu.pipeline_mode<synchronous>, transform_indices = @transform_4, window_bounds = array<i64: 1, 64>}, {pipeline_mode = #tpu.pipeline_mode<synchronous>, transform_indices = @transform_5, window_bounds = array<i64: 64, 128>}, {pipeline_mode = #tpu.pipeline_mode<synchronous>, transform_indices = @transform_6, window_bounds = array<i64: 1, 128>}, {pipeline_mode = #tpu.pipeline_mode<synchronous>, transform_indices = @transform_7, window_bounds = array<i64: 2, 1, 64>}, {pipeline_mode = #tpu.pipeline_mode<synchronous>, transform_indices = @transform_8, window_bounds = array<i64: 2, 1, 64>}, {pipeline_mode = #tpu.pipeline_mode<synchronous>, transform_indices = @transform_9, window_bounds = array<i64: 2, 64, 64>}, {pipeline_mode = #tpu.pipeline_mode<synchronous>, transform_indices = @transform_10, window_bounds = array<i64: 2, 1, 64>}, {pipeline_mode = #tpu.pipeline_mode<synchronous>, transform_indices = @transform_11, window_bounds = array<i64: 2, 64, 64>}, {pipeline_mode = #tpu.pipeline_mode<synchronous>, transform_indices = @transform_12, window_bounds = array<i64: 2, 1, 64>}, {pipeline_mode = #tpu.pipeline_mode<synchronous>, transform_indices = @transform_13, window_bounds = array<i64: 2, 64, 64>}, {pipeline_mode = #tpu.pipeline_mode<synchronous>, transform_indices = @transform_14, window_bounds = array<i64: 2, 1, 64>}, {pipeline_mode = #tpu.pipeline_mode<synchronous>, transform_indices = @transform_15, window_bounds = array<i64: 2, 64, 64>}, {pipeline_mode = #tpu.pipeline_mode<synchronous>, transform_indices = @transform_16, window_bounds = array<i64: 2, 1, 64>}, {pipeline_mode = #tpu.pipeline_mode<synchronous>, transform_indices = @transform_17, window_bounds = array<i64: 2, 1, 64>}, {pipeline_mode = #tpu.pipeline_mode<synchronous>, transform_indices = @transform_18, window_bounds = array<i64: 2, 1, 64>}, {pipeline_mode = #tpu.pipeline_mode<synchronous>, transform_indices = @transform_19, window_bounds = array<i64: 2, 64, 128>}, {pipeline_mode = #tpu.pipeline_mode<synchronous>, transform_indices = @transform_20, window_bounds = array<i64: 2, 1, 128>}, {pipeline_mode = #tpu.pipeline_mode<synchronous>, transform_indices = @transform_21, window_bounds = array<i64: 2, 128, 64>}, {pipeline_mode = #tpu.pipeline_mode<synchronous>, transform_indices = @transform_22, window_bounds = array<i64: 2, 1, 64>}, {transform_indices = @transform_23, window_bounds = array<i64: 8, 128>}]} {
    %c0 = arith.constant 0 : index
    %c0_0 = arith.constant 0 : index
    %0 = vector.load %arg1[%c0, %c0_0] : memref<8x768xf32, #tpu.memory_space<vmem>>, vector<8x768xf32>
    %c0_1 = arith.constant 0 : index
    %c0_2 = arith.constant 0 : index
    %1 = vector.load %arg3[%c0_1, %c0_2] : memref<768x64xf32, #tpu.memory_space<vmem>>, vector<768x64xf32>
    %cst = arith.constant dense<0.000000e+00> : vector<8x64xf32>
    %2 = tpu.matmul %0, %1, %cst {dimension_numbers = #tpu.dot_dimension_numbers<[1], [0], [0], [1], [0, 0, 1, 1], [], []>} : vector<8x768xf32>, vector<768x64xf32>, vector<8x64xf32> -> vector<8x64xf32>
    %c0_3 = arith.constant 0 : index
    %c0_4 = arith.constant 0 : index
    %3 = vector.load %arg2[%c0_3, %c0_4] : memref<8x64xf32, #tpu.memory_space<vmem>>, vector<8x64xf32>
    %4 = arith.addf %2, %3 : vector<8x64xf32>
    %5 = tpu.iota {dimensions = array<i32: 1>} : vector<8x8xi32>
    %c5_i32 = arith.constant 5 : i32
    %6 = vector.broadcast %c5_i32 : i32 to vector<8x8xi32>
    %7 = arith.cmpi slt, %5, %6 : vector<8x8xi32>
    %c0_5 = arith.constant 0 : index
    %c0_6 = arith.constant 0 : index
    %c0_7 = arith.constant 0 : index
    %8 = vector.load %arg8[%c0_5, %c0_6, %c0_7] : memref<2x1x64xf32, #tpu.memory_space<vmem>>, vector<1x1x64xf32>
    %9 = vector.shape_cast %8 : vector<1x1x64xf32> to vector<1x64xf32>
    %c0_8 = arith.constant 0 : index
    %c0_9 = arith.constant 0 : index
    %c0_10 = arith.constant 0 : index
    %10 = vector.load %arg9[%c0_8, %c0_9, %c0_10] : memref<2x1x64xf32, #tpu.memory_space<vmem>>, vector<1x1x64xf32>
    %11 = vector.shape_cast %10 : vector<1x1x64xf32> to vector<1x64xf32>
    %cst_11 = arith.constant dense<0.000000e+00> : vector<8xf32>
    %12 = vector.multi_reduction <add>, %4, %cst_11 [1] : vector<8x64xf32> to vector<8xf32>
    %13 = vector.shape_cast %12 : vector<8xf32> to vector<8x1xf32>
    %cst_12 = arith.constant 6.400000e+01 : f32
    %14 = vector.broadcast %cst_12 : f32 to vector<8x1xf32>
    %15 = arith.divf %13, %14 : vector<8x1xf32>
    %16 = vector.broadcast %15 : vector<8x1xf32> to vector<8x64xf32>
    %17 = arith.subf %4, %16 : vector<8x64xf32>
    %18 = arith.mulf %17, %17 : vector<8x64xf32>
    %cst_13 = arith.constant dense<0.000000e+00> : vector<8xf32>
    %19 = vector.multi_reduction <add>, %18, %cst_13 [1] : vector<8x64xf32> to vector<8xf32>
    %20 = vector.shape_cast %19 : vector<8xf32> to vector<8x1xf32>
    %cst_14 = arith.constant 6.400000e+01 : f32
    %21 = vector.broadcast %cst_14 : f32 to vector<8x1xf32>
    %22 = arith.divf %20, %21 : vector<8x1xf32>
    %23 = vector.broadcast %15 : vector<8x1xf32> to vector<8x64xf32>
    %24 = arith.subf %4, %23 : vector<8x64xf32>
    %cst_15 = arith.constant 9.99999997E-7 : f32
    %25 = vector.broadcast %cst_15 : f32 to vector<8x1xf32>
    %26 = arith.addf %22, %25 : vector<8x1xf32>
    %27 = math.rsqrt %26 : vector<8x1xf32>
    %28 = vector.broadcast %27 : vector<8x1xf32> to vector<8x64xf32>
    %29 = arith.mulf %24, %28 : vector<8x64xf32>
    %30 = vector.broadcast %9 : vector<1x64xf32> to vector<8x64xf32>
    %31 = arith.mulf %29, %30 : vector<8x64xf32>
    %32 = vector.broadcast %11 : vector<1x64xf32> to vector<8x64xf32>
    %33 = arith.addf %31, %32 : vector<8x64xf32>
    %c0_16 = arith.constant 0 : index
    %c0_17 = arith.constant 0 : index
    %c0_18 = arith.constant 0 : index
    %34 = vector.load %arg10[%c0_16, %c0_17, %c0_18] : memref<2x64x64xf32, #tpu.memory_space<vmem>>, vector<1x64x64xf32>
    %35 = vector.shape_cast %34 : vector<1x64x64xf32> to vector<64x64xf32>
    %cst_19 = arith.constant dense<0.000000e+00> : vector<8x64xf32>
    %36 = tpu.matmul %33, %35, %cst_19 {dimension_numbers = #tpu.dot_dimension_numbers<[1], [0], [0], [1], [0, 0, 1, 1], [], []>} : vector<8x64xf32>, vector<64x64xf32>, vector<8x64xf32> -> vector<8x64xf32>
    %c0_20 = arith.constant 0 : index
    %c0_21 = arith.constant 0 : index
    %c0_22 = arith.constant 0 : index
    %37 = vector.load %arg11[%c0_20, %c0_21, %c0_22] : memref<2x1x64xf32, #tpu.memory_space<vmem>>, vector<1x1x64xf32>
    %38 = vector.shape_cast %37 : vector<1x1x64xf32> to vector<1x64xf32>
    %39 = vector.broadcast %38 : vector<1x64xf32> to vector<8x64xf32>
    %40 = arith.addf %36, %39 : vector<8x64xf32>
    %c0_23 = arith.constant 0 : index
    %c0_24 = arith.constant 0 : index
    %c0_25 = arith.constant 0 : index
    %41 = vector.load %arg12[%c0_23, %c0_24, %c0_25] : memref<2x64x64xf32, #tpu.memory_space<vmem>>, vector<1x64x64xf32>
    %42 = vector.shape_cast %41 : vector<1x64x64xf32> to vector<64x64xf32>
    %cst_26 = arith.constant dense<0.000000e+00> : vector<8x64xf32>
    %43 = tpu.matmul %33, %42, %cst_26 {dimension_numbers = #tpu.dot_dimension_numbers<[1], [0], [0], [1], [0, 0, 1, 1], [], []>} : vector<8x64xf32>, vector<64x64xf32>, vector<8x64xf32> -> vector<8x64xf32>
    %c0_27 = arith.constant 0 : index
    %c0_28 = arith.constant 0 : index
    %c0_29 = arith.constant 0 : index
    %44 = vector.load %arg13[%c0_27, %c0_28, %c0_29] : memref<2x1x64xf32, #tpu.memory_space<vmem>>, vector<1x1x64xf32>
    %45 = vector.shape_cast %44 : vector<1x1x64xf32> to vector<1x64xf32>
    %46 = vector.broadcast %45 : vector<1x64xf32> to vector<8x64xf32>
    %47 = arith.addf %43, %46 : vector<8x64xf32>
    %c0_30 = arith.constant 0 : index
    %c0_31 = arith.constant 0 : index
    %c0_32 = arith.constant 0 : index
    %48 = vector.load %arg14[%c0_30, %c0_31, %c0_32] : memref<2x64x64xf32, #tpu.memory_space<vmem>>, vector<1x64x64xf32>
    %49 = vector.shape_cast %48 : vector<1x64x64xf32> to vector<64x64xf32>
    %cst_33 = arith.constant dense<0.000000e+00> : vector<8x64xf32>
    %50 = tpu.matmul %33, %49, %cst_33 {dimension_numbers = #tpu.dot_dimension_numbers<[1], [0], [0], [1], [0, 0, 1, 1], [], []>} : vector<8x64xf32>, vector<64x64xf32>, vector<8x64xf32> -> vector<8x64xf32>
    %c0_34 = arith.constant 0 : index
    %c0_35 = arith.constant 0 : index
    %c0_36 = arith.constant 0 : index
    %51 = vector.load %arg15[%c0_34, %c0_35, %c0_36] : memref<2x1x64xf32, #tpu.memory_space<vmem>>, vector<1x1x64xf32>
    %52 = vector.shape_cast %51 : vector<1x1x64xf32> to vector<1x64xf32>
    %53 = vector.broadcast %52 : vector<1x64xf32> to vector<8x64xf32>
    %54 = arith.addf %50, %53 : vector<8x64xf32>
    %c0_37 = arith.constant 0 : index
    %c0_38 = arith.constant 0 : index
    %c0_39 = arith.constant 0 : index
    %55 = vector.load %arg16[%c0_37, %c0_38, %c0_39] : memref<2x64x64xf32, #tpu.memory_space<vmem>>, vector<1x64x64xf32>
    %56 = vector.shape_cast %55 : vector<1x64x64xf32> to vector<64x64xf32>
    %cst_40 = arith.constant 0.000000e+00 : f32
    %57 = vector.broadcast %cst_40 : f32 to vector<8x64xf32>
    %58 = vector.extract_strided_slice %40 {offsets = [0, 0], sizes = [8, 16], strides = [1, 1]} : vector<8x64xf32> to vector<8x16xf32>
    %59 = vector.extract_strided_slice %47 {offsets = [0, 0], sizes = [8, 16], strides = [1, 1]} : vector<8x64xf32> to vector<8x16xf32>
    %60 = vector.extract_strided_slice %54 {offsets = [0, 0], sizes = [8, 16], strides = [1, 1]} : vector<8x64xf32> to vector<8x16xf32>
    %cst_41 = arith.constant dense<0.000000e+00> : vector<8x8xf32>
    %61 = tpu.matmul %58, %59, %cst_41 {dimension_numbers = #tpu.dot_dimension_numbers<[1], [1], [0], [0], [0, 0, 1, 0], [], []>} : vector<8x16xf32>, vector<8x16xf32>, vector<8x8xf32> -> vector<8x8xf32>
    %cst_42 = arith.constant 2.500000e-01 : f32
    %62 = vector.broadcast %cst_42 : f32 to vector<8x8xf32>
    %63 = arith.mulf %61, %62 : vector<8x8xf32>
    %cst_43 = arith.constant -1.000000e+30 : f32
    %64 = vector.broadcast %cst_43 : f32 to vector<8x8xf32>
    %65 = arith.select %7, %63, %64 : vector<8x8xi1>, vector<8x8xf32>
    %cst_44 = arith.constant dense<0xFF800000> : vector<8xf32>
    %66 = vector.multi_reduction <maximumf>, %65, %cst_44 [1] : vector<8x8xf32> to vector<8xf32>
    %67 = vector.shape_cast %66 : vector<8xf32> to vector<8x1xf32>
    %68 = vector.broadcast %67 : vector<8x1xf32> to vector<8x8xf32>
    %69 = arith.subf %65, %68 : vector<8x8xf32>
    %70 = math.exp %69 : vector<8x8xf32>
    %cst_45 = arith.constant dense<0.000000e+00> : vector<8xf32>
    %71 = vector.multi_reduction <add>, %70, %cst_45 [1] : vector<8x8xf32> to vector<8xf32>
    %72 = vector.shape_cast %71 : vector<8xf32> to vector<8x1xf32>
    %73 = vector.broadcast %72 : vector<8x1xf32> to vector<8x8xf32>
    %74 = arith.divf %70, %73 : vector<8x8xf32>
    %cst_46 = arith.constant dense<0.000000e+00> : vector<8x16xf32>
    %75 = tpu.matmul %74, %60, %cst_46 {dimension_numbers = #tpu.dot_dimension_numbers<[1], [0], [0], [1], [0, 0, 1, 1], [], []>} : vector<8x8xf32>, vector<8x16xf32>, vector<8x16xf32> -> vector<8x16xf32>
    %76 = vector.extract_strided_slice %56 {offsets = [0, 0], sizes = [16, 64], strides = [1, 1]} : vector<64x64xf32> to vector<16x64xf32>
    %cst_47 = arith.constant dense<0.000000e+00> : vector<8x64xf32>
    %77 = tpu.matmul %75, %76, %cst_47 {dimension_numbers = #tpu.dot_dimension_numbers<[1], [0], [0], [1], [0, 0, 1, 1], [], []>} : vector<8x16xf32>, vector<16x64xf32>, vector<8x64xf32> -> vector<8x64xf32>
    %78 = arith.addf %57, %77 : vector<8x64xf32>
    %79 = vector.extract_strided_slice %40 {offsets = [0, 16], sizes = [8, 16], strides = [1, 1]} : vector<8x64xf32> to vector<8x16xf32>
    %80 = vector.extract_strided_slice %47 {offsets = [0, 16], sizes = [8, 16], strides = [1, 1]} : vector<8x64xf32> to vector<8x16xf32>
    %81 = vector.extract_strided_slice %54 {offsets = [0, 16], sizes = [8, 16], strides = [1, 1]} : vector<8x64xf32> to vector<8x16xf32>
    %cst_48 = arith.constant dense<0.000000e+00> : vector<8x8xf32>
    %82 = tpu.matmul %79, %80, %cst_48 {dimension_numbers = #tpu.dot_dimension_numbers<[1], [1], [0], [0], [0, 0, 1, 0], [], []>} : vector<8x16xf32>, vector<8x16xf32>, vector<8x8xf32> -> vector<8x8xf32>
    %cst_49 = arith.constant 2.500000e-01 : f32
    %83 = vector.broadcast %cst_49 : f32 to vector<8x8xf32>
    %84 = arith.mulf %82, %83 : vector<8x8xf32>
    %cst_50 = arith.constant -1.000000e+30 : f32
    %85 = vector.broadcast %cst_50 : f32 to vector<8x8xf32>
    %86 = arith.select %7, %84, %85 : vector<8x8xi1>, vector<8x8xf32>
    %cst_51 = arith.constant dense<0xFF800000> : vector<8xf32>
    %87 = vector.multi_reduction <maximumf>, %86, %cst_51 [1] : vector<8x8xf32> to vector<8xf32>
    %88 = vector.shape_cast %87 : vector<8xf32> to vector<8x1xf32>
    %89 = vector.broadcast %88 : vector<8x1xf32> to vector<8x8xf32>
    %90 = arith.subf %86, %89 : vector<8x8xf32>
    %91 = math.exp %90 : vector<8x8xf32>
    %cst_52 = arith.constant dense<0.000000e+00> : vector<8xf32>
    %92 = vector.multi_reduction <add>, %91, %cst_52 [1] : vector<8x8xf32> to vector<8xf32>
    %93 = vector.shape_cast %92 : vector<8xf32> to vector<8x1xf32>
    %94 = vector.broadcast %93 : vector<8x1xf32> to vector<8x8xf32>
    %95 = arith.divf %91, %94 : vector<8x8xf32>
    %cst_53 = arith.constant dense<0.000000e+00> : vector<8x16xf32>
    %96 = tpu.matmul %95, %81, %cst_53 {dimension_numbers = #tpu.dot_dimension_numbers<[1], [0], [0], [1], [0, 0, 1, 1], [], []>} : vector<8x8xf32>, vector<8x16xf32>, vector<8x16xf32> -> vector<8x16xf32>
    %97 = vector.extract_strided_slice %56 {offsets = [16, 0], sizes = [16, 64], strides = [1, 1]} : vector<64x64xf32> to vector<16x64xf32>
    %cst_54 = arith.constant dense<0.000000e+00> : vector<8x64xf32>
    %98 = tpu.matmul %96, %97, %cst_54 {dimension_numbers = #tpu.dot_dimension_numbers<[1], [0], [0], [1], [0, 0, 1, 1], [], []>} : vector<8x16xf32>, vector<16x64xf32>, vector<8x64xf32> -> vector<8x64xf32>
    %99 = arith.addf %78, %98 : vector<8x64xf32>
    %100 = vector.extract_strided_slice %40 {offsets = [0, 32], sizes = [8, 16], strides = [1, 1]} : vector<8x64xf32> to vector<8x16xf32>
    %101 = vector.extract_strided_slice %47 {offsets = [0, 32], sizes = [8, 16], strides = [1, 1]} : vector<8x64xf32> to vector<8x16xf32>
    %102 = vector.extract_strided_slice %54 {offsets = [0, 32], sizes = [8, 16], strides = [1, 1]} : vector<8x64xf32> to vector<8x16xf32>
    %cst_55 = arith.constant dense<0.000000e+00> : vector<8x8xf32>
    %103 = tpu.matmul %100, %101, %cst_55 {dimension_numbers = #tpu.dot_dimension_numbers<[1], [1], [0], [0], [0, 0, 1, 0], [], []>} : vector<8x16xf32>, vector<8x16xf32>, vector<8x8xf32> -> vector<8x8xf32>
    %cst_56 = arith.constant 2.500000e-01 : f32
    %104 = vector.broadcast %cst_56 : f32 to vector<8x8xf32>
    %105 = arith.mulf %103, %104 : vector<8x8xf32>
    %cst_57 = arith.constant -1.000000e+30 : f32
    %106 = vector.broadcast %cst_57 : f32 to vector<8x8xf32>
    %107 = arith.select %7, %105, %106 : vector<8x8xi1>, vector<8x8xf32>
    %cst_58 = arith.constant dense<0xFF800000> : vector<8xf32>
    %108 = vector.multi_reduction <maximumf>, %107, %cst_58 [1] : vector<8x8xf32> to vector<8xf32>
    %109 = vector.shape_cast %108 : vector<8xf32> to vector<8x1xf32>
    %110 = vector.broadcast %109 : vector<8x1xf32> to vector<8x8xf32>
    %111 = arith.subf %107, %110 : vector<8x8xf32>
    %112 = math.exp %111 : vector<8x8xf32>
    %cst_59 = arith.constant dense<0.000000e+00> : vector<8xf32>
    %113 = vector.multi_reduction <add>, %112, %cst_59 [1] : vector<8x8xf32> to vector<8xf32>
    %114 = vector.shape_cast %113 : vector<8xf32> to vector<8x1xf32>
    %115 = vector.broadcast %114 : vector<8x1xf32> to vector<8x8xf32>
    %116 = arith.divf %112, %115 : vector<8x8xf32>
    %cst_60 = arith.constant dense<0.000000e+00> : vector<8x16xf32>
    %117 = tpu.matmul %116, %102, %cst_60 {dimension_numbers = #tpu.dot_dimension_numbers<[1], [0], [0], [1], [0, 0, 1, 1], [], []>} : vector<8x8xf32>, vector<8x16xf32>, vector<8x16xf32> -> vector<8x16xf32>
    %118 = vector.extract_strided_slice %56 {offsets = [32, 0], sizes = [16, 64], strides = [1, 1]} : vector<64x64xf32> to vector<16x64xf32>
    %cst_61 = arith.constant dense<0.000000e+00> : vector<8x64xf32>
    %119 = tpu.matmul %117, %118, %cst_61 {dimension_numbers = #tpu.dot_dimension_numbers<[1], [0], [0], [1], [0, 0, 1, 1], [], []>} : vector<8x16xf32>, vector<16x64xf32>, vector<8x64xf32> -> vector<8x64xf32>
    %120 = arith.addf %99, %119 : vector<8x64xf32>
    %121 = vector.extract_strided_slice %40 {offsets = [0, 48], sizes = [8, 16], strides = [1, 1]} : vector<8x64xf32> to vector<8x16xf32>
    %122 = vector.extract_strided_slice %47 {offsets = [0, 48], sizes = [8, 16], strides = [1, 1]} : vector<8x64xf32> to vector<8x16xf32>
    %123 = vector.extract_strided_slice %54 {offsets = [0, 48], sizes = [8, 16], strides = [1, 1]} : vector<8x64xf32> to vector<8x16xf32>
    %cst_62 = arith.constant dense<0.000000e+00> : vector<8x8xf32>
    %124 = tpu.matmul %121, %122, %cst_62 {dimension_numbers = #tpu.dot_dimension_numbers<[1], [1], [0], [0], [0, 0, 1, 0], [], []>} : vector<8x16xf32>, vector<8x16xf32>, vector<8x8xf32> -> vector<8x8xf32>
    %cst_63 = arith.constant 2.500000e-01 : f32
    %125 = vector.broadcast %cst_63 : f32 to vector<8x8xf32>
    %126 = arith.mulf %124, %125 : vector<8x8xf32>
    %cst_64 = arith.constant -1.000000e+30 : f32
    %127 = vector.broadcast %cst_64 : f32 to vector<8x8xf32>
    %128 = arith.select %7, %126, %127 : vector<8x8xi1>, vector<8x8xf32>
    %cst_65 = arith.constant dense<0xFF800000> : vector<8xf32>
    %129 = vector.multi_reduction <maximumf>, %128, %cst_65 [1] : vector<8x8xf32> to vector<8xf32>
    %130 = vector.shape_cast %129 : vector<8xf32> to vector<8x1xf32>
    %131 = vector.broadcast %130 : vector<8x1xf32> to vector<8x8xf32>
    %132 = arith.subf %128, %131 : vector<8x8xf32>
    %133 = math.exp %132 : vector<8x8xf32>
    %cst_66 = arith.constant dense<0.000000e+00> : vector<8xf32>
    %134 = vector.multi_reduction <add>, %133, %cst_66 [1] : vector<8x8xf32> to vector<8xf32>
    %135 = vector.shape_cast %134 : vector<8xf32> to vector<8x1xf32>
    %136 = vector.broadcast %135 : vector<8x1xf32> to vector<8x8xf32>
    %137 = arith.divf %133, %136 : vector<8x8xf32>
    %cst_67 = arith.constant dense<0.000000e+00> : vector<8x16xf32>
    %138 = tpu.matmul %137, %123, %cst_67 {dimension_numbers = #tpu.dot_dimension_numbers<[1], [0], [0], [1], [0, 0, 1, 1], [], []>} : vector<8x8xf32>, vector<8x16xf32>, vector<8x16xf32> -> vector<8x16xf32>
    %139 = vector.extract_strided_slice %56 {offsets = [48, 0], sizes = [16, 64], strides = [1, 1]} : vector<64x64xf32> to vector<16x64xf32>
    %cst_68 = arith.constant dense<0.000000e+00> : vector<8x64xf32>
    %140 = tpu.matmul %138, %139, %cst_68 {dimension_numbers = #tpu.dot_dimension_numbers<[1], [0], [0], [1], [0, 0, 1, 1], [], []>} : vector<8x16xf32>, vector<16x64xf32>, vector<8x64xf32> -> vector<8x64xf32>
    %141 = arith.addf %120, %140 : vector<8x64xf32>
    %142 = arith.addf %4, %141 : vector<8x64xf32>
    %c0_69 = arith.constant 0 : index
    %c0_70 = arith.constant 0 : index
    %c0_71 = arith.constant 0 : index
    %143 = vector.load %arg17[%c0_69, %c0_70, %c0_71] : memref<2x1x64xf32, #tpu.memory_space<vmem>>, vector<1x1x64xf32>
    %144 = vector.shape_cast %143 : vector<1x1x64xf32> to vector<1x64xf32>
    %145 = vector.broadcast %144 : vector<1x64xf32> to vector<8x64xf32>
    %146 = arith.addf %142, %145 : vector<8x64xf32>
    %c0_72 = arith.constant 0 : index
    %c0_73 = arith.constant 0 : index
    %c0_74 = arith.constant 0 : index
    %147 = vector.load %arg18[%c0_72, %c0_73, %c0_74] : memref<2x1x64xf32, #tpu.memory_space<vmem>>, vector<1x1x64xf32>
    %148 = vector.shape_cast %147 : vector<1x1x64xf32> to vector<1x64xf32>
    %c0_75 = arith.constant 0 : index
    %c0_76 = arith.constant 0 : index
    %c0_77 = arith.constant 0 : index
    %149 = vector.load %arg19[%c0_75, %c0_76, %c0_77] : memref<2x1x64xf32, #tpu.memory_space<vmem>>, vector<1x1x64xf32>
    %150 = vector.shape_cast %149 : vector<1x1x64xf32> to vector<1x64xf32>
    %cst_78 = arith.constant dense<0.000000e+00> : vector<8xf32>
    %151 = vector.multi_reduction <add>, %146, %cst_78 [1] : vector<8x64xf32> to vector<8xf32>
    %152 = vector.shape_cast %151 : vector<8xf32> to vector<8x1xf32>
    %cst_79 = arith.constant 6.400000e+01 : f32
    %153 = vector.broadcast %cst_79 : f32 to vector<8x1xf32>
    %154 = arith.divf %152, %153 : vector<8x1xf32>
    %155 = vector.broadcast %154 : vector<8x1xf32> to vector<8x64xf32>
    %156 = arith.subf %146, %155 : vector<8x64xf32>
    %157 = arith.mulf %156, %156 : vector<8x64xf32>
    %cst_80 = arith.constant dense<0.000000e+00> : vector<8xf32>
    %158 = vector.multi_reduction <add>, %157, %cst_80 [1] : vector<8x64xf32> to vector<8xf32>
    %159 = vector.shape_cast %158 : vector<8xf32> to vector<8x1xf32>
    %cst_81 = arith.constant 6.400000e+01 : f32
    %160 = vector.broadcast %cst_81 : f32 to vector<8x1xf32>
    %161 = arith.divf %159, %160 : vector<8x1xf32>
    %162 = vector.broadcast %154 : vector<8x1xf32> to vector<8x64xf32>
    %163 = arith.subf %146, %162 : vector<8x64xf32>
    %cst_82 = arith.constant 9.99999997E-7 : f32
    %164 = vector.broadcast %cst_82 : f32 to vector<8x1xf32>
    %165 = arith.addf %161, %164 : vector<8x1xf32>
    %166 = math.rsqrt %165 : vector<8x1xf32>
    %167 = vector.broadcast %166 : vector<8x1xf32> to vector<8x64xf32>
    %168 = arith.mulf %163, %167 : vector<8x64xf32>
    %169 = vector.broadcast %148 : vector<1x64xf32> to vector<8x64xf32>
    %170 = arith.mulf %168, %169 : vector<8x64xf32>
    %171 = vector.broadcast %150 : vector<1x64xf32> to vector<8x64xf32>
    %172 = arith.addf %170, %171 : vector<8x64xf32>
    %c0_83 = arith.constant 0 : index
    %c0_84 = arith.constant 0 : index
    %c0_85 = arith.constant 0 : index
    %173 = vector.load %arg20[%c0_83, %c0_84, %c0_85] : memref<2x64x128xf32, #tpu.memory_space<vmem>>, vector<1x64x128xf32>
    %174 = vector.shape_cast %173 : vector<1x64x128xf32> to vector<64x128xf32>
    %cst_86 = arith.constant dense<0.000000e+00> : vector<8x128xf32>
    %175 = tpu.matmul %172, %174, %cst_86 {dimension_numbers = #tpu.dot_dimension_numbers<[1], [0], [0], [1], [0, 0, 1, 1], [], []>} : vector<8x64xf32>, vector<64x128xf32>, vector<8x128xf32> -> vector<8x128xf32>
    %c0_87 = arith.constant 0 : index
    %c0_88 = arith.constant 0 : index
    %c0_89 = arith.constant 0 : index
    %176 = vector.load %arg21[%c0_87, %c0_88, %c0_89] : memref<2x1x128xf32, #tpu.memory_space<vmem>>, vector<1x1x128xf32>
    %177 = vector.shape_cast %176 : vector<1x1x128xf32> to vector<1x128xf32>
    %178 = vector.broadcast %177 : vector<1x128xf32> to vector<8x128xf32>
    %179 = arith.addf %175, %178 : vector<8x128xf32>
    %cst_90 = arith.constant 5.000000e-01 : f32
    %180 = vector.broadcast %cst_90 : f32 to vector<8x128xf32>
    %181 = arith.mulf %180, %179 : vector<8x128xf32>
    %cst_91 = arith.constant 4.471500e-02 : f32
    %182 = vector.broadcast %cst_91 : f32 to vector<8x128xf32>
    %183 = arith.mulf %182, %179 : vector<8x128xf32>
    %184 = arith.mulf %183, %179 : vector<8x128xf32>
    %185 = arith.mulf %184, %179 : vector<8x128xf32>
    %186 = arith.addf %179, %185 : vector<8x128xf32>
    %cst_92 = arith.constant 0.797884583 : f32
    %187 = vector.broadcast %cst_92 : f32 to vector<8x128xf32>
    %188 = arith.mulf %187, %186 : vector<8x128xf32>
    %189 = math.tanh %188 : vector<8x128xf32>
    %cst_93 = arith.constant 1.000000e+00 : f32
    %190 = vector.broadcast %cst_93 : f32 to vector<8x128xf32>
    %191 = arith.addf %190, %189 : vector<8x128xf32>
    %192 = arith.mulf %181, %191 : vector<8x128xf32>
    %c0_94 = arith.constant 0 : index
    %c0_95 = arith.constant 0 : index
    %c0_96 = arith.constant 0 : index
    %193 = vector.load %arg22[%c0_94, %c0_95, %c0_96] : memref<2x128x64xf32, #tpu.memory_space<vmem>>, vector<1x128x64xf32>
    %194 = vector.shape_cast %193 : vector<1x128x64xf32> to vector<128x64xf32>
    %cst_97 = arith.constant dense<0.000000e+00> : vector<8x64xf32>
    %195 = tpu.matmul %192, %194, %cst_97 {dimension_numbers = #tpu.dot_dimension_numbers<[1], [0], [0], [1], [0, 0, 1, 1], [], []>} : vector<8x128xf32>, vector<128x64xf32>, vector<8x64xf32> -> vector<8x64xf32>
    %196 = arith.addf %146, %195 : vector<8x64xf32>
    %c0_98 = arith.constant 0 : index
    %c0_99 = arith.constant 0 : index
    %c0_100 = arith.constant 0 : index
    %197 = vector.load %arg23[%c0_98, %c0_99, %c0_100] : memref<2x1x64xf32, #tpu.memory_space<vmem>>, vector<1x1x64xf32>
    %198 = vector.shape_cast %197 : vector<1x1x64xf32> to vector<1x64xf32>
    %199 = vector.broadcast %198 : vector<1x64xf32> to vector<8x64xf32>
    %200 = arith.addf %196, %199 : vector<8x64xf32>
    %c1 = arith.constant 1 : index
    %c0_101 = arith.constant 0 : index
    %c0_102 = arith.constant 0 : index
    %201 = vector.load %arg8[%c1, %c0_101, %c0_102] : memref<2x1x64xf32, #tpu.memory_space<vmem>>, vector<1x1x64xf32>
    %202 = vector.shape_cast %201 : vector<1x1x64xf32> to vector<1x64xf32>
    %c1_103 = arith.constant 1 : index
    %c0_104 = arith.constant 0 : index
    %c0_105 = arith.constant 0 : index
    %203 = vector.load %arg9[%c1_103, %c0_104, %c0_105] : memref<2x1x64xf32, #tpu.memory_space<vmem>>, vector<1x1x64xf32>
    %204 = vector.shape_cast %203 : vector<1x1x64xf32> to vector<1x64xf32>
    %cst_106 = arith.constant dense<0.000000e+00> : vector<8xf32>
    %205 = vector.multi_reduction <add>, %200, %cst_106 [1] : vector<8x64xf32> to vector<8xf32>
    %206 = vector.shape_cast %205 : vector<8xf32> to vector<8x1xf32>
    %cst_107 = arith.constant 6.400000e+01 : f32
    %207 = vector.broadcast %cst_107 : f32 to vector<8x1xf32>
    %208 = arith.divf %206, %207 : vector<8x1xf32>
    %209 = vector.broadcast %208 : vector<8x1xf32> to vector<8x64xf32>
    %210 = arith.subf %200, %209 : vector<8x64xf32>
    %211 = arith.mulf %210, %210 : vector<8x64xf32>
    %cst_108 = arith.constant dense<0.000000e+00> : vector<8xf32>
    %212 = vector.multi_reduction <add>, %211, %cst_108 [1] : vector<8x64xf32> to vector<8xf32>
    %213 = vector.shape_cast %212 : vector<8xf32> to vector<8x1xf32>
    %cst_109 = arith.constant 6.400000e+01 : f32
    %214 = vector.broadcast %cst_109 : f32 to vector<8x1xf32>
    %215 = arith.divf %213, %214 : vector<8x1xf32>
    %216 = vector.broadcast %208 : vector<8x1xf32> to vector<8x64xf32>
    %217 = arith.subf %200, %216 : vector<8x64xf32>
    %cst_110 = arith.constant 9.99999997E-7 : f32
    %218 = vector.broadcast %cst_110 : f32 to vector<8x1xf32>
    %219 = arith.addf %215, %218 : vector<8x1xf32>
    %220 = math.rsqrt %219 : vector<8x1xf32>
    %221 = vector.broadcast %220 : vector<8x1xf32> to vector<8x64xf32>
    %222 = arith.mulf %217, %221 : vector<8x64xf32>
    %223 = vector.broadcast %202 : vector<1x64xf32> to vector<8x64xf32>
    %224 = arith.mulf %222, %223 : vector<8x64xf32>
    %225 = vector.broadcast %204 : vector<1x64xf32> to vector<8x64xf32>
    %226 = arith.addf %224, %225 : vector<8x64xf32>
    %c1_111 = arith.constant 1 : index
    %c0_112 = arith.constant 0 : index
    %c0_113 = arith.constant 0 : index
    %227 = vector.load %arg10[%c1_111, %c0_112, %c0_113] : memref<2x64x64xf32, #tpu.memory_space<vmem>>, vector<1x64x64xf32>
    %228 = vector.shape_cast %227 : vector<1x64x64xf32> to vector<64x64xf32>
    %cst_114 = arith.constant dense<0.000000e+00> : vector<8x64xf32>
    %229 = tpu.matmul %226, %228, %cst_114 {dimension_numbers = #tpu.dot_dimension_numbers<[1], [0], [0], [1], [0, 0, 1, 1], [], []>} : vector<8x64xf32>, vector<64x64xf32>, vector<8x64xf32> -> vector<8x64xf32>
    %c1_115 = arith.constant 1 : index
    %c0_116 = arith.constant 0 : index
    %c0_117 = arith.constant 0 : index
    %230 = vector.load %arg11[%c1_115, %c0_116, %c0_117] : memref<2x1x64xf32, #tpu.memory_space<vmem>>, vector<1x1x64xf32>
    %231 = vector.shape_cast %230 : vector<1x1x64xf32> to vector<1x64xf32>
    %232 = vector.broadcast %231 : vector<1x64xf32> to vector<8x64xf32>
    %233 = arith.addf %229, %232 : vector<8x64xf32>
    %c1_118 = arith.constant 1 : index
    %c0_119 = arith.constant 0 : index
    %c0_120 = arith.constant 0 : index
    %234 = vector.load %arg12[%c1_118, %c0_119, %c0_120] : memref<2x64x64xf32, #tpu.memory_space<vmem>>, vector<1x64x64xf32>
    %235 = vector.shape_cast %234 : vector<1x64x64xf32> to vector<64x64xf32>
    %cst_121 = arith.constant dense<0.000000e+00> : vector<8x64xf32>
    %236 = tpu.matmul %226, %235, %cst_121 {dimension_numbers = #tpu.dot_dimension_numbers<[1], [0], [0], [1], [0, 0, 1, 1], [], []>} : vector<8x64xf32>, vector<64x64xf32>, vector<8x64xf32> -> vector<8x64xf32>
    %c1_122 = arith.constant 1 : index
    %c0_123 = arith.constant 0 : index
    %c0_124 = arith.constant 0 : index
    %237 = vector.load %arg13[%c1_122, %c0_123, %c0_124] : memref<2x1x64xf32, #tpu.memory_space<vmem>>, vector<1x1x64xf32>
    %238 = vector.shape_cast %237 : vector<1x1x64xf32> to vector<1x64xf32>
    %239 = vector.broadcast %238 : vector<1x64xf32> to vector<8x64xf32>
    %240 = arith.addf %236, %239 : vector<8x64xf32>
    %c1_125 = arith.constant 1 : index
    %c0_126 = arith.constant 0 : index
    %c0_127 = arith.constant 0 : index
    %241 = vector.load %arg14[%c1_125, %c0_126, %c0_127] : memref<2x64x64xf32, #tpu.memory_space<vmem>>, vector<1x64x64xf32>
    %242 = vector.shape_cast %241 : vector<1x64x64xf32> to vector<64x64xf32>
    %cst_128 = arith.constant dense<0.000000e+00> : vector<8x64xf32>
    %243 = tpu.matmul %226, %242, %cst_128 {dimension_numbers = #tpu.dot_dimension_numbers<[1], [0], [0], [1], [0, 0, 1, 1], [], []>} : vector<8x64xf32>, vector<64x64xf32>, vector<8x64xf32> -> vector<8x64xf32>
    %c1_129 = arith.constant 1 : index
    %c0_130 = arith.constant 0 : index
    %c0_131 = arith.constant 0 : index
    %244 = vector.load %arg15[%c1_129, %c0_130, %c0_131] : memref<2x1x64xf32, #tpu.memory_space<vmem>>, vector<1x1x64xf32>
    %245 = vector.shape_cast %244 : vector<1x1x64xf32> to vector<1x64xf32>
    %246 = vector.broadcast %245 : vector<1x64xf32> to vector<8x64xf32>
    %247 = arith.addf %243, %246 : vector<8x64xf32>
    %c1_132 = arith.constant 1 : index
    %c0_133 = arith.constant 0 : index
    %c0_134 = arith.constant 0 : index
    %248 = vector.load %arg16[%c1_132, %c0_133, %c0_134] : memref<2x64x64xf32, #tpu.memory_space<vmem>>, vector<1x64x64xf32>
    %249 = vector.shape_cast %248 : vector<1x64x64xf32> to vector<64x64xf32>
    %cst_135 = arith.constant 0.000000e+00 : f32
    %250 = vector.broadcast %cst_135 : f32 to vector<8x64xf32>
    %251 = vector.extract_strided_slice %233 {offsets = [0, 0], sizes = [8, 16], strides = [1, 1]} : vector<8x64xf32> to vector<8x16xf32>
    %252 = vector.extract_strided_slice %240 {offsets = [0, 0], sizes = [8, 16], strides = [1, 1]} : vector<8x64xf32> to vector<8x16xf32>
    %253 = vector.extract_strided_slice %247 {offsets = [0, 0], sizes = [8, 16], strides = [1, 1]} : vector<8x64xf32> to vector<8x16xf32>
    %cst_136 = arith.constant dense<0.000000e+00> : vector<8x8xf32>
    %254 = tpu.matmul %251, %252, %cst_136 {dimension_numbers = #tpu.dot_dimension_numbers<[1], [1], [0], [0], [0, 0, 1, 0], [], []>} : vector<8x16xf32>, vector<8x16xf32>, vector<8x8xf32> -> vector<8x8xf32>
    %cst_137 = arith.constant 2.500000e-01 : f32
    %255 = vector.broadcast %cst_137 : f32 to vector<8x8xf32>
    %256 = arith.mulf %254, %255 : vector<8x8xf32>
    %cst_138 = arith.constant -1.000000e+30 : f32
    %257 = vector.broadcast %cst_138 : f32 to vector<8x8xf32>
    %258 = arith.select %7, %256, %257 : vector<8x8xi1>, vector<8x8xf32>
    %cst_139 = arith.constant dense<0xFF800000> : vector<8xf32>
    %259 = vector.multi_reduction <maximumf>, %258, %cst_139 [1] : vector<8x8xf32> to vector<8xf32>
    %260 = vector.shape_cast %259 : vector<8xf32> to vector<8x1xf32>
    %261 = vector.broadcast %260 : vector<8x1xf32> to vector<8x8xf32>
    %262 = arith.subf %258, %261 : vector<8x8xf32>
    %263 = math.exp %262 : vector<8x8xf32>
    %cst_140 = arith.constant dense<0.000000e+00> : vector<8xf32>
    %264 = vector.multi_reduction <add>, %263, %cst_140 [1] : vector<8x8xf32> to vector<8xf32>
    %265 = vector.shape_cast %264 : vector<8xf32> to vector<8x1xf32>
    %266 = vector.broadcast %265 : vector<8x1xf32> to vector<8x8xf32>
    %267 = arith.divf %263, %266 : vector<8x8xf32>
    %cst_141 = arith.constant dense<0.000000e+00> : vector<8x16xf32>
    %268 = tpu.matmul %267, %253, %cst_141 {dimension_numbers = #tpu.dot_dimension_numbers<[1], [0], [0], [1], [0, 0, 1, 1], [], []>} : vector<8x8xf32>, vector<8x16xf32>, vector<8x16xf32> -> vector<8x16xf32>
    %269 = vector.extract_strided_slice %249 {offsets = [0, 0], sizes = [16, 64], strides = [1, 1]} : vector<64x64xf32> to vector<16x64xf32>
    %cst_142 = arith.constant dense<0.000000e+00> : vector<8x64xf32>
    %270 = tpu.matmul %268, %269, %cst_142 {dimension_numbers = #tpu.dot_dimension_numbers<[1], [0], [0], [1], [0, 0, 1, 1], [], []>} : vector<8x16xf32>, vector<16x64xf32>, vector<8x64xf32> -> vector<8x64xf32>
    %271 = arith.addf %250, %270 : vector<8x64xf32>
    %272 = vector.extract_strided_slice %233 {offsets = [0, 16], sizes = [8, 16], strides = [1, 1]} : vector<8x64xf32> to vector<8x16xf32>
    %273 = vector.extract_strided_slice %240 {offsets = [0, 16], sizes = [8, 16], strides = [1, 1]} : vector<8x64xf32> to vector<8x16xf32>
    %274 = vector.extract_strided_slice %247 {offsets = [0, 16], sizes = [8, 16], strides = [1, 1]} : vector<8x64xf32> to vector<8x16xf32>
    %cst_143 = arith.constant dense<0.000000e+00> : vector<8x8xf32>
    %275 = tpu.matmul %272, %273, %cst_143 {dimension_numbers = #tpu.dot_dimension_numbers<[1], [1], [0], [0], [0, 0, 1, 0], [], []>} : vector<8x16xf32>, vector<8x16xf32>, vector<8x8xf32> -> vector<8x8xf32>
    %cst_144 = arith.constant 2.500000e-01 : f32
    %276 = vector.broadcast %cst_144 : f32 to vector<8x8xf32>
    %277 = arith.mulf %275, %276 : vector<8x8xf32>
    %cst_145 = arith.constant -1.000000e+30 : f32
    %278 = vector.broadcast %cst_145 : f32 to vector<8x8xf32>
    %279 = arith.select %7, %277, %278 : vector<8x8xi1>, vector<8x8xf32>
    %cst_146 = arith.constant dense<0xFF800000> : vector<8xf32>
    %280 = vector.multi_reduction <maximumf>, %279, %cst_146 [1] : vector<8x8xf32> to vector<8xf32>
    %281 = vector.shape_cast %280 : vector<8xf32> to vector<8x1xf32>
    %282 = vector.broadcast %281 : vector<8x1xf32> to vector<8x8xf32>
    %283 = arith.subf %279, %282 : vector<8x8xf32>
    %284 = math.exp %283 : vector<8x8xf32>
    %cst_147 = arith.constant dense<0.000000e+00> : vector<8xf32>
    %285 = vector.multi_reduction <add>, %284, %cst_147 [1] : vector<8x8xf32> to vector<8xf32>
    %286 = vector.shape_cast %285 : vector<8xf32> to vector<8x1xf32>
    %287 = vector.broadcast %286 : vector<8x1xf32> to vector<8x8xf32>
    %288 = arith.divf %284, %287 : vector<8x8xf32>
    %cst_148 = arith.constant dense<0.000000e+00> : vector<8x16xf32>
    %289 = tpu.matmul %288, %274, %cst_148 {dimension_numbers = #tpu.dot_dimension_numbers<[1], [0], [0], [1], [0, 0, 1, 1], [], []>} : vector<8x8xf32>, vector<8x16xf32>, vector<8x16xf32> -> vector<8x16xf32>
    %290 = vector.extract_strided_slice %249 {offsets = [16, 0], sizes = [16, 64], strides = [1, 1]} : vector<64x64xf32> to vector<16x64xf32>
    %cst_149 = arith.constant dense<0.000000e+00> : vector<8x64xf32>
    %291 = tpu.matmul %289, %290, %cst_149 {dimension_numbers = #tpu.dot_dimension_numbers<[1], [0], [0], [1], [0, 0, 1, 1], [], []>} : vector<8x16xf32>, vector<16x64xf32>, vector<8x64xf32> -> vector<8x64xf32>
    %292 = arith.addf %271, %291 : vector<8x64xf32>
    %293 = vector.extract_strided_slice %233 {offsets = [0, 32], sizes = [8, 16], strides = [1, 1]} : vector<8x64xf32> to vector<8x16xf32>
    %294 = vector.extract_strided_slice %240 {offsets = [0, 32], sizes = [8, 16], strides = [1, 1]} : vector<8x64xf32> to vector<8x16xf32>
    %295 = vector.extract_strided_slice %247 {offsets = [0, 32], sizes = [8, 16], strides = [1, 1]} : vector<8x64xf32> to vector<8x16xf32>
    %cst_150 = arith.constant dense<0.000000e+00> : vector<8x8xf32>
    %296 = tpu.matmul %293, %294, %cst_150 {dimension_numbers = #tpu.dot_dimension_numbers<[1], [1], [0], [0], [0, 0, 1, 0], [], []>} : vector<8x16xf32>, vector<8x16xf32>, vector<8x8xf32> -> vector<8x8xf32>
    %cst_151 = arith.constant 2.500000e-01 : f32
    %297 = vector.broadcast %cst_151 : f32 to vector<8x8xf32>
    %298 = arith.mulf %296, %297 : vector<8x8xf32>
    %cst_152 = arith.constant -1.000000e+30 : f32
    %299 = vector.broadcast %cst_152 : f32 to vector<8x8xf32>
    %300 = arith.select %7, %298, %299 : vector<8x8xi1>, vector<8x8xf32>
    %cst_153 = arith.constant dense<0xFF800000> : vector<8xf32>
    %301 = vector.multi_reduction <maximumf>, %300, %cst_153 [1] : vector<8x8xf32> to vector<8xf32>
    %302 = vector.shape_cast %301 : vector<8xf32> to vector<8x1xf32>
    %303 = vector.broadcast %302 : vector<8x1xf32> to vector<8x8xf32>
    %304 = arith.subf %300, %303 : vector<8x8xf32>
    %305 = math.exp %304 : vector<8x8xf32>
    %cst_154 = arith.constant dense<0.000000e+00> : vector<8xf32>
    %306 = vector.multi_reduction <add>, %305, %cst_154 [1] : vector<8x8xf32> to vector<8xf32>
    %307 = vector.shape_cast %306 : vector<8xf32> to vector<8x1xf32>
    %308 = vector.broadcast %307 : vector<8x1xf32> to vector<8x8xf32>
    %309 = arith.divf %305, %308 : vector<8x8xf32>
    %cst_155 = arith.constant dense<0.000000e+00> : vector<8x16xf32>
    %310 = tpu.matmul %309, %295, %cst_155 {dimension_numbers = #tpu.dot_dimension_numbers<[1], [0], [0], [1], [0, 0, 1, 1], [], []>} : vector<8x8xf32>, vector<8x16xf32>, vector<8x16xf32> -> vector<8x16xf32>
    %311 = vector.extract_strided_slice %249 {offsets = [32, 0], sizes = [16, 64], strides = [1, 1]} : vector<64x64xf32> to vector<16x64xf32>
    %cst_156 = arith.constant dense<0.000000e+00> : vector<8x64xf32>
    %312 = tpu.matmul %310, %311, %cst_156 {dimension_numbers = #tpu.dot_dimension_numbers<[1], [0], [0], [1], [0, 0, 1, 1], [], []>} : vector<8x16xf32>, vector<16x64xf32>, vector<8x64xf32> -> vector<8x64xf32>
    %313 = arith.addf %292, %312 : vector<8x64xf32>
    %314 = vector.extract_strided_slice %233 {offsets = [0, 48], sizes = [8, 16], strides = [1, 1]} : vector<8x64xf32> to vector<8x16xf32>
    %315 = vector.extract_strided_slice %240 {offsets = [0, 48], sizes = [8, 16], strides = [1, 1]} : vector<8x64xf32> to vector<8x16xf32>
    %316 = vector.extract_strided_slice %247 {offsets = [0, 48], sizes = [8, 16], strides = [1, 1]} : vector<8x64xf32> to vector<8x16xf32>
    %cst_157 = arith.constant dense<0.000000e+00> : vector<8x8xf32>
    %317 = tpu.matmul %314, %315, %cst_157 {dimension_numbers = #tpu.dot_dimension_numbers<[1], [1], [0], [0], [0, 0, 1, 0], [], []>} : vector<8x16xf32>, vector<8x16xf32>, vector<8x8xf32> -> vector<8x8xf32>
    %cst_158 = arith.constant 2.500000e-01 : f32
    %318 = vector.broadcast %cst_158 : f32 to vector<8x8xf32>
    %319 = arith.mulf %317, %318 : vector<8x8xf32>
    %cst_159 = arith.constant -1.000000e+30 : f32
    %320 = vector.broadcast %cst_159 : f32 to vector<8x8xf32>
    %321 = arith.select %7, %319, %320 : vector<8x8xi1>, vector<8x8xf32>
    %cst_160 = arith.constant dense<0xFF800000> : vector<8xf32>
    %322 = vector.multi_reduction <maximumf>, %321, %cst_160 [1] : vector<8x8xf32> to vector<8xf32>
    %323 = vector.shape_cast %322 : vector<8xf32> to vector<8x1xf32>
    %324 = vector.broadcast %323 : vector<8x1xf32> to vector<8x8xf32>
    %325 = arith.subf %321, %324 : vector<8x8xf32>
    %326 = math.exp %325 : vector<8x8xf32>
    %cst_161 = arith.constant dense<0.000000e+00> : vector<8xf32>
    %327 = vector.multi_reduction <add>, %326, %cst_161 [1] : vector<8x8xf32> to vector<8xf32>
    %328 = vector.shape_cast %327 : vector<8xf32> to vector<8x1xf32>
    %329 = vector.broadcast %328 : vector<8x1xf32> to vector<8x8xf32>
    %330 = arith.divf %326, %329 : vector<8x8xf32>
    %cst_162 = arith.constant dense<0.000000e+00> : vector<8x16xf32>
    %331 = tpu.matmul %330, %316, %cst_162 {dimension_numbers = #tpu.dot_dimension_numbers<[1], [0], [0], [1], [0, 0, 1, 1], [], []>} : vector<8x8xf32>, vector<8x16xf32>, vector<8x16xf32> -> vector<8x16xf32>
    %332 = vector.extract_strided_slice %249 {offsets = [48, 0], sizes = [16, 64], strides = [1, 1]} : vector<64x64xf32> to vector<16x64xf32>
    %cst_163 = arith.constant dense<0.000000e+00> : vector<8x64xf32>
    %333 = tpu.matmul %331, %332, %cst_163 {dimension_numbers = #tpu.dot_dimension_numbers<[1], [0], [0], [1], [0, 0, 1, 1], [], []>} : vector<8x16xf32>, vector<16x64xf32>, vector<8x64xf32> -> vector<8x64xf32>
    %334 = arith.addf %313, %333 : vector<8x64xf32>
    %335 = arith.addf %200, %334 : vector<8x64xf32>
    %c1_164 = arith.constant 1 : index
    %c0_165 = arith.constant 0 : index
    %c0_166 = arith.constant 0 : index
    %336 = vector.load %arg17[%c1_164, %c0_165, %c0_166] : memref<2x1x64xf32, #tpu.memory_space<vmem>>, vector<1x1x64xf32>
    %337 = vector.shape_cast %336 : vector<1x1x64xf32> to vector<1x64xf32>
    %338 = vector.broadcast %337 : vector<1x64xf32> to vector<8x64xf32>
    %339 = arith.addf %335, %338 : vector<8x64xf32>
    %c1_167 = arith.constant 1 : index
    %c0_168 = arith.constant 0 : index
    %c0_169 = arith.constant 0 : index
    %340 = vector.load %arg18[%c1_167, %c0_168, %c0_169] : memref<2x1x64xf32, #tpu.memory_space<vmem>>, vector<1x1x64xf32>
    %341 = vector.shape_cast %340 : vector<1x1x64xf32> to vector<1x64xf32>
    %c1_170 = arith.constant 1 : index
    %c0_171 = arith.constant 0 : index
    %c0_172 = arith.constant 0 : index
    %342 = vector.load %arg19[%c1_170, %c0_171, %c0_172] : memref<2x1x64xf32, #tpu.memory_space<vmem>>, vector<1x1x64xf32>
    %343 = vector.shape_cast %342 : vector<1x1x64xf32> to vector<1x64xf32>
    %cst_173 = arith.constant dense<0.000000e+00> : vector<8xf32>
    %344 = vector.multi_reduction <add>, %339, %cst_173 [1] : vector<8x64xf32> to vector<8xf32>
    %345 = vector.shape_cast %344 : vector<8xf32> to vector<8x1xf32>
    %cst_174 = arith.constant 6.400000e+01 : f32
    %346 = vector.broadcast %cst_174 : f32 to vector<8x1xf32>
    %347 = arith.divf %345, %346 : vector<8x1xf32>
    %348 = vector.broadcast %347 : vector<8x1xf32> to vector<8x64xf32>
    %349 = arith.subf %339, %348 : vector<8x64xf32>
    %350 = arith.mulf %349, %349 : vector<8x64xf32>
    %cst_175 = arith.constant dense<0.000000e+00> : vector<8xf32>
    %351 = vector.multi_reduction <add>, %350, %cst_175 [1] : vector<8x64xf32> to vector<8xf32>
    %352 = vector.shape_cast %351 : vector<8xf32> to vector<8x1xf32>
    %cst_176 = arith.constant 6.400000e+01 : f32
    %353 = vector.broadcast %cst_176 : f32 to vector<8x1xf32>
    %354 = arith.divf %352, %353 : vector<8x1xf32>
    %355 = vector.broadcast %347 : vector<8x1xf32> to vector<8x64xf32>
    %356 = arith.subf %339, %355 : vector<8x64xf32>
    %cst_177 = arith.constant 9.99999997E-7 : f32
    %357 = vector.broadcast %cst_177 : f32 to vector<8x1xf32>
    %358 = arith.addf %354, %357 : vector<8x1xf32>
    %359 = math.rsqrt %358 : vector<8x1xf32>
    %360 = vector.broadcast %359 : vector<8x1xf32> to vector<8x64xf32>
    %361 = arith.mulf %356, %360 : vector<8x64xf32>
    %362 = vector.broadcast %341 : vector<1x64xf32> to vector<8x64xf32>
    %363 = arith.mulf %361, %362 : vector<8x64xf32>
    %364 = vector.broadcast %343 : vector<1x64xf32> to vector<8x64xf32>
    %365 = arith.addf %363, %364 : vector<8x64xf32>
    %c1_178 = arith.constant 1 : index
    %c0_179 = arith.constant 0 : index
    %c0_180 = arith.constant 0 : index
    %366 = vector.load %arg20[%c1_178, %c0_179, %c0_180] : memref<2x64x128xf32, #tpu.memory_space<vmem>>, vector<1x64x128xf32>
    %367 = vector.shape_cast %366 : vector<1x64x128xf32> to vector<64x128xf32>
    %cst_181 = arith.constant dense<0.000000e+00> : vector<8x128xf32>
    %368 = tpu.matmul %365, %367, %cst_181 {dimension_numbers = #tpu.dot_dimension_numbers<[1], [0], [0], [1], [0, 0, 1, 1], [], []>} : vector<8x64xf32>, vector<64x128xf32>, vector<8x128xf32> -> vector<8x128xf32>
    %c1_182 = arith.constant 1 : index
    %c0_183 = arith.constant 0 : index
    %c0_184 = arith.constant 0 : index
    %369 = vector.load %arg21[%c1_182, %c0_183, %c0_184] : memref<2x1x128xf32, #tpu.memory_space<vmem>>, vector<1x1x128xf32>
    %370 = vector.shape_cast %369 : vector<1x1x128xf32> to vector<1x128xf32>
    %371 = vector.broadcast %370 : vector<1x128xf32> to vector<8x128xf32>
    %372 = arith.addf %368, %371 : vector<8x128xf32>
    %cst_185 = arith.constant 5.000000e-01 : f32
    %373 = vector.broadcast %cst_185 : f32 to vector<8x128xf32>
    %374 = arith.mulf %373, %372 : vector<8x128xf32>
    %cst_186 = arith.constant 4.471500e-02 : f32
    %375 = vector.broadcast %cst_186 : f32 to vector<8x128xf32>
    %376 = arith.mulf %375, %372 : vector<8x128xf32>
    %377 = arith.mulf %376, %372 : vector<8x128xf32>
    %378 = arith.mulf %377, %372 : vector<8x128xf32>
    %379 = arith.addf %372, %378 : vector<8x128xf32>
    %cst_187 = arith.constant 0.797884583 : f32
    %380 = vector.broadcast %cst_187 : f32 to vector<8x128xf32>
    %381 = arith.mulf %380, %379 : vector<8x128xf32>
    %382 = math.tanh %381 : vector<8x128xf32>
    %cst_188 = arith.constant 1.000000e+00 : f32
    %383 = vector.broadcast %cst_188 : f32 to vector<8x128xf32>
    %384 = arith.addf %383, %382 : vector<8x128xf32>
    %385 = arith.mulf %374, %384 : vector<8x128xf32>
    %c1_189 = arith.constant 1 : index
    %c0_190 = arith.constant 0 : index
    %c0_191 = arith.constant 0 : index
    %386 = vector.load %arg22[%c1_189, %c0_190, %c0_191] : memref<2x128x64xf32, #tpu.memory_space<vmem>>, vector<1x128x64xf32>
    %387 = vector.shape_cast %386 : vector<1x128x64xf32> to vector<128x64xf32>
    %cst_192 = arith.constant dense<0.000000e+00> : vector<8x64xf32>
    %388 = tpu.matmul %385, %387, %cst_192 {dimension_numbers = #tpu.dot_dimension_numbers<[1], [0], [0], [1], [0, 0, 1, 1], [], []>} : vector<8x128xf32>, vector<128x64xf32>, vector<8x64xf32> -> vector<8x64xf32>
    %389 = arith.addf %339, %388 : vector<8x64xf32>
    %c1_193 = arith.constant 1 : index
    %c0_194 = arith.constant 0 : index
    %c0_195 = arith.constant 0 : index
    %390 = vector.load %arg23[%c1_193, %c0_194, %c0_195] : memref<2x1x64xf32, #tpu.memory_space<vmem>>, vector<1x1x64xf32>
    %391 = vector.shape_cast %390 : vector<1x1x64xf32> to vector<1x64xf32>
    %392 = vector.broadcast %391 : vector<1x64xf32> to vector<8x64xf32>
    %393 = arith.addf %389, %392 : vector<8x64xf32>
    %c0_196 = arith.constant 0 : index
    %c0_197 = arith.constant 0 : index
    %394 = vector.load %arg4[%c0_196, %c0_197] : memref<1x64xf32, #tpu.memory_space<vmem>>, vector<1x64xf32>
    %c0_198 = arith.constant 0 : index
    %c0_199 = arith.constant 0 : index
    %395 = vector.load %arg5[%c0_198, %c0_199] : memref<1x64xf32, #tpu.memory_space<vmem>>, vector<1x64xf32>
    %cst_200 = arith.constant dense<0.000000e+00> : vector<8xf32>
    %396 = vector.multi_reduction <add>, %393, %cst_200 [1] : vector<8x64xf32> to vector<8xf32>
    %397 = vector.shape_cast %396 : vector<8xf32> to vector<8x1xf32>
    %cst_201 = arith.constant 6.400000e+01 : f32
    %398 = vector.broadcast %cst_201 : f32 to vector<8x1xf32>
    %399 = arith.divf %397, %398 : vector<8x1xf32>
    %400 = vector.broadcast %399 : vector<8x1xf32> to vector<8x64xf32>
    %401 = arith.subf %393, %400 : vector<8x64xf32>
    %402 = arith.mulf %401, %401 : vector<8x64xf32>
    %cst_202 = arith.constant dense<0.000000e+00> : vector<8xf32>
    %403 = vector.multi_reduction <add>, %402, %cst_202 [1] : vector<8x64xf32> to vector<8xf32>
    %404 = vector.shape_cast %403 : vector<8xf32> to vector<8x1xf32>
    %cst_203 = arith.constant 6.400000e+01 : f32
    %405 = vector.broadcast %cst_203 : f32 to vector<8x1xf32>
    %406 = arith.divf %404, %405 : vector<8x1xf32>
    %407 = vector.broadcast %399 : vector<8x1xf32> to vector<8x64xf32>
    %408 = arith.subf %393, %407 : vector<8x64xf32>
    %cst_204 = arith.constant 9.99999997E-7 : f32
    %409 = vector.broadcast %cst_204 : f32 to vector<8x1xf32>
    %410 = arith.addf %406, %409 : vector<8x1xf32>
    %411 = math.rsqrt %410 : vector<8x1xf32>
    %412 = vector.broadcast %411 : vector<8x1xf32> to vector<8x64xf32>
    %413 = arith.mulf %408, %412 : vector<8x64xf32>
    %414 = vector.broadcast %394 : vector<1x64xf32> to vector<8x64xf32>
    %415 = arith.mulf %413, %414 : vector<8x64xf32>
    %416 = vector.broadcast %395 : vector<1x64xf32> to vector<8x64xf32>
    %417 = arith.addf %415, %416 : vector<8x64xf32>
    %c0_205 = arith.constant 0 : index
    %c0_206 = arith.constant 0 : index
    %418 = vector.load %arg6[%c0_205, %c0_206] : memref<64x128xf32, #tpu.memory_space<vmem>>, vector<64x128xf32>
    %cst_207 = arith.constant dense<0.000000e+00> : vector<8x128xf32>
    %419 = tpu.matmul %417, %418, %cst_207 {dimension_numbers = #tpu.dot_dimension_numbers<[1], [0], [0], [1], [0, 0, 1, 1], [], []>} : vector<8x64xf32>, vector<64x128xf32>, vector<8x128xf32> -> vector<8x128xf32>
    %c0_208 = arith.constant 0 : index
    %c0_209 = arith.constant 0 : index
    %420 = vector.load %arg7[%c0_208, %c0_209] : memref<1x128xf32, #tpu.memory_space<vmem>>, vector<1x128xf32>
    %421 = vector.broadcast %420 : vector<1x128xf32> to vector<8x128xf32>
    %422 = arith.addf %419, %421 : vector<8x128xf32>
    %423 = arith.negf %422 : vector<8x128xf32>
    %424 = math.exp %423 : vector<8x128xf32>
    %cst_210 = arith.constant 1.000000e+00 : f32
    %425 = vector.broadcast %cst_210 : f32 to vector<8x128xf32>
    %426 = arith.addf %425, %424 : vector<8x128xf32>
    %427 = arith.divf %425, %426 : vector<8x128xf32>
    %cst_211 = arith.constant 1.800000e+01 : f32
    %428 = vector.broadcast %cst_211 : f32 to vector<8x128xf32>
    %429 = arith.mulf %428, %427 : vector<8x128xf32>
    %c0_212 = arith.constant 0 : index
    %c0_213 = arith.constant 0 : index
    %430 = vector.load %arg24[%c0_212, %c0_213] : memref<8x128xf32, #tpu.memory_space<vmem>>, vector<8x128xf32>
    tpu.vector_store %arg24[%c0_212, %c0_213], %429 {strides = array<i32>} : memref<8x128xf32, #tpu.memory_space<vmem>>, vector<8x128xf32>,
    return
  }
  func.func @transform_0(%arg0: i32) -> (i32, i32) {
    %c0_i32 = arith.constant 0 : i32
    %c0_i32_0 = arith.constant 0 : i32
    return %arg0, %c0_i32 : i32, i32
  }
  func.func @transform_1(%arg0: i32) -> (i32, i32) {
    %c0_i32 = arith.constant 0 : i32
    %c0_i32_0 = arith.constant 0 : i32
    return %arg0, %c0_i32 : i32, i32
  }
  func.func @transform_2(%arg0: i32) -> (i32, i32) {
    %c0_i32 = arith.constant 0 : i32
    %c0_i32_0 = arith.constant 0 : i32
    %c0_i32_1 = arith.constant 0 : i32
    return %c0_i32, %c0_i32_0 : i32, i32
  }
  func.func @transform_3(%arg0: i32) -> (i32, i32) {
    %c0_i32 = arith.constant 0 : i32
    %c0_i32_0 = arith.constant 0 : i32
    %c0_i32_1 = arith.constant 0 : i32
    return %c0_i32, %c0_i32_0 : i32, i32
  }
  func.func @transform_4(%arg0: i32) -> (i32, i32) {
    %c0_i32 = arith.constant 0 : i32
    %c0_i32_0 = arith.constant 0 : i32
    %c0_i32_1 = arith.constant 0 : i32
    return %c0_i32, %c0_i32_0 : i32, i32
  }
  func.func @transform_5(%arg0: i32) -> (i32, i32) {
    %c0_i32 = arith.constant 0 : i32
    %c0_i32_0 = arith.constant 0 : i32
    %c0_i32_1 = arith.constant 0 : i32
    return %c0_i32, %c0_i32_0 : i32, i32
  }
  func.func @transform_6(%arg0: i32) -> (i32, i32) {
    %c0_i32 = arith.constant 0 : i32
    %c0_i32_0 = arith.constant 0 : i32
    %c0_i32_1 = arith.constant 0 : i32
    return %c0_i32, %c0_i32_0 : i32, i32
  }
  func.func @transform_7(%arg0: i32) -> (i32, i32, i32) {
    %c0_i32 = arith.constant 0 : i32
    %c0_i32_0 = arith.constant 0 : i32
    %c0_i32_1 = arith.constant 0 : i32
    %c0_i32_2 = arith.constant 0 : i32
    return %c0_i32, %c0_i32_0, %c0_i32_1 : i32, i32, i32
  }
  func.func @transform_8(%arg0: i32) -> (i32, i32, i32) {
    %c0_i32 = arith.constant 0 : i32
    %c0_i32_0 = arith.constant 0 : i32
    %c0_i32_1 = arith.constant 0 : i32
    %c0_i32_2 = arith.constant 0 : i32
    return %c0_i32, %c0_i32_0, %c0_i32_1 : i32, i32, i32
  }
  func.func @transform_9(%arg0: i32) -> (i32, i32, i32) {
    %c0_i32 = arith.constant 0 : i32
    %c0_i32_0 = arith.constant 0 : i32
    %c0_i32_1 = arith.constant 0 : i32
    %c0_i32_2 = arith.constant 0 : i32
    return %c0_i32, %c0_i32_0, %c0_i32_1 : i32, i32, i32
  }
  func.func @transform_10(%arg0: i32) -> (i32, i32, i32) {
    %c0_i32 = arith.constant 0 : i32
    %c0_i32_0 = arith.constant 0 : i32
    %c0_i32_1 = arith.constant 0 : i32
    %c0_i32_2 = arith.constant 0 : i32
    return %c0_i32, %c0_i32_0, %c0_i32_1 : i32, i32, i32
  }
  func.func @transform_11(%arg0: i32) -> (i32, i32, i32) {
    %c0_i32 = arith.constant 0 : i32
    %c0_i32_0 = arith.constant 0 : i32
    %c0_i32_1 = arith.constant 0 : i32
    %c0_i32_2 = arith.constant 0 : i32
    return %c0_i32, %c0_i32_0, %c0_i32_1 : i32, i32, i32
  }
  func.func @transform_12(%arg0: i32) -> (i32, i32, i32) {
    %c0_i32 = arith.constant 0 : i32
    %c0_i32_0 = arith.constant 0 : i32
    %c0_i32_1 = arith.constant 0 : i32
    %c0_i32_2 = arith.constant 0 : i32
    return %c0_i32, %c0_i32_0, %c0_i32_1 : i32, i32, i32
  }
  func.func @transform_13(%arg0: i32) -> (i32, i32, i32) {
    %c0_i32 = arith.constant 0 : i32
    %c0_i32_0 = arith.constant 0 : i32
    %c0_i32_1 = arith.constant 0 : i32
    %c0_i32_2 = arith.constant 0 : i32
    return %c0_i32, %c0_i32_0, %c0_i32_1 : i32, i32, i32
  }
  func.func @transform_14(%arg0: i32) -> (i32, i32, i32) {
    %c0_i32 = arith.constant 0 : i32
    %c0_i32_0 = arith.constant 0 : i32
    %c0_i32_1 = arith.constant 0 : i32
    %c0_i32_2 = arith.constant 0 : i32
    return %c0_i32, %c0_i32_0, %c0_i32_1 : i32, i32, i32
  }
  func.func @transform_15(%arg0: i32) -> (i32, i32, i32) {
    %c0_i32 = arith.constant 0 : i32
    %c0_i32_0 = arith.constant 0 : i32
    %c0_i32_1 = arith.constant 0 : i32
    %c0_i32_2 = arith.constant 0 : i32
    return %c0_i32, %c0_i32_0, %c0_i32_1 : i32, i32, i32
  }
  func.func @transform_16(%arg0: i32) -> (i32, i32, i32) {
    %c0_i32 = arith.constant 0 : i32
    %c0_i32_0 = arith.constant 0 : i32
    %c0_i32_1 = arith.constant 0 : i32
    %c0_i32_2 = arith.constant 0 : i32
    return %c0_i32, %c0_i32_0, %c0_i32_1 : i32, i32, i32
  }
  func.func @transform_17(%arg0: i32) -> (i32, i32, i32) {
    %c0_i32 = arith.constant 0 : i32
    %c0_i32_0 = arith.constant 0 : i32
    %c0_i32_1 = arith.constant 0 : i32
    %c0_i32_2 = arith.constant 0 : i32
    return %c0_i32, %c0_i32_0, %c0_i32_1 : i32, i32, i32
  }
  func.func @transform_18(%arg0: i32) -> (i32, i32, i32) {
    %c0_i32 = arith.constant 0 : i32
    %c0_i32_0 = arith.constant 0 : i32
    %c0_i32_1 = arith.constant 0 : i32
    %c0_i32_2 = arith.constant 0 : i32
    return %c0_i32, %c0_i32_0, %c0_i32_1 : i32, i32, i32
  }
  func.func @transform_19(%arg0: i32) -> (i32, i32, i32) {
    %c0_i32 = arith.constant 0 : i32
    %c0_i32_0 = arith.constant 0 : i32
    %c0_i32_1 = arith.constant 0 : i32
    %c0_i32_2 = arith.constant 0 : i32
    return %c0_i32, %c0_i32_0, %c0_i32_1 : i32, i32, i32
  }
  func.func @transform_20(%arg0: i32) -> (i32, i32, i32) {
    %c0_i32 = arith.constant 0 : i32
    %c0_i32_0 = arith.constant 0 : i32
    %c0_i32_1 = arith.constant 0 : i32
    %c0_i32_2 = arith.constant 0 : i32
    return %c0_i32, %c0_i32_0, %c0_i32_1 : i32, i32, i32
  }
  func.func @transform_21(%arg0: i32) -> (i32, i32, i32) {
    %c0_i32 = arith.constant 0 : i32
    %c0_i32_0 = arith.constant 0 : i32
    %c0_i32_1 = arith.constant 0 : i32
    %c0_i32_2 = arith.constant 0 : i32
    return %c0_i32, %c0_i32_0, %c0_i32_1 : i32, i32, i32
  }
  func.func @transform_22(%arg0: i32) -> (i32, i32, i32) {
    %c0_i32 = arith.constant 0 : i32
    %c0_i32_0 = arith.constant 0 : i32
    %c0_i32_1 = arith.constant 0 : i32
    %c0_i32_2 = arith.constant 0 : i32
    return %c0_i32, %c0_i32_0, %c0_i32_1 : i32, i32, i32
  }
  func.func @transform_23(%arg0: i32) -> (i32, i32) {
    %c0_i32 = arith.constant 0 : i32
    %c0_i32_0 = arith.constant 0 : i32
    return %arg0, %c0_i32 : i32, i32
  }
}

</mosaic_0001>

<llo_original>
// kernel: covid_vit_forward.1
$region0: #{covid_vit_forward.1}
  #allocation0 [shape = 'u32[]', space=smem, size = 0x4, offset = 0x4, fixed_abs, tag = 'smem constant byte address 0x4 - core index']
  #allocation1 [shape = 'u32[144,128]{1,0:T(1,128)}', space=vmem, size = 0x12000, scoped, tag = 'internal scratch']
  %s0 = inlined_call_operand.vmem [shape: f32[16,768], index: 0, kind: input, shape index: {}]
  %s1 = inlined_call_operand.vmem [shape: f32[16,64], index: 1, kind: input, shape index: {}]
  %s2 = inlined_call_operand.vmem [shape: f32[768,64], index: 2, kind: input, shape index: {}]
  %s3 = inlined_call_operand.vmem [shape: f32[1,64], index: 3, kind: input, shape index: {}]
  %s4 = inlined_call_operand.vmem [shape: f32[1,64], index: 4, kind: input, shape index: {}]
  %s5 = inlined_call_operand.vmem [shape: f32[64,128], index: 5, kind: input, shape index: {}]
  %s6 = inlined_call_operand.vmem [shape: f32[1,128], index: 6, kind: input, shape index: {}]
  %s7 = inlined_call_operand.vmem [shape: f32[2,1,64], index: 7, kind: input, shape index: {}]
  %s8 = inlined_call_operand.vmem [shape: f32[2,1,64], index: 8, kind: input, shape index: {}]
  %s9 = inlined_call_operand.vmem [shape: f32[2,64,64], index: 9, kind: input, shape index: {}]
  %s10 = inlined_call_operand.vmem [shape: f32[2,1,64], index: 10, kind: input, shape index: {}]
  %s11 = inlined_call_operand.vmem [shape: f32[2,64,64], index: 11, kind: input, shape index: {}]
  %s12 = inlined_call_operand.vmem [shape: f32[2,1,64], index: 12, kind: input, shape index: {}]
  %s13 = inlined_call_operand.vmem [shape: f32[2,64,64], index: 13, kind: input, shape index: {}]
  %s14 = inlined_call_operand.vmem [shape: f32[2,1,64], index: 14, kind: input, shape index: {}]
  %s15 = inlined_call_operand.vmem [shape: f32[2,64,64], index: 15, kind: input, shape index: {}]
  %s16 = inlined_call_operand.vmem [shape: f32[2,1,64], index: 16, kind: input, shape index: {}]
  %s17 = inlined_call_operand.vmem [shape: f32[2,1,64], index: 17, kind: input, shape index: {}]
  %s18 = inlined_call_operand.vmem [shape: f32[2,1,64], index: 18, kind: input, shape index: {}]
  %s19 = inlined_call_operand.vmem [shape: f32[2,64,128], index: 19, kind: input, shape index: {}]
  %s20 = inlined_call_operand.vmem [shape: f32[2,1,128], index: 20, kind: input, shape index: {}]
  %s21 = inlined_call_operand.vmem [shape: f32[2,128,64], index: 21, kind: input, shape index: {}]
  %s22 = inlined_call_operand.vmem [shape: f32[2,1,64], index: 22, kind: input, shape index: {}]
  %s23 = inlined_call_operand.vmem [shape: f32[16,128], index: 23, kind: output, shape index: {}]
  %s24 = sld [smem:[#allocation0]]
  $region125: #{covid_vit_forward.1} parent=0
    _
  %s26 = ssub.s32 1, %s24
  %s27 = scalar_select 0, %s26, %s24
  loop: start=0, step=1, limit=4
  $region2: #{covid_vit_forward.1} parent=0 // loop_pre_header
    _
  $region3: #{covid_vit_forward.1} parent=0 // loop_header
    %s29 = sphi 0, %s33
    %p30 = scmp.ge.s32.totalorder %s29, 4
    %s39 = sphi 0, %s41
    %s42 = sphi 0, %s39
    %s43 = sphi 0, %s42
    %s59 = sphi 0, %s43
    %s65 = sphi 0, %s67
    %s68 = sphi 0, %s65
    %s69 = sphi 0, %s68
    %s85 = sphi 0, %s69
    %s89 = sphi 0, %s89
    %s91 = sphi 0, %s89
    %s92 = sphi 0, %s91
    %s106 = sphi 0, %s92
    %s110 = sphi 0, %s110
    %s112 = sphi 0, %s110
    %s113 = sphi 0, %s112
    %s127 = sphi 0, %s113
    %s131 = sphi 0, %s131
    %s133 = sphi 0, %s131
    %s134 = sphi 0, %s133
    %s148 = sphi 0, %s134
    %s152 = sphi 0, %s152
    %s154 = sphi 0, %s152
    %s155 = sphi 0, %s154
    %s169 = sphi 0, %s155
    %s173 = sphi 0, %s173
    %s175 = sphi 0, %s173
    %s176 = sphi 0, %s175
    %s190 = sphi 0, %s176
    %s194 = sphi 0, %s194
    %s196 = sphi 0, %s194
    %s197 = sphi 0, %s196
    %s211 = sphi 0, %s197
    %s215 = sphi 0, %s215
    %s217 = sphi 0, %s215
    %s218 = sphi 0, %s217
    %s232 = sphi 0, %s218
    %s236 = sphi 0, %s236
    %s238 = sphi 0, %s236
    %s239 = sphi 0, %s238
    %s253 = sphi 0, %s239
    %s257 = sphi 0, %s257
    %s259 = sphi 0, %s257
    %s260 = sphi 0, %s259
    %s274 = sphi 0, %s260
    %s278 = sphi 0, %s278
    %s280 = sphi 0, %s278
    %s281 = sphi 0, %s280
    %s295 = sphi 0, %s281
    %s299 = sphi 0, %s299
    %s301 = sphi 0, %s299
    %s302 = sphi 0, %s301
    %s316 = sphi 0, %s302
    %s320 = sphi 0, %s320
    %s322 = sphi 0, %s320
    %s323 = sphi 0, %s322
    %s337 = sphi 0, %s323
    %s341 = sphi 0, %s341
    %s343 = sphi 0, %s341
    %s344 = sphi 0, %s343
    %s358 = sphi 0, %s344
    %s362 = sphi 0, %s362
    %s364 = sphi 0, %s362
    %s365 = sphi 0, %s364
    %s379 = sphi 0, %s365
    %s383 = sphi 0, %s383
    %s385 = sphi 0, %s383
    %s386 = sphi 0, %s385
    %s400 = sphi 0, %s386
    %s404 = sphi 0, %s404
    %s406 = sphi 0, %s404
    %s407 = sphi 0, %s406
    %s421 = sphi 0, %s407
    %s425 = sphi 0, %s425
    %s427 = sphi 0, %s425
    %s428 = sphi 0, %s427
    %s442 = sphi 0, %s428
    %s446 = sphi 0, %s446
    %s448 = sphi 0, %s446
    %s449 = sphi 0, %s448
    %s463 = sphi 0, %s449
    %s467 = sphi 0, %s467
    %s469 = sphi 0, %s467
    %s470 = sphi 0, %s469
    %s484 = sphi 0, %s470
    %s488 = sphi 0, %s488
    %s490 = sphi 0, %s488
    %s491 = sphi 0, %s490
    %s505 = sphi 0, %s491
    %s509 = sphi 0, %s509
    %s511 = sphi 0, %s509
    %s512 = sphi 0, %s511
    %s526 = sphi 0, %s512
    %s532 = sphi 0, %s534
    %s535 = sphi 0, %s532
    %s536 = sphi 0, %s535
    %s552 = sphi 0, %s536
  $region4: #{covid_vit_forward.1} parent=0 // loop_header_branch
    %32 = sbr.rel (%p30) target = $region8
  $region5: #{covid_vit_forward.1} parent=0 // loop_body
    %s34 = ssub.s32 %s29, 1
    %s35 = ssub.s32 %s29, 2
    %s36 = sadd.s32 %s29, 1
    %s37 = ssub.s32 %s29, %s36
    %p38 = scmp.eq.s32.totalorder %s37, 0
    %s40 = sadd.s32 %s39, 1
    %s41 = scalar_select %p38, %s39, %s40
    %p44 = pneg %p38
    %p45 = scmp.eq.s32.totalorder %s29, 1
    %p46 = por %p44, %p45
    %p47 = scmp.ne.s32.totalorder %s39, %s42
    %p48 = scmp.eq.s32.totalorder %s29, 0
    %p49 = por %p47, %p48
    %p50 = scmp.ne.s32.totalorder %s39, %s42
    %p51 = scmp.eq.s32.totalorder %s34, 1
    %p52 = por %p50, %p51
    %p53 = scmp.ne.s32.totalorder %s42, %s43
    %p54 = scmp.eq.s32.totalorder %s34, 0
    %p55 = por %p53, %p54
    %p56 = scmp.ne.s32.totalorder %s42, %s43
    %p57 = scmp.eq.s32.totalorder %s35, 1
    %p58 = por %p56, %p57
    %p60 = scmp.ne.s32.totalorder %s43, %s59
    %p61 = scmp.eq.s32.totalorder %s35, 0
    %p62 = por %p60, %p61
    %s63 = ssub.s32 %s29, %s36
    %p64 = scmp.eq.s32.totalorder %s63, 0
    %s66 = sadd.s32 %s65, 1
    %s67 = scalar_select %p64, %s65, %s66
    %p70 = pneg %p64
    %p71 = scmp.eq.s32.totalorder %s29, 1
    %p72 = por %p70, %p71
    %p73 = scmp.ne.s32.totalorder %s65, %s68
    %p74 = scmp.eq.s32.totalorder %s29, 0
    %p75 = por %p73, %p74
    %p76 = scmp.ne.s32.totalorder %s65, %s68
    %p77 = scmp.eq.s32.totalorder %s34, 1
    %p78 = por %p76, %p77
    %p79 = scmp.ne.s32.totalorder %s68, %s69
    %p80 = scmp.eq.s32.totalorder %s34, 0
    %p81 = por %p79, %p80
    %p82 = scmp.ne.s32.totalorder %s68, %s69
    %p83 = scmp.eq.s32.totalorder %s35, 1
    %p84 = por %p82, %p83
    %p86 = scmp.ne.s32.totalorder %s69, %s85
    %p87 = scmp.eq.s32.totalorder %s35, 0
    %p88 = por %p86, %p87
    %s90 = sadd.s32 %s89, 1
    %p93 = scmp.eq.s32.totalorder %s29, 1
    %p94 = scmp.ne.s32.totalorder %s89, %s91
    %p95 = scmp.eq.s32.totalorder %s29, 0
    %p96 = por %p94, %p95
    %p97 = scmp.ne.s32.totalorder %s89, %s91
    %p98 = scmp.eq.s32.totalorder %s34, 1
    %p99 = por %p97, %p98
    %p100 = scmp.ne.s32.totalorder %s91, %s92
    %p101 = scmp.eq.s32.totalorder %s34, 0
    %p102 = por %p100, %p101
    %p103 = scmp.ne.s32.totalorder %s91, %s92
    %p104 = scmp.eq.s32.totalorder %s35, 1
    %p105 = por %p103, %p104
    %p107 = scmp.ne.s32.totalorder %s92, %s106
    %p108 = scmp.eq.s32.totalorder %s35, 0
    %p109 = por %p107, %p108
    %s111 = sadd.s32 %s110, 1
    %p114 = scmp.eq.s32.totalorder %s29, 1
    %p115 = scmp.ne.s32.totalorder %s110, %s112
    %p116 = scmp.eq.s32.totalorder %s29, 0
    %p117 = por %p115, %p116
    %p118 = scmp.ne.s32.totalorder %s110, %s112
    %p119 = scmp.eq.s32.totalorder %s34, 1
    %p120 = por %p118, %p119
    %p121 = scmp.ne.s32.totalorder %s112, %s113
    %p122 = scmp.eq.s32.totalorder %s34, 0
    %p123 = por %p121, %p122
    %p124 = scmp.ne.s32.totalorder %s112, %s113
    %p125 = scmp.eq.s32.totalorder %s35, 1
    %p126 = por %p124, %p125
    %p128 = scmp.ne.s32.totalorder %s113, %s127
    %p129 = scmp.eq.s32.totalorder %s35, 0
    %p130 = por %p128, %p129
    %s132 = sadd.s32 %s131, 1
    %p135 = scmp.eq.s32.totalorder %s29, 1
    %p136 = scmp.ne.s32.totalorder %s131, %s133
    %p137 = scmp.eq.s32.totalorder %s29, 0
    %p138 = por %p136, %p137
    %p139 = scmp.ne.s32.totalorder %s131, %s133
    %p140 = scmp.eq.s32.totalorder %s34, 1
    %p141 = por %p139, %p140
    %p142 = scmp.ne.s32.totalorder %s133, %s134
    %p143 = scmp.eq.s32.totalorder %s34, 0
    %p144 = por %p142, %p143
    %p145 = scmp.ne.s32.totalorder %s133, %s134
    %p146 = scmp.eq.s32.totalorder %s35, 1
    %p147 = por %p145, %p146
    %p149 = scmp.ne.s32.totalorder %s134, %s148
    %p150 = scmp.eq.s32.totalorder %s35, 0
    %p151 = por %p149, %p150
    %s153 = sadd.s32 %s152, 1
    %p156 = scmp.eq.s32.totalorder %s29, 1
    %p157 = scmp.ne.s32.totalorder %s152, %s154
    %p158 = scmp.eq.s32.totalorder %s29, 0
    %p159 = por %p157, %p158
    %p160 = scmp.ne.s32.totalorder %s152, %s154
    %p161 = scmp.eq.s32.totalorder %s34, 1
    %p162 = por %p160, %p161
    %p163 = scmp.ne.s32.totalorder %s154, %s155
    %p164 = scmp.eq.s32.totalorder %s34, 0
    %p165 = por %p163, %p164
    %p166 = scmp.ne.s32.totalorder %s154, %s155
    %p167 = scmp.eq.s32.totalorder %s35, 1
    %p168 = por %p166, %p167
    %p170 = scmp.ne.s32.totalorder %s155, %s169
    %p171 = scmp.eq.s32.totalorder %s35, 0
    %p172 = por %p170, %p171
    %s174 = sadd.s32 %s173, 1
    %p177 = scmp.eq.s32.totalorder %s29, 1
    %p178 = scmp.ne.s32.totalorder %s173, %s175
    %p179 = scmp.eq.s32.totalorder %s29, 0
    %p180 = por %p178, %p179
    %p181 = scmp.ne.s32.totalorder %s173, %s175
    %p182 = scmp.eq.s32.totalorder %s34, 1
    %p183 = por %p181, %p182
    %p184 = scmp.ne.s32.totalorder %s175, %s176
    %p185 = scmp.eq.s32.totalorder %s34, 0
    %p186 = por %p184, %p185
    %p187 = scmp.ne.s32.totalorder %s175, %s176
    %p188 = scmp.eq.s32.totalorder %s35, 1
    %p189 = por %p187, %p188
    %p191 = scmp.ne.s32.totalorder %s176, %s190
    %p192 = scmp.eq.s32.totalorder %s35, 0
    %p193 = por %p191, %p192
    %s195 = sadd.s32 %s194, 1
    %p198 = scmp.eq.s32.totalorder %s29, 1
    %p199 = scmp.ne.s32.totalorder %s194, %s196
    %p200 = scmp.eq.s32.totalorder %s29, 0
    %p201 = por %p199, %p200
    %p202 = scmp.ne.s32.totalorder %s194, %s196
    %p203 = scmp.eq.s32.totalorder %s34, 1
    %p204 = por %p202, %p203
    %p205 = scmp.ne.s32.totalorder %s196, %s197
    %p206 = scmp.eq.s32.totalorder %s34, 0
    %p207 = por %p205, %p206
    %p208 = scmp.ne.s32.totalorder %s196, %s197
    %p209 = scmp.eq.s32.totalorder %s35, 1
    %p210 = por %p208, %p209
    %p212 = scmp.ne.s32.totalorder %s197, %s211
    %p213 = scmp.eq.s32.totalorder %s35, 0
    %p214 = por %p212, %p213
    %s216 = sadd.s32 %s215, 1
    %p219 = scmp.eq.s32.totalorder %s29, 1
    %p220 = scmp.ne.s32.totalorder %s215, %s217
    %p221 = scmp.eq.s32.totalorder %s29, 0
    %p222 = por %p220, %p221
    %p223 = scmp.ne.s32.totalorder %s215, %s217
    %p224 = scmp.eq.s32.totalorder %s34, 1
    %p225 = por %p223, %p224
    %p226 = scmp.ne.s32.totalorder %s217, %s218
    %p227 = scmp.eq.s32.totalorder %s34, 0
    %p228 = por %p226, %p227
    %p229 = scmp.ne.s32.totalorder %s217, %s218
    %p230 = scmp.eq.s32.totalorder %s35, 1
    %p231 = por %p229, %p230
    %p233 = scmp.ne.s32.totalorder %s218, %s232
    %p234 = scmp.eq.s32.totalorder %s35, 0
    %p235 = por %p233, %p234
    %s237 = sadd.s32 %s236, 1
    %p240 = scmp.eq.s32.totalorder %s29, 1
    %p241 = scmp.ne.s32.totalorder %s236, %s238
    %p242 = scmp.eq.s32.totalorder %s29, 0
    %p243 = por %p241, %p242
    %p244 = scmp.ne.s32.totalorder %s236, %s238
    %p245 = scmp.eq.s32.totalorder %s34, 1
    %p246 = por %p244, %p245
    %p247 = scmp.ne.s32.totalorder %s238, %s239
    %p248 = scmp.eq.s32.totalorder %s34, 0
    %p249 = por %p247, %p248
    %p250 = scmp.ne.s32.totalorder %s238, %s239
    %p251 = scmp.eq.s32.totalorder %s35, 1
    %p252 = por %p250, %p251
    %p254 = scmp.ne.s32.totalorder %s239, %s253
    %p255 = scmp.eq.s32.totalorder %s35, 0
    %p256 = por %p254, %p255
    %s258 = sadd.s32 %s257, 1
    %p261 = scmp.eq.s32.totalorder %s29, 1
    %p262 = scmp.ne.s32.totalorder %s257, %s259
    %p263 = scmp.eq.s32.totalorder %s29, 0
    %p264 = por %p262, %p263
    %p265 = scmp.ne.s32.totalorder %s257, %s259
    %p266 = scmp.eq.s32.totalorder %s34, 1
    %p267 = por %p265, %p266
    %p268 = scmp.ne.s32.totalorder %s259, %s260
    %p269 = scmp.eq.s32.totalorder %s34, 0
    %p270 = por %p268, %p269
    %p271 = scmp.ne.s32.totalorder %s259, %s260
    %p272 = scmp.eq.s32.totalorder %s35, 1
    %p273 = por %p271, %p272
    %p275 = scmp.ne.s32.totalorder %s260, %s274
    %p276 = scmp.eq.s32.totalorder %s35, 0
    %p277 = por %p275, %p276
    %s279 = sadd.s32 %s278, 1
    %p282 = scmp.eq.s32.totalorder %s29, 1
    %p283 = scmp.ne.s32.totalorder %s278, %s280
    %p284 = scmp.eq.s32.totalorder %s29, 0
    %p285 = por %p283, %p284
    %p286 = scmp.ne.s32.totalorder %s278, %s280
    %p287 = scmp.eq.s32.totalorder %s34, 1
    %p288 = por %p286, %p287
    %p289 = scmp.ne.s32.totalorder %s280, %s281
    %p290 = scmp.eq.s32.totalorder %s34, 0
    %p291 = por %p289, %p290
    %p292 = scmp.ne.s32.totalorder %s280, %s281
    %p293 = scmp.eq.s32.totalorder %s35, 1
    %p294 = por %p292, %p293
    %p296 = scmp.ne.s32.totalorder %s281, %s295
    %p297 = scmp.eq.s32.totalorder %s35, 0
    %p298 = por %p296, %p297
    %s300 = sadd.s32 %s299, 1
    %p303 = scmp.eq.s32.totalorder %s29, 1
    %p304 = scmp.ne.s32.totalorder %s299, %s301
    %p305 = scmp.eq.s32.totalorder %s29, 0
    %p306 = por %p304, %p305
    %p307 = scmp.ne.s32.totalorder %s299, %s301
    %p308 = scmp.eq.s32.totalorder %s34, 1
    %p309 = por %p307, %p308
    %p310 = scmp.ne.s32.totalorder %s301, %s302
    %p311 = scmp.eq.s32.totalorder %s34, 0
    %p312 = por %p310, %p311
    %p313 = scmp.ne.s32.totalorder %s301, %s302
    %p314 = scmp.eq.s32.totalorder %s35, 1
    %p315 = por %p313, %p314
    %p317 = scmp.ne.s32.totalorder %s302, %s316
    %p318 = scmp.eq.s32.totalorder %s35, 0
    %p319 = por %p317, %p318
    %s321 = sadd.s32 %s320, 1
    %p324 = scmp.eq.s32.totalorder %s29, 1
    %p325 = scmp.ne.s32.totalorder %s320, %s322
    %p326 = scmp.eq.s32.totalorder %s29, 0
    %p327 = por %p325, %p326
    %p328 = scmp.ne.s32.totalorder %s320, %s322
    %p329 = scmp.eq.s32.totalorder %s34, 1
    %p330 = por %p328, %p329
    %p331 = scmp.ne.s32.totalorder %s322, %s323
    %p332 = scmp.eq.s32.totalorder %s34, 0
    %p333 = por %p331, %p332
    %p334 = scmp.ne.s32.totalorder %s322, %s323
    %p335 = scmp.eq.s32.totalorder %s35, 1
    %p336 = por %p334, %p335
    %p338 = scmp.ne.s32.totalorder %s323, %s337
    %p339 = scmp.eq.s32.totalorder %s35, 0
    %p340 = por %p338, %p339
    %s342 = sadd.s32 %s341, 1
    %p345 = scmp.eq.s32.totalorder %s29, 1
    %p346 = scmp.ne.s32.totalorder %s341, %s343
    %p347 = scmp.eq.s32.totalorder %s29, 0
    %p348 = por %p346, %p347
    %p349 = scmp.ne.s32.totalorder %s341, %s343
    %p350 = scmp.eq.s32.totalorder %s34, 1
    %p351 = por %p349, %p350
    %p352 = scmp.ne.s32.totalorder %s343, %s344
    %p353 = scmp.eq.s32.totalorder %s34, 0
    %p354 = por %p352, %p353
    %p355 = scmp.ne.s32.totalorder %s343, %s344
    %p356 = scmp.eq.s32.totalorder %s35, 1
    %p357 = por %p355, %p356
    %p359 = scmp.ne.s32.totalorder %s344, %s358
    %p360 = scmp.eq.s32.totalorder %s35, 0
    %p361 = por %p359, %p360
    %s363 = sadd.s32 %s362, 1
    %p366 = scmp.eq.s32.totalorder %s29, 1
    %p367 = scmp.ne.s32.totalorder %s362, %s364
    %p368 = scmp.eq.s32.totalorder %s29, 0
    %p369 = por %p367, %p368
    %p370 = scmp.ne.s32.totalorder %s362, %s364
    %p371 = scmp.eq.s32.totalorder %s34, 1
    %p372 = por %p370, %p371
    %p373 = scmp.ne.s32.totalorder %s364, %s365
    %p374 = scmp.eq.s32.totalorder %s34, 0
    %p375 = por %p373, %p374
    %p376 = scmp.ne.s32.totalorder %s364, %s365
    %p377 = scmp.eq.s32.totalorder %s35, 1
    %p378 = por %p376, %p377
    %p380 = scmp.ne.s32.totalorder %s365, %s379
    %p381 = scmp.eq.s32.totalorder %s35, 0
    %p382 = por %p380, %p381
    %s384 = sadd.s32 %s383, 1
    %p387 = scmp.eq.s32.totalorder %s29, 1
    %p388 = scmp.ne.s32.totalorder %s383, %s385
    %p389 = scmp.eq.s32.totalorder %s29, 0
    %p390 = por %p388, %p389
    %p391 = scmp.ne.s32.totalorder %s383, %s385
    %p392 = scmp.eq.s32.totalorder %s34, 1
    %p393 = por %p391, %p392
    %p394 = scmp.ne.s32.totalorder %s385, %s386
    %p395 = scmp.eq.s32.totalorder %s34, 0
    %p396 = por %p394, %p395
    %p397 = scmp.ne.s32.totalorder %s385, %s386
    %p398 = scmp.eq.s32.totalorder %s35, 1
    %p399 = por %p397, %p398
    %p401 = scmp.ne.s32.totalorder %s386, %s400
    %p402 = scmp.eq.s32.totalorder %s35, 0
    %p403 = por %p401, %p402
    %s405 = sadd.s32 %s404, 1
    %p408 = scmp.eq.s32.totalorder %s29, 1
    %p409 = scmp.ne.s32.totalorder %s404, %s406
    %p410 = scmp.eq.s32.totalorder %s29, 0
    %p411 = por %p409, %p410
    %p412 = scmp.ne.s32.totalorder %s404, %s406
    %p413 = scmp.eq.s32.totalorder %s34, 1
    %p414 = por %p412, %p413
    %p415 = scmp.ne.s32.totalorder %s406, %s407
    %p416 = scmp.eq.s32.totalorder %s34, 0
    %p417 = por %p415, %p416
    %p418 = scmp.ne.s32.totalorder %s406, %s407
    %p419 = scmp.eq.s32.totalorder %s35, 1
    %p420 = por %p418, %p419
    %p422 = scmp.ne.s32.totalorder %s407, %s421
    %p423 = scmp.eq.s32.totalorder %s35, 0
    %p424 = por %p422, %p423
    %s426 = sadd.s32 %s425, 1
    %p429 = scmp.eq.s32.totalorder %s29, 1
    %p430 = scmp.ne.s32.totalorder %s425, %s427
    %p431 = scmp.eq.s32.totalorder %s29, 0
    %p432 = por %p430, %p431
    %p433 = scmp.ne.s32.totalorder %s425, %s427
    %p434 = scmp.eq.s32.totalorder %s34, 1
    %p435 = por %p433, %p434
    %p436 = scmp.ne.s32.totalorder %s427, %s428
    %p437 = scmp.eq.s32.totalorder %s34, 0
    %p438 = por %p436, %p437
    %p439 = scmp.ne.s32.totalorder %s427, %s428
    %p440 = scmp.eq.s32.totalorder %s35, 1
    %p441 = por %p439, %p440
    %p443 = scmp.ne.s32.totalorder %s428, %s442
    %p444 = scmp.eq.s32.totalorder %s35, 0
    %p445 = por %p443, %p444
    %s447 = sadd.s32 %s446, 1
    %p450 = scmp.eq.s32.totalorder %s29, 1
    %p451 = scmp.ne.s32.totalorder %s446, %s448
    %p452 = scmp.eq.s32.totalorder %s29, 0
    %p453 = por %p451, %p452
    %p454 = scmp.ne.s32.totalorder %s446, %s448
    %p455 = scmp.eq.s32.totalorder %s34, 1
    %p456 = por %p454, %p455
    %p457 = scmp.ne.s32.totalorder %s448, %s449
    %p458 = scmp.eq.s32.totalorder %s34, 0
    %p459 = por %p457, %p458
    %p460 = scmp.ne.s32.totalorder %s448, %s449
    %p461 = scmp.eq.s32.totalorder %s35, 1
    %p462 = por %p460, %p461
    %p464 = scmp.ne.s32.totalorder %s449, %s463
    %p465 = scmp.eq.s32.totalorder %s35, 0
    %p466 = por %p464, %p465
    %s468 = sadd.s32 %s467, 1
    %p471 = scmp.eq.s32.totalorder %s29, 1
    %p472 = scmp.ne.s32.totalorder %s467, %s469
    %p473 = scmp.eq.s32.totalorder %s29, 0
    %p474 = por %p472, %p473
    %p475 = scmp.ne.s32.totalorder %s467, %s469
    %p476 = scmp.eq.s32.totalorder %s34, 1
    %p477 = por %p475, %p476
    %p478 = scmp.ne.s32.totalorder %s469, %s470
    %p479 = scmp.eq.s32.totalorder %s34, 0
    %p480 = por %p478, %p479
    %p481 = scmp.ne.s32.totalorder %s469, %s470
    %p482 = scmp.eq.s32.totalorder %s35, 1
    %p483 = por %p481, %p482
    %p485 = scmp.ne.s32.totalorder %s470, %s484
    %p486 = scmp.eq.s32.totalorder %s35, 0
    %p487 = por %p485, %p486
    %s489 = sadd.s32 %s488, 1
    %p492 = scmp.eq.s32.totalorder %s29, 1
    %p493 = scmp.ne.s32.totalorder %s488, %s490
    %p494 = scmp.eq.s32.totalorder %s29, 0
    %p495 = por %p493, %p494
    %p496 = scmp.ne.s32.totalorder %s488, %s490
    %p497 = scmp.eq.s32.totalorder %s34, 1
    %p498 = por %p496, %p497
    %p499 = scmp.ne.s32.totalorder %s490, %s491
    %p500 = scmp.eq.s32.totalorder %s34, 0
    %p501 = por %p499, %p500
    %p502 = scmp.ne.s32.totalorder %s490, %s491
    %p503 = scmp.eq.s32.totalorder %s35, 1
    %p504 = por %p502, %p503
    %p506 = scmp.ne.s32.totalorder %s491, %s505
    %p507 = scmp.eq.s32.totalorder %s35, 0
    %p508 = por %p506, %p507
    %s510 = sadd.s32 %s509, 1
    %p513 = scmp.eq.s32.totalorder %s29, 1
    %p514 = scmp.ne.s32.totalorder %s509, %s511
    %p515 = scmp.eq.s32.totalorder %s29, 0
    %p516 = por %p514, %p515
    %p517 = scmp.ne.s32.totalorder %s509, %s511
    %p518 = scmp.eq.s32.totalorder %s34, 1
    %p519 = por %p517, %p518
    %p520 = scmp.ne.s32.totalorder %s511, %s512
    %p521 = scmp.eq.s32.totalorder %s34, 0
    %p522 = por %p520, %p521
    %p523 = scmp.ne.s32.totalorder %s511, %s512
    %p524 = scmp.eq.s32.totalorder %s35, 1
    %p525 = por %p523, %p524
    %p527 = scmp.ne.s32.totalorder %s512, %s526
    %p528 = scmp.eq.s32.totalorder %s35, 0
    %p529 = por %p527, %p528
    %s530 = ssub.s32 %s29, %s36
    %p531 = scmp.eq.s32.totalorder %s530, 0
    %s533 = sadd.s32 %s532, 1
    %s534 = scalar_select %p531, %s532, %s533
    %p537 = pneg %p531
    %p538 = scmp.eq.s32.totalorder %s29, 1
    %p539 = por %p537, %p538
    %p540 = scmp.ne.s32.totalorder %s532, %s535
    %p541 = scmp.eq.s32.totalorder %s29, 0
    %p542 = por %p540, %p541
    %p543 = scmp.ne.s32.totalorder %s532, %s535
    %p544 = scmp.eq.s32.totalorder %s34, 1
    %p545 = por %p543, %p544
    %p546 = scmp.ne.s32.totalorder %s535, %s536
    %p547 = scmp.eq.s32.totalorder %s34, 0
    %p548 = por %p546, %p547
    %p549 = scmp.ne.s32.totalorder %s535, %s536
    %p550 = scmp.eq.s32.totalorder %s35, 1
    %p551 = por %p549, %p550
    %p553 = scmp.ne.s32.totalorder %s536, %s552
    %p554 = scmp.eq.s32.totalorder %s35, 0
    %p555 = por %p553, %p554
    %p556 = scmp.le.s32.totalorder 1, %s29
    %p557 = scmp.lt.s32.totalorder %s29, 3
    %p558 = pnand %p556, %p557
    %p559 = pneg %p558
    // Predicated region
    $region9: #{covid_vit_forward.1} parent=5 // pred_check
      _
    $region10: #{covid_vit_forward.1} parent=5 // pred_check_branch
      %561 = sbr.rel (%p558) target = $region12
    $region11: #{covid_vit_forward.1} parent=5 // pred_region
      %s562 = ssub.s32 %s29, 1
      // Predicated region
      $region13: #{covid_vit_forward.1} parent=11 // pred_check
        %p563 = pneg %p102
      $region14: #{covid_vit_forward.1} parent=11 // pred_check_branch
        %565 = sbr.rel (%p563) target = $region16
      $region15: #{covid_vit_forward.1} parent=11 // pred_region
        _
      $region16: #{covid_vit_forward.1} parent=11 // pred_fallthru
        _
      // Predicated region
      $region17: #{covid_vit_forward.1} parent=11 // pred_check
        %p566 = pneg %p123
      $region18: #{covid_vit_forward.1} parent=11 // pred_check_branch
        %568 = sbr.rel (%p566) target = $region20
      $region19: #{covid_vit_forward.1} parent=11 // pred_region
        _
      $region20: #{covid_vit_forward.1} parent=11 // pred_fallthru
        _
      // Predicated region
      $region21: #{covid_vit_forward.1} parent=11 // pred_check
        %p569 = pneg %p144
      $region22: #{covid_vit_forward.1} parent=11 // pred_check_branch
        %571 = sbr.rel (%p569) target = $region24
      $region23: #{covid_vit_forward.1} parent=11 // pred_region
        _
      $region24: #{covid_vit_forward.1} parent=11 // pred_fallthru
        _
      // Predicated region
      $region25: #{covid_vit_forward.1} parent=11 // pred_check
        %p572 = pneg %p165
      $region26: #{covid_vit_forward.1} parent=11 // pred_check_branch
        %574 = sbr.rel (%p572) target = $region28
      $region27: #{covid_vit_forward.1} parent=11 // pred_region
        _
      $region28: #{covid_vit_forward.1} parent=11 // pred_fallthru
        _
      // Predicated region
      $region29: #{covid_vit_forward.1} parent=11 // pred_check
        %p575 = pneg %p186
      $region30: #{covid_vit_forward.1} parent=11 // pred_check_branch
        %577 = sbr.rel (%p575) target = $region32
      $region31: #{covid_vit_forward.1} parent=11 // pred_region
        _
      $region32: #{covid_vit_forward.1} parent=11 // pred_fallthru
        _
      // Predicated region
      $region33: #{covid_vit_forward.1} parent=11 // pred_check
        %p578 = pneg %p207
      $region34: #{covid_vit_forward.1} parent=11 // pred_check_branch
        %580 = sbr.rel (%p578) target = $region36
      $region35: #{covid_vit_forward.1} parent=11 // pred_region
        _
      $region36: #{covid_vit_forward.1} parent=11 // pred_fallthru
        _
      // Predicated region
      $region37: #{covid_vit_forward.1} parent=11 // pred_check
        %p581 = pneg %p228
      $region38: #{covid_vit_forward.1} parent=11 // pred_check_branch
        %583 = sbr.rel (%p581) target = $region40
      $region39: #{covid_vit_forward.1} parent=11 // pred_region
        _
      $region40: #{covid_vit_forward.1} parent=11 // pred_fallthru
        _
      // Predicated region
      $region41: #{covid_vit_forward.1} parent=11 // pred_check
        %p584 = pneg %p249
      $region42: #{covid_vit_forward.1} parent=11 // pred_check_branch
        %586 = sbr.rel (%p584) target = $region44
      $region43: #{covid_vit_forward.1} parent=11 // pred_region
        _
      $region44: #{covid_vit_forward.1} parent=11 // pred_fallthru
        _
      // Predicated region
      $region45: #{covid_vit_forward.1} parent=11 // pred_check
        %p587 = pneg %p270
      $region46: #{covid_vit_forward.1} parent=11 // pred_check_branch
        %589 = sbr.rel (%p587) target = $region48
      $region47: #{covid_vit_forward.1} parent=11 // pred_region
        _
      $region48: #{covid_vit_forward.1} parent=11 // pred_fallthru
        _
      // Predicated region
      $region49: #{covid_vit_forward.1} parent=11 // pred_check
        %p590 = pneg %p291
      $region50: #{covid_vit_forward.1} parent=11 // pred_check_branch
        %592 = sbr.rel (%p590) target = $region52
      $region51: #{covid_vit_forward.1} parent=11 // pred_region
        _
      $region52: #{covid_vit_forward.1} parent=11 // pred_fallthru
        _
      // Predicated region
      $region53: #{covid_vit_forward.1} parent=11 // pred_check
        %p593 = pneg %p312
      $region54: #{covid_vit_forward.1} parent=11 // pred_check_branch
        %595 = sbr.rel (%p593) target = $region56
      $region55: #{covid_vit_forward.1} parent=11 // pred_region
        _
      $region56: #{covid_vit_forward.1} parent=11 // pred_fallthru
        _
      // Predicated region
      $region57: #{covid_vit_forward.1} parent=11 // pred_check
        %p596 = pneg %p333
      $region58: #{covid_vit_forward.1} parent=11 // pred_check_branch
        %598 = sbr.rel (%p596) target = $region60
      $region59: #{covid_vit_forward.1} parent=11 // pred_region
        _
      $region60: #{covid_vit_forward.1} parent=11 // pred_fallthru
        _
      // Predicated region
      $region61: #{covid_vit_forward.1} parent=11 // pred_check
        %p599 = pneg %p354
      $region62: #{covid_vit_forward.1} parent=11 // pred_check_branch
        %601 = sbr.rel (%p599) target = $region64
      $region63: #{covid_vit_forward.1} parent=11 // pred_region
        _
      $region64: #{covid_vit_forward.1} parent=11 // pred_fallthru
        _
      // Predicated region
      $region65: #{covid_vit_forward.1} parent=11 // pred_check
        %p602 = pneg %p375
      $region66: #{covid_vit_forward.1} parent=11 // pred_check_branch
        %604 = sbr.rel (%p602) target = $region68
      $region67: #{covid_vit_forward.1} parent=11 // pred_region
        _
      $region68: #{covid_vit_forward.1} parent=11 // pred_fallthru
        _
      // Predicated region
      $region69: #{covid_vit_forward.1} parent=11 // pred_check
        %p605 = pneg %p396
      $region70: #{covid_vit_forward.1} parent=11 // pred_check_branch
        %607 = sbr.rel (%p605) target = $region72
      $region71: #{covid_vit_forward.1} parent=11 // pred_region
        _
      $region72: #{covid_vit_forward.1} parent=11 // pred_fallthru
        _
      // Predicated region
      $region73: #{covid_vit_forward.1} parent=11 // pred_check
        %p608 = pneg %p417
      $region74: #{covid_vit_forward.1} parent=11 // pred_check_branch
        %610 = sbr.rel (%p608) target = $region76
      $region75: #{covid_vit_forward.1} parent=11 // pred_region
        _
      $region76: #{covid_vit_forward.1} parent=11 // pred_fallthru
        _
      // Predicated region
      $region77: #{covid_vit_forward.1} parent=11 // pred_check
        %p611 = pneg %p438
      $region78: #{covid_vit_forward.1} parent=11 // pred_check_branch
        %613 = sbr.rel (%p611) target = $region80
      $region79: #{covid_vit_forward.1} parent=11 // pred_region
        _
      $region80: #{covid_vit_forward.1} parent=11 // pred_fallthru
        _
      // Predicated region
      $region81: #{covid_vit_forward.1} parent=11 // pred_check
        %p614 = pneg %p459
      $region82: #{covid_vit_forward.1} parent=11 // pred_check_branch
        %616 = sbr.rel (%p614) target = $region84
      $region83: #{covid_vit_forward.1} parent=11 // pred_region
        _
      $region84: #{covid_vit_forward.1} parent=11 // pred_fallthru
        _
      // Predicated region
      $region85: #{covid_vit_forward.1} parent=11 // pred_check
        %p617 = pneg %p480
      $region86: #{covid_vit_forward.1} parent=11 // pred_check_branch
        %619 = sbr.rel (%p617) target = $region88
      $region87: #{covid_vit_forward.1} parent=11 // pred_region
        _
      $region88: #{covid_vit_forward.1} parent=11 // pred_fallthru
        _
      // Predicated region
      $region89: #{covid_vit_forward.1} parent=11 // pred_check
        %p620 = pneg %p501
      $region90: #{covid_vit_forward.1} parent=11 // pred_check_branch
        %622 = sbr.rel (%p620) target = $region92
      $region91: #{covid_vit_forward.1} parent=11 // pred_region
        _
      $region92: #{covid_vit_forward.1} parent=11 // pred_fallthru
        _
      // Predicated region
      $region93: #{covid_vit_forward.1} parent=11 // pred_check
        %p623 = pneg %p522
      $region94: #{covid_vit_forward.1} parent=11 // pred_check_branch
        %625 = sbr.rel (%p623) target = $region96
      $region95: #{covid_vit_forward.1} parent=11 // pred_region
        _
      $region96: #{covid_vit_forward.1} parent=11 // pred_fallthru
        _
    $region12: #{covid_vit_forward.1} parent=5 // pred_fallthru
      _
    %p626 = scmp.lt.s32.totalorder %s29, 2
    // Predicated region
    $region97: #{covid_vit_forward.1} parent=5 // pred_check
      %p627 = pneg %p626
    $region98: #{covid_vit_forward.1} parent=5 // pred_check_branch
      %629 = sbr.rel (%p627) target = $region100
    $region99: #{covid_vit_forward.1} parent=5 // pred_region
      // Predicated region
      $region101: #{covid_vit_forward.1} parent=99 // pred_check
        %p630 = pneg %p49
      $region102: #{covid_vit_forward.1} parent=99 // pred_check_branch
        %632 = sbr.rel (%p630) target = $region104
      $region103: #{covid_vit_forward.1} parent=99 // pred_region
        %p633 = scmp.lt.s32.totalorder %s29, 1
        %s634 = scalar_select %p633, %s29, 1
        %s635 = smul.addr %s634, 6
        %s636 = smul.addr %s635, 8
        %s637 = scalar_lea.vmem %s0, %s636
      $region104: #{covid_vit_forward.1} parent=99 // pred_fallthru
        _
      // Predicated region
      $region105: #{covid_vit_forward.1} parent=99 // pred_check
        %p638 = pneg %p75
      $region106: #{covid_vit_forward.1} parent=99 // pred_check_branch
        %640 = sbr.rel (%p638) target = $region108
      $region107: #{covid_vit_forward.1} parent=99 // pred_region
        %p641 = scmp.lt.s32.totalorder %s29, 1
        %s642 = scalar_select %p641, %s29, 1
        %s643 = smul.addr %s642, 8
        %s644 = scalar_lea.vmem %s1, %s643
      $region108: #{covid_vit_forward.1} parent=99 // pred_fallthru
        _
    $region100: #{covid_vit_forward.1} parent=5 // pred_fallthru
      _
    %p645 = scmp.le.s32.totalorder 1, %s29
    %p646 = scmp.lt.s32.totalorder %s29, 3
    %p647 = pnand %p645, %p646
    %p648 = pneg %p647
    // Predicated region
    $region109: #{covid_vit_forward.1} parent=5 // pred_check
      _
    $region110: #{covid_vit_forward.1} parent=5 // pred_check_branch
      %650 = sbr.rel (%p647) target = $region112
    $region111: #{covid_vit_forward.1} parent=5 // pred_region
      %s651 = ssub.s32 %s29, 1
      %p652 = scmp.lt.s32.totalorder %s34, 1
      %s653 = scalar_select %p652, %s34, 1
      %s654 = smul.addr %s653, 6
      %s655 = smul.addr %s654, 8
      %s656 = scalar_lea.vmem %s0, %s655
      %p657 = pneg %p55
      %p658 = pneg %p52
      %p659 = scmp.lt.s32.totalorder %s34, 1
      %s660 = scalar_select %p659, %s34, 1
      %s661 = smul.addr %s660, 8
      %s662 = scalar_lea.vmem %s1, %s661
      %p663 = pneg %p81
      %p664 = pneg %p78
      %p665 = pneg %p102
      %p666 = pneg %p99
      %p667 = pneg %p123
      %p668 = pneg %p120
      %p669 = pneg %p144
      %p670 = pneg %p141
      %p671 = pneg %p165
      %p672 = pneg %p162
      %p673 = pneg %p186
      %p674 = pneg %p183
      %p675 = pneg %p207
      %p676 = pneg %p204
      %p677 = pneg %p228
      %p678 = pneg %p225
      %p679 = pneg %p249
      %p680 = pneg %p246
      %p681 = pneg %p270
      %p682 = pneg %p267
      %p683 = pneg %p291
      %p684 = pneg %p288
      %p685 = pneg %p312
      %p686 = pneg %p309
      %p687 = pneg %p333
      %p688 = pneg %p330
      %p689 = pneg %p354
      %p690 = pneg %p351
      %p691 = pneg %p375
      %p692 = pneg %p372
      %p693 = pneg %p396
      %p694 = pneg %p393
      %p695 = pneg %p417
      %p696 = pneg %p414
      %p697 = pneg %p438
      %p698 = pneg %p435
      %p699 = pneg %p459
      %p700 = pneg %p456
      %p701 = pneg %p480
      %p702 = pneg %p477
      %p703 = pneg %p501
      %p704 = pneg %p498
      %p705 = pneg %p522
      %p706 = pneg %p519
      %p707 = pneg %p548
      %p708 = pneg %p545
      %p709 = scmp.lt.s32.totalorder %s34, 1
      %s710 = scalar_select %p709, %s34, 1
      %s711 = smul.addr %s710, 8
      %s712 = scalar_lea.vmem %s23, %s711
      %p713 = scmp.lt.s32.totalorder %s34, 1
      %s714 = scalar_select %p713, %s34, 1
      %s715 = smul.addr %s714, 6
      %s716 = smul.addr %s715, 8
      %s717 = scalar_lea.vmem %s0, %s716
      %p718 = scmp.lt.s32.totalorder %s34, 1
      %s719 = scalar_select %p718, %s34, 1
      %s720 = smul.addr %s719, 8
      %s721 = scalar_lea.vmem %s1, %s720
      %p722 = scmp.lt.s32.totalorder %s34, 1
      %s723 = scalar_select %p722, %s34, 1
      %s724 = smul.addr %s723, 8
      %s725 = scalar_lea.vmem %s23, %s724
      %v726 = vld [vmem:[%s717] sm:$0xff]
      %v727 = vld [vmem:[%s717 + $0x8] sm:$0xff]
      %v728 = vld [vmem:[%s717 + $0x10] sm:$0xff]
      %v729 = vld [vmem:[%s717 + $0x18] sm:$0xff]
      %v730 = vld [vmem:[%s717 + $0x20] sm:$0xff]
      %v731 = vld [vmem:[%s717 + $0x28] sm:$0xff]
      %v732 = vld [vmem:[%s2] sm:$0xff]
      %v733 = vld [vmem:[%s2 + $0x8] sm:$0xff]
      %v734 = vld [vmem:[%s2 + $0x10] sm:$0xff]
      %v735 = vld [vmem:[%s2 + $0x18] sm:$0xff]
      %v736 = vld [vmem:[%s2 + $0x20] sm:$0xff]
      %v737 = vld [vmem:[%s2 + $0x28] sm:$0xff]
      %v738 = vld [vmem:[%s2 + $0x30] sm:$0xff]
      %v739 = vld [vmem:[%s2 + $0x38] sm:$0xff]
      %v740 = vld [vmem:[%s2 + $0x40] sm:$0xff]
      %v741 = vld [vmem:[%s2 + $0x48] sm:$0xff]
      %v742 = vld [vmem:[%s2 + $0x50] sm:$0xff]
      %v743 = vld [vmem:[%s2 + $0x58] sm:$0xff]
      %v744 = vld [vmem:[%s2 + $0x60] sm:$0xff]
      %v745 = vld [vmem:[%s2 + $0x68] sm:$0xff]
      %v746 = vld [vmem:[%s2 + $0x70] sm:$0xff]
      %v747 = vld [vmem:[%s2 + $0x78] sm:$0xff]
      %v748 = vld [vmem:[%s2 + $0x80] sm:$0xff]
      %v749 = vld [vmem:[%s2 + $0x88] sm:$0xff]
      %v750 = vld [vmem:[%s2 + $0x90] sm:$0xff]
      %v751 = vld [vmem:[%s2 + $0x98] sm:$0xff]
      %v752 = vld [vmem:[%s2 + $0xa0] sm:$0xff]
      %v753 = vld [vmem:[%s2 + $0xa8] sm:$0xff]
      %v754 = vld [vmem:[%s2 + $0xb0] sm:$0xff]
      %v755 = vld [vmem:[%s2 + $0xb8] sm:$0xff]
      %v756 = vld [vmem:[%s2 + $0xc0] sm:$0xff]
      %v757 = vld [vmem:[%s2 + $0xc8] sm:$0xff]
      %v758 = vld [vmem:[%s2 + $0xd0] sm:$0xff]
      %v759 = vld [vmem:[%s2 + $0xd8] sm:$0xff]
      %v760 = vld [vmem:[%s2 + $0xe0] sm:$0xff]
      %v761 = vld [vmem:[%s2 + $0xe8] sm:$0xff]
      %v762 = vld [vmem:[%s2 + $0xf0] sm:$0xff]
      %v763 = vld [vmem:[%s2 + $0xf8] sm:$0xff]
      %v764 = vld [vmem:[%s2 + $0x100] sm:$0xff]
      %v765 = vld [vmem:[%s2 + $0x108] sm:$0xff]
      %v766 = vld [vmem:[%s2 + $0x110] sm:$0xff]
      %v767 = vld [vmem:[%s2 + $0x118] sm:$0xff]
      %v768 = vld [vmem:[%s2 + $0x120] sm:$0xff]
      %v769 = vld [vmem:[%s2 + $0x128] sm:$0xff]
      %v770 = vld [vmem:[%s2 + $0x130] sm:$0xff]
      %v771 = vld [vmem:[%s2 + $0x138] sm:$0xff]
      %v772 = vld [vmem:[%s2 + $0x140] sm:$0xff]
      %v773 = vld [vmem:[%s2 + $0x148] sm:$0xff]
      %v774 = vld [vmem:[%s2 + $0x150] sm:$0xff]
      %v775 = vld [vmem:[%s2 + $0x158] sm:$0xff]
      %v776 = vld [vmem:[%s2 + $0x160] sm:$0xff]
      %v777 = vld [vmem:[%s2 + $0x168] sm:$0xff]
      %v778 = vld [vmem:[%s2 + $0x170] sm:$0xff]
      %v779 = vld [vmem:[%s2 + $0x178] sm:$0xff]
      %v780 = vld [vmem:[%s2 + $0x180] sm:$0xff]
      %v781 = vld [vmem:[%s2 + $0x188] sm:$0xff]
      %v782 = vld [vmem:[%s2 + $0x190] sm:$0xff]
      %v783 = vld [vmem:[%s2 + $0x198] sm:$0xff]
      %v784 = vld [vmem:[%s2 + $0x1a0] sm:$0xff]
      %v785 = vld [vmem:[%s2 + $0x1a8] sm:$0xff]
      %v786 = vld [vmem:[%s2 + $0x1b0] sm:$0xff]
      %v787 = vld [vmem:[%s2 + $0x1b8] sm:$0xff]
      %v788 = vld [vmem:[%s2 + $0x1c0] sm:$0xff]
      %v789 = vld [vmem:[%s2 + $0x1c8] sm:$0xff]
      %v790 = vld [vmem:[%s2 + $0x1d0] sm:$0xff]
      %v791 = vld [vmem:[%s2 + $0x1d8] sm:$0xff]
      %v792 = vld [vmem:[%s2 + $0x1e0] sm:$0xff]
      %v793 = vld [vmem:[%s2 + $0x1e8] sm:$0xff]
      %v794 = vld [vmem:[%s2 + $0x1f0] sm:$0xff]
      %v795 = vld [vmem:[%s2 + $0x1f8] sm:$0xff]
      %v796 = vld [vmem:[%s2 + $0x200] sm:$0xff]
      %v797 = vld [vmem:[%s2 + $0x208] sm:$0xff]
      %v798 = vld [vmem:[%s2 + $0x210] sm:$0xff]
      %v799 = vld [vmem:[%s2 + $0x218] sm:$0xff]
      %v800 = vld [vmem:[%s2 + $0x220] sm:$0xff]
      %v801 = vld [vmem:[%s2 + $0x228] sm:$0xff]
      %v802 = vld [vmem:[%s2 + $0x230] sm:$0xff]
      %v803 = vld [vmem:[%s2 + $0x238] sm:$0xff]
      %v804 = vld [vmem:[%s2 + $0x240] sm:$0xff]
      %v805 = vld [vmem:[%s2 + $0x248] sm:$0xff]
      %v806 = vld [vmem:[%s2 + $0x250] sm:$0xff]
      %v807 = vld [vmem:[%s2 + $0x258] sm:$0xff]
      %v808 = vld [vmem:[%s2 + $0x260] sm:$0xff]
      %v809 = vld [vmem:[%s2 + $0x268] sm:$0xff]
      %v810 = vld [vmem:[%s2 + $0x270] sm:$0xff]
      %v811 = vld [vmem:[%s2 + $0x278] sm:$0xff]
      %v812 = vld [vmem:[%s2 + $0x280] sm:$0xff]
      %v813 = vld [vmem:[%s2 + $0x288] sm:$0xff]
      %v814 = vld [vmem:[%s2 + $0x290] sm:$0xff]
      %v815 = vld [vmem:[%s2 + $0x298] sm:$0xff]
      %v816 = vld [vmem:[%s2 + $0x2a0] sm:$0xff]
      %v817 = vld [vmem:[%s2 + $0x2a8] sm:$0xff]
      %v818 = vld [vmem:[%s2 + $0x2b0] sm:$0xff]
      %v819 = vld [vmem:[%s2 + $0x2b8] sm:$0xff]
      %v820 = vld [vmem:[%s2 + $0x2c0] sm:$0xff]
      %v821 = vld [vmem:[%s2 + $0x2c8] sm:$0xff]
      %v822 = vld [vmem:[%s2 + $0x2d0] sm:$0xff]
      %v823 = vld [vmem:[%s2 + $0x2d8] sm:$0xff]
      %v824 = vld [vmem:[%s2 + $0x2e0] sm:$0xff]
      %v825 = vld [vmem:[%s2 + $0x2e8] sm:$0xff]
      %v826 = vld [vmem:[%s2 + $0x2f0] sm:$0xff]
      %v827 = vld [vmem:[%s2 + $0x2f8] sm:$0xff]
      %v828 = vld [vmem:[%s721] sm:$0xff]
      %829 = vmatprep.subr.mxu0 0.0
      %830 = vmatpush1.msra.mxu0 %v747
      %831 = vmatprep.subr.mxu0 0.0
      %832 = vmatpush1.msra.mxu0 %v746
      %833 = vmatprep.subr.mxu0 0.0
      %834 = vmatpush1.msra.mxu0 %v745
      %835 = vmatprep.subr.mxu0 0.0
      %836 = vmatpush1.msra.mxu0 %v744
      %837 = vmatprep.subr.mxu0 0.0
      %838 = vmatpush1.msra.mxu0 %v743
      %839 = vmatprep.subr.mxu0 0.0
      %840 = vmatpush1.msra.mxu0 %v742
      %841 = vmatprep.subr.mxu0 0.0
      %842 = vmatpush1.msra.mxu0 %v741
      %843 = vmatprep.subr.mxu0 0.0
      %844 = vmatpush1.msra.mxu0 %v740
      %845 = vmatprep.subr.mxu0 0.0
      %846 = vmatpush1.msra.mxu0 %v739
      %847 = vmatprep.subr.mxu0 0.0
      %848 = vmatpush1.msra.mxu0 %v738
      %849 = vmatprep.subr.mxu0 0.0
      %850 = vmatpush1.msra.mxu0 %v737
      %851 = vmatprep.subr.mxu0 0.0
      %852 = vmatpush1.msra.mxu0 %v736
      %853 = vmatprep.subr.mxu0 0.0
      %854 = vmatpush1.msra.mxu0 %v735
      %855 = vmatprep.subr.mxu0 0.0
      %856 = vmatpush1.msra.mxu0 %v734
      %857 = vmatprep.subr.mxu0 0.0
      %858 = vmatpush1.msra.mxu0 %v733
      %859 = vmatprep.subr.mxu0 0.0
      %860 = vmatpush1.msra.mxu0 %v732
      %861 = vmatprep.subr.mxu0 0.0
      %862 = vmatpush2.msra.mxu0 %v763
      %863 = vmatprep.subr.mxu0 0.0
      %864 = vmatpush2.msra.mxu0 %v762
      %865 = vmatprep.subr.mxu0 0.0
      %866 = vmatpush2.msra.mxu0 %v761
      %867 = vmatprep.subr.mxu0 0.0
      %868 = vmatpush2.msra.mxu0 %v760
      %869 = vmatprep.subr.mxu0 0.0
      %870 = vmatpush2.msra.mxu0 %v759
      %871 = vmatprep.subr.mxu0 0.0
      %872 = vmatpush2.msra.mxu0 %v758
      %873 = vmatprep.subr.mxu0 0.0
      %874 = vmatpush2.msra.mxu0 %v757
      %875 = vmatprep.subr.mxu0 0.0
      %876 = vmatpush2.msra.mxu0 %v756
      %877 = vmatprep.subr.mxu0 0.0
      %878 = vmatpush2.msra.mxu0 %v755
      %879 = vmatprep.subr.mxu0 0.0
      %880 = vmatpush2.msra.mxu0 %v754
      %881 = vmatprep.subr.mxu0 0.0
      %882 = vmatpush2.msra.mxu0 %v753
      %883 = vmatprep.subr.mxu0 0.0
      %884 = vmatpush2.msra.mxu0 %v752
      %885 = vmatprep.subr.mxu0 0.0
      %886 = vmatpush2.msra.mxu0 %v751
      %887 = vmatprep.subr.mxu0 0.0
      %888 = vmatpush2.msra.mxu0 %v750
      %889 = vmatprep.subr.mxu0 0.0
      %890 = vmatpush2.msra.mxu0 %v749
      %891 = vmatprep.subr.mxu0 0.0
      %892 = vmatpush2.msra.mxu0 %v748
      %893 = vmatprep.mubr.f32.mxu0 %v727
      %894 = vmatmul.mubr.f32.gmra.mxu0 %v726
      %v895 = vpop.f32.mrf.mxu0
      %v896 = vadd.f32 %v828, %v895
      %v897 = vpop.f32.mrf.mxu0
      %898 = vdwg.mxu0
      %899 = vmatprep.subr.mxu0 0.0
      %900 = vmatpush1.msra.mxu0 %v779
      %901 = vmatprep.subr.mxu0 0.0
      %902 = vmatpush1.msra.mxu0 %v778
      %903 = vmatprep.subr.mxu0 0.0
      %904 = vmatpush1.msra.mxu0 %v777
      %905 = vmatprep.subr.mxu0 0.0
      %906 = vmatpush1.msra.mxu0 %v776
      %907 = vmatprep.subr.mxu0 0.0
      %908 = vmatpush1.msra.mxu0 %v775
      %909 = vmatprep.subr.mxu0 0.0
      %910 = vmatpush1.msra.mxu0 %v774
      %911 = vmatprep.subr.mxu0 0.0
      %912 = vmatpush1.msra.mxu0 %v773
      %913 = vmatprep.subr.mxu0 0.0
      %914 = vmatpush1.msra.mxu0 %v772
      %915 = vmatprep.subr.mxu0 0.0
      %916 = vmatpush1.msra.mxu0 %v771
      %917 = vmatprep.subr.mxu0 0.0
      %918 = vmatpush1.msra.mxu0 %v770
      %919 = vmatprep.subr.mxu0 0.0
      %920 = vmatpush1.msra.mxu0 %v769
      %921 = vmatprep.subr.mxu0 0.0
      %922 = vmatpush1.msra.mxu0 %v768
      %923 = vmatprep.subr.mxu0 0.0
      %924 = vmatpush1.msra.mxu0 %v767
      %925 = vmatprep.subr.mxu0 0.0
      %926 = vmatpush1.msra.mxu0 %v766
      %927 = vmatprep.subr.mxu0 0.0
      %928 = vmatpush1.msra.mxu0 %v765
      %929 = vmatprep.subr.mxu0 0.0
      %930 = vmatpush1.msra.mxu0 %v764
      %931 = vmatprep.subr.mxu0 0.0
      %932 = vmatpush2.msra.mxu0 %v795
      %933 = vmatprep.subr.mxu0 0.0
      %934 = vmatpush2.msra.mxu0 %v794
      %935 = vmatprep.subr.mxu0 0.0
      %936 = vmatpush2.msra.mxu0 %v793
      %937 = vmatprep.subr.mxu0 0.0
      %938 = vmatpush2.msra.mxu0 %v792
      %939 = vmatprep.subr.mxu0 0.0
      %940 = vmatpush2.msra.mxu0 %v791
      %941 = vmatprep.subr.mxu0 0.0
      %942 = vmatpush2.msra.mxu0 %v790
      %943 = vmatprep.subr.mxu0 0.0
      %944 = vmatpush2.msra.mxu0 %v789
      %945 = vmatprep.subr.mxu0 0.0
      %946 = vmatpush2.msra.mxu0 %v788
      %947 = vmatprep.subr.mxu0 0.0
      %948 = vmatpush2.msra.mxu0 %v787
      %949 = vmatprep.subr.mxu0 0.0
      %950 = vmatpush2.msra.mxu0 %v786
      %951 = vmatprep.subr.mxu0 0.0
      %952 = vmatpush2.msra.mxu0 %v785
      %953 = vmatprep.subr.mxu0 0.0
      %954 = vmatpush2.msra.mxu0 %v784
      %955 = vmatprep.subr.mxu0 0.0
      %956 = vmatpush2.msra.mxu0 %v783
      %957 = vmatprep.subr.mxu0 0.0
      %958 = vmatpush2.msra.mxu0 %v782
      %959 = vmatprep.subr.mxu0 0.0
      %960 = vmatpush2.msra.mxu0 %v781
      %961 = vmatprep.subr.mxu0 0.0
      %962 = vmatpush2.msra.mxu0 %v780
      %963 = vmatprep.mubr.f32.mxu0 %v729
      %964 = vmatmul.mubr.f32.gmra.mxu0 %v728
      %v965 = vpop.f32.mrf.mxu0
      %v966 = vadd.f32 %v896, %v965
      %v967 = vpop.f32.mrf.mxu0
      %968 = vdwg.mxu0
      %969 = vmatprep.subr.mxu0 0.0
      %970 = vmatpush1.msra.mxu0 %v811
      %971 = vmatprep.subr.mxu0 0.0
      %972 = vmatpush1.msra.mxu0 %v810
      %973 = vmatprep.subr.mxu0 0.0
      %974 = vmatpush1.msra.mxu0 %v809
      %975 = vmatprep.subr.mxu0 0.0
      %976 = vmatpush1.msra.mxu0 %v808
      %977 = vmatprep.subr.mxu0 0.0
      %978 = vmatpush1.msra.mxu0 %v807
      %979 = vmatprep.subr.mxu0 0.0
      %980 = vmatpush1.msra.mxu0 %v806
      %981 = vmatprep.subr.mxu0 0.0
      %982 = vmatpush1.msra.mxu0 %v805
      %983 = vmatprep.subr.mxu0 0.0
      %984 = vmatpush1.msra.mxu0 %v804
      %985 = vmatprep.subr.mxu0 0.0
      %986 = vmatpush1.msra.mxu0 %v803
      %987 = vmatprep.subr.mxu0 0.0
      %988 = vmatpush1.msra.mxu0 %v802
      %989 = vmatprep.subr.mxu0 0.0
      %990 = vmatpush1.msra.mxu0 %v801
      %991 = vmatprep.subr.mxu0 0.0
      %992 = vmatpush1.msra.mxu0 %v800
      %993 = vmatprep.subr.mxu0 0.0
      %994 = vmatpush1.msra.mxu0 %v799
      %995 = vmatprep.subr.mxu0 0.0
      %996 = vmatpush1.msra.mxu0 %v798
      %997 = vmatprep.subr.mxu0 0.0
      %998 = vmatpush1.msra.mxu0 %v797
      %999 = vmatprep.subr.mxu0 0.0
      %1000 = vmatpush1.msra.mxu0 %v796
      %1001 = vmatprep.subr.mxu0 0.0
      %1002 = vmatpush2.msra.mxu0 %v827
      %1003 = vmatprep.subr.mxu0 0.0
      %1004 = vmatpush2.msra.mxu0 %v826
      %1005 = vmatprep.subr.mxu0 0.0
      %1006 = vmatpush2.msra.mxu0 %v825
      %1007 = vmatprep.subr.mxu0 0.0
      %1008 = vmatpush2.msra.mxu0 %v824
      %1009 = vmatprep.subr.mxu0 0.0
      %1010 = vmatpush2.msra.mxu0 %v823
      %1011 = vmatprep.subr.mxu0 0.0
      %1012 = vmatpush2.msra.mxu0 %v822
      %1013 = vmatprep.subr.mxu0 0.0
      %1014 = vmatpush2.msra.mxu0 %v821
      %1015 = vmatprep.subr.mxu0 0.0
      %1016 = vmatpush2.msra.mxu0 %v820
      %1017 = vmatprep.subr.mxu0 0.0
      %1018 = vmatpush2.msra.mxu0 %v819
      %1019 = vmatprep.subr.mxu0 0.0
      %1020 = vmatpush2.msra.mxu0 %v818
      %1021 = vmatprep.subr.mxu0 0.0
      %1022 = vmatpush2.msra.mxu0 %v817
      %1023 = vmatprep.subr.mxu0 0.0
      %1024 = vmatpush2.msra.mxu0 %v816
      %1025 = vmatprep.subr.mxu0 0.0
      %1026 = vmatpush2.msra.mxu0 %v815
      %1027 = vmatprep.subr.mxu0 0.0
      %1028 = vmatpush2.msra.mxu0 %v814
      %1029 = vmatprep.subr.mxu0 0.0
      %1030 = vmatpush2.msra.mxu0 %v813
      %1031 = vmatprep.subr.mxu0 0.0
      %1032 = vmatpush2.msra.mxu0 %v812
      %1033 = vmatprep.mubr.f32.mxu0 %v731
      %1034 = vmatmul.mubr.f32.gmra.mxu0 %v730
      %v1035 = vpop.f32.mrf.mxu0
      %v1036 = vadd.f32 %v966, %v1035
      %v1037 = vpop.f32.mrf.mxu0
      %1038 = vdwg.mxu0
      %v1039 = vlaneseq
      %v1040 = vand.u32 %v1039, 127
      %vm1041 = vcmp.lt.s32.totalorder %v1040, 5
      %v1042 = vld [vmem:[%s7] sm:$0x1]
      %v1043 = vld [vmem:[%s8] sm:$0x1]
      %vm1044 = vcmask 523264
      %v1045 = vsel %vm1044, %v1036, 0.0
      %1046 = vadd.xlane.f32.xlu0 %v1045
      %v1047 = vpop.xlane.xlu0 %1046
      %v1048 = vrcp.pop 64.0
      %v1049 = vmul.f32 %v1047, %v1048
      %v1050 = vsub.f32 %v1036, %v1049
      %v1051 = vmul.f32 %v1050, %v1050
      %v1052 = vsel %vm1044, %v1051, 0.0
      %1053 = vadd.xlane.f32.xlu0 %v1052
      %v1054 = vpop.xlane.xlu0 %1053
      %v1055 = vmul.f32 %v1054, %v1048
      %v1056 = vadd.f32 %v1055, 1e-06
      %v1057 = vrsqrt.pop %v1056
      %v1058 = vmul.f32 %v1050, %v1057
      %v1060 = vlaneseq
      %v1061 = vshrl.u32 %v1060, 7
      %v1062 = vsub.s32 0, %v1061
      %v1063 = vrot.slane %v1042, %v1062
      %v1065 = vmul.f32 %v1058, %v1063
      %v1067 = vlaneseq
      %v1068 = vshrl.u32 %v1067, 7
      %v1069 = vsub.s32 0, %v1068
      %v1070 = vrot.slane %v1043, %v1069
      %v1072 = vadd.f32 %v1065, %v1070
      %v1073 = vld [vmem:[%s9] sm:$0xff]
      %v1074 = vld [vmem:[%s9 + $0x8] sm:$0xff]
      %v1075 = vld [vmem:[%s9 + $0x10] sm:$0xff]
      %v1076 = vld [vmem:[%s9 + $0x18] sm:$0xff]
      %v1077 = vld [vmem:[%s9 + $0x20] sm:$0xff]
      %v1078 = vld [vmem:[%s9 + $0x28] sm:$0xff]
      %v1079 = vld [vmem:[%s9 + $0x30] sm:$0xff]
      %v1080 = vld [vmem:[%s9 + $0x38] sm:$0xff]
      %v1081 = vld [vmem:[%s10] sm:$0x1]
      %v1083 = vlaneseq
      %v1084 = vshrl.u32 %v1083, 7
      %v1085 = vsub.s32 0, %v1084
      %v1086 = vrot.slane %v1081, %v1085
      %v1089 = vsel %vm1044, %v1072, 0
      %1091 = vmatprep.subr.mxu0 0.0
      %1092 = vmatpush1.msra.mxu0 0.0
      %1093 = vmatprep.subr.mxu0 0.0
      %1094 = vmatpush1.msra.mxu0 0.0
      %1095 = vmatprep.subr.mxu0 0.0
      %1096 = vmatpush1.msra.mxu0 0.0
      %1097 = vmatprep.subr.mxu0 0.0
      %1098 = vmatpush1.msra.mxu0 0.0
      %1099 = vmatprep.subr.mxu0 0.0
      %1100 = vmatpush1.msra.mxu0 0.0
      %1101 = vmatprep.subr.mxu0 0.0
      %1102 = vmatpush1.msra.mxu0 0.0
      %1103 = vmatprep.subr.mxu0 0.0
      %1104 = vmatpush1.msra.mxu0 0.0
      %1105 = vmatprep.subr.mxu0 0.0
      %1106 = vmatpush1.msra.mxu0 0.0
      %1107 = vmatprep.subr.mxu0 0.0
      %1108 = vmatpush1.msra.mxu0 %v1080
      %1109 = vmatprep.subr.mxu0 0.0
      %1110 = vmatpush1.msra.mxu0 %v1079
      %1111 = vmatprep.subr.mxu0 0.0
      %1112 = vmatpush1.msra.mxu0 %v1078
      %1113 = vmatprep.subr.mxu0 0.0
      %1114 = vmatpush1.msra.mxu0 %v1077
      %1115 = vmatprep.subr.mxu0 0.0
      %1116 = vmatpush1.msra.mxu0 %v1076
      %1117 = vmatprep.subr.mxu0 0.0
      %1118 = vmatpush1.msra.mxu0 %v1075
      %1119 = vmatprep.subr.mxu0 0.0
      %1120 = vmatpush1.msra.mxu0 %v1074
      %1121 = vmatprep.subr.mxu0 0.0
      %1122 = vmatpush1.msra.mxu0 %v1073
      %1123 = vmatprep.subr.mxu0 0.0
      %1124 = vmatpush2.msra.mxu0 0.0
      %1125 = vmatprep.subr.mxu0 0.0
      %1126 = vmatpush2.msra.mxu0 0.0
      %1127 = vmatprep.subr.mxu0 0.0
      %1128 = vmatpush2.msra.mxu0 0.0
      %1129 = vmatprep.subr.mxu0 0.0
      %1130 = vmatpush2.msra.mxu0 0.0
      %1131 = vmatprep.subr.mxu0 0.0
      %1132 = vmatpush2.msra.mxu0 0.0
      %1133 = vmatprep.subr.mxu0 0.0
      %1134 = vmatpush2.msra.mxu0 0.0
      %1135 = vmatprep.subr.mxu0 0.0
      %1136 = vmatpush2.msra.mxu0 0.0
      %1137 = vmatprep.subr.mxu0 0.0
      %1138 = vmatpush2.msra.mxu0 0.0
      %1139 = vmatprep.subr.mxu0 0.0
      %1140 = vmatpush2.msra.mxu0 0.0
      %1141 = vmatprep.subr.mxu0 0.0
      %1142 = vmatpush2.msra.mxu0 0.0
      %1143 = vmatprep.subr.mxu0 0.0
      %1144 = vmatpush2.msra.mxu0 0.0
      %1145 = vmatprep.subr.mxu0 0.0
      %1146 = vmatpush2.msra.mxu0 0.0
      %1147 = vmatprep.subr.mxu0 0.0
      %1148 = vmatpush2.msra.mxu0 0.0
      %1149 = vmatprep.subr.mxu0 0.0
      %1150 = vmatpush2.msra.mxu0 0.0
      %1151 = vmatprep.subr.mxu0 0.0
      %1152 = vmatpush2.msra.mxu0 0.0
      %1153 = vmatprep.subr.mxu0 0.0
      %1154 = vmatpush2.msra.mxu0 0.0
      %1155 = vmatprep.mubr.f32.mxu0 0.0
      %1156 = vmatmul.mubr.f32.gmra.mxu0 %v1089
      %v1157 = vpop.f32.mrf.mxu0
      %v1158 = vadd.f32 %v1086, %v1157
      %v1159 = vpop.f32.mrf.mxu0
      %1160 = vdwg.mxu0
      %v1161 = vld [vmem:[%s11] sm:$0xff]
      %v1162 = vld [vmem:[%s11 + $0x8] sm:$0xff]
      %v1163 = vld [vmem:[%s11 + $0x10] sm:$0xff]
      %v1164 = vld [vmem:[%s11 + $0x18] sm:$0xff]
      %v1165 = vld [vmem:[%s11 + $0x20] sm:$0xff]
      %v1166 = vld [vmem:[%s11 + $0x28] sm:$0xff]
      %v1167 = vld [vmem:[%s11 + $0x30] sm:$0xff]
      %v1168 = vld [vmem:[%s11 + $0x38] sm:$0xff]
      %v1169 = vld [vmem:[%s12] sm:$0x1]
      %v1171 = vlaneseq
      %v1172 = vshrl.u32 %v1171, 7
      %v1173 = vsub.s32 0, %v1172
      %v1174 = vrot.slane %v1169, %v1173
      %1176 = vmatprep.subr.mxu0 0.0
      %1177 = vmatpush1.msra.mxu0 0.0
      %1178 = vmatprep.subr.mxu0 0.0
      %1179 = vmatpush1.msra.mxu0 0.0
      %1180 = vmatprep.subr.mxu0 0.0
      %1181 = vmatpush1.msra.mxu0 0.0
      %1182 = vmatprep.subr.mxu0 0.0
      %1183 = vmatpush1.msra.mxu0 0.0
      %1184 = vmatprep.subr.mxu0 0.0
      %1185 = vmatpush1.msra.mxu0 0.0
      %1186 = vmatprep.subr.mxu0 0.0
      %1187 = vmatpush1.msra.mxu0 0.0
      %1188 = vmatprep.subr.mxu0 0.0
      %1189 = vmatpush1.msra.mxu0 0.0
      %1190 = vmatprep.subr.mxu0 0.0
      %1191 = vmatpush1.msra.mxu0 0.0
      %1192 = vmatprep.subr.mxu0 0.0
      %1193 = vmatpush1.msra.mxu0 %v1168
      %1194 = vmatprep.subr.mxu0 0.0
      %1195 = vmatpush1.msra.mxu0 %v1167
      %1196 = vmatprep.subr.mxu0 0.0
      %1197 = vmatpush1.msra.mxu0 %v1166
      %1198 = vmatprep.subr.mxu0 0.0
      %1199 = vmatpush1.msra.mxu0 %v1165
      %1200 = vmatprep.subr.mxu0 0.0
      %1201 = vmatpush1.msra.mxu0 %v1164
      %1202 = vmatprep.subr.mxu0 0.0
      %1203 = vmatpush1.msra.mxu0 %v1163
      %1204 = vmatprep.subr.mxu0 0.0
      %1205 = vmatpush1.msra.mxu0 %v1162
      %1206 = vmatprep.subr.mxu0 0.0
      %1207 = vmatpush1.msra.mxu0 %v1161
      %1208 = vmatprep.subr.mxu0 0.0
      %1209 = vmatpush2.msra.mxu0 0.0
      %1210 = vmatprep.subr.mxu0 0.0
      %1211 = vmatpush2.msra.mxu0 0.0
      %1212 = vmatprep.subr.mxu0 0.0
      %1213 = vmatpush2.msra.mxu0 0.0
      %1214 = vmatprep.subr.mxu0 0.0
      %1215 = vmatpush2.msra.mxu0 0.0
      %1216 = vmatprep.subr.mxu0 0.0
      %1217 = vmatpush2.msra.mxu0 0.0
      %1218 = vmatprep.subr.mxu0 0.0
      %1219 = vmatpush2.msra.mxu0 0.0
      %1220 = vmatprep.subr.mxu0 0.0
      %1221 = vmatpush2.msra.mxu0 0.0
      %1222 = vmatprep.subr.mxu0 0.0
      %1223 = vmatpush2.msra.mxu0 0.0
      %1224 = vmatprep.subr.mxu0 0.0
      %1225 = vmatpush2.msra.mxu0 0.0
      %1226 = vmatprep.subr.mxu0 0.0
      %1227 = vmatpush2.msra.mxu0 0.0
      %1228 = vmatprep.subr.mxu0 0.0
      %1229 = vmatpush2.msra.mxu0 0.0
      %1230 = vmatprep.subr.mxu0 0.0
      %1231 = vmatpush2.msra.mxu0 0.0
      %1232 = vmatprep.subr.mxu0 0.0
      %1233 = vmatpush2.msra.mxu0 0.0
      %1234 = vmatprep.subr.mxu0 0.0
      %1235 = vmatpush2.msra.mxu0 0.0
      %1236 = vmatprep.subr.mxu0 0.0
      %1237 = vmatpush2.msra.mxu0 0.0
      %1238 = vmatprep.subr.mxu0 0.0
      %1239 = vmatpush2.msra.mxu0 0.0
      %1240 = vmatprep.mubr.f32.mxu0 0.0
      %1241 = vmatmul.mubr.f32.gmra.mxu0 %v1089
      %v1242 = vpop.f32.mrf.mxu0
      %v1243 = vadd.f32 %v1174, %v1242
      %v1244 = vpop.f32.mrf.mxu0
      %1245 = vdwg.mxu0
      %v1246 = vld [vmem:[%s13] sm:$0xff]
      %v1247 = vld [vmem:[%s13 + $0x8] sm:$0xff]
      %v1248 = vld [vmem:[%s13 + $0x10] sm:$0xff]
      %v1249 = vld [vmem:[%s13 + $0x18] sm:$0xff]
      %v1250 = vld [vmem:[%s13 + $0x20] sm:$0xff]
      %v1251 = vld [vmem:[%s13 + $0x28] sm:$0xff]
      %v1252 = vld [vmem:[%s13 + $0x30] sm:$0xff]
      %v1253 = vld [vmem:[%s13 + $0x38] sm:$0xff]
      %v1254 = vld [vmem:[%s14] sm:$0x1]
      %v1256 = vlaneseq
      %v1257 = vshrl.u32 %v1256, 7
      %v1258 = vsub.s32 0, %v1257
      %v1259 = vrot.slane %v1254, %v1258
      %1261 = vmatprep.subr.mxu0 0.0
      %1262 = vmatpush1.msra.mxu0 0.0
      %1263 = vmatprep.subr.mxu0 0.0
      %1264 = vmatpush1.msra.mxu0 0.0
      %1265 = vmatprep.subr.mxu0 0.0
      %1266 = vmatpush1.msra.mxu0 0.0
      %1267 = vmatprep.subr.mxu0 0.0
      %1268 = vmatpush1.msra.mxu0 0.0
      %1269 = vmatprep.subr.mxu0 0.0
      %1270 = vmatpush1.msra.mxu0 0.0
      %1271 = vmatprep.subr.mxu0 0.0
      %1272 = vmatpush1.msra.mxu0 0.0
      %1273 = vmatprep.subr.mxu0 0.0
      %1274 = vmatpush1.msra.mxu0 0.0
      %1275 = vmatprep.subr.mxu0 0.0
      %1276 = vmatpush1.msra.mxu0 0.0
      %1277 = vmatprep.subr.mxu0 0.0
      %1278 = vmatpush1.msra.mxu0 %v1253
      %1279 = vmatprep.subr.mxu0 0.0
      %1280 = vmatpush1.msra.mxu0 %v1252
      %1281 = vmatprep.subr.mxu0 0.0
      %1282 = vmatpush1.msra.mxu0 %v1251
      %1283 = vmatprep.subr.mxu0 0.0
      %1284 = vmatpush1.msra.mxu0 %v1250
      %1285 = vmatprep.subr.mxu0 0.0
      %1286 = vmatpush1.msra.mxu0 %v1249
      %1287 = vmatprep.subr.mxu0 0.0
      %1288 = vmatpush1.msra.mxu0 %v1248
      %1289 = vmatprep.subr.mxu0 0.0
      %1290 = vmatpush1.msra.mxu0 %v1247
      %1291 = vmatprep.subr.mxu0 0.0
      %1292 = vmatpush1.msra.mxu0 %v1246
      %1293 = vmatprep.subr.mxu0 0.0
      %1294 = vmatpush2.msra.mxu0 0.0
      %1295 = vmatprep.subr.mxu0 0.0
      %1296 = vmatpush2.msra.mxu0 0.0
      %1297 = vmatprep.subr.mxu0 0.0
      %1298 = vmatpush2.msra.mxu0 0.0
      %1299 = vmatprep.subr.mxu0 0.0
      %1300 = vmatpush2.msra.mxu0 0.0
      %1301 = vmatprep.subr.mxu0 0.0
      %1302 = vmatpush2.msra.mxu0 0.0
      %1303 = vmatprep.subr.mxu0 0.0
      %1304 = vmatpush2.msra.mxu0 0.0
      %1305 = vmatprep.subr.mxu0 0.0
      %1306 = vmatpush2.msra.mxu0 0.0
      %1307 = vmatprep.subr.mxu0 0.0
      %1308 = vmatpush2.msra.mxu0 0.0
      %1309 = vmatprep.subr.mxu0 0.0
      %1310 = vmatpush2.msra.mxu0 0.0
      %1311 = vmatprep.subr.mxu0 0.0
      %1312 = vmatpush2.msra.mxu0 0.0
      %1313 = vmatprep.subr.mxu0 0.0
      %1314 = vmatpush2.msra.mxu0 0.0
      %1315 = vmatprep.subr.mxu0 0.0
      %1316 = vmatpush2.msra.mxu0 0.0
      %1317 = vmatprep.subr.mxu0 0.0
      %1318 = vmatpush2.msra.mxu0 0.0
      %1319 = vmatprep.subr.mxu0 0.0
      %1320 = vmatpush2.msra.mxu0 0.0
      %1321 = vmatprep.subr.mxu0 0.0
      %1322 = vmatpush2.msra.mxu0 0.0
      %1323 = vmatprep.subr.mxu0 0.0
      %1324 = vmatpush2.msra.mxu0 0.0
      %1325 = vmatprep.mubr.f32.mxu0 0.0
      %1326 = vmatmul.mubr.f32.gmra.mxu0 %v1089
      %v1327 = vpop.f32.mrf.mxu0
      %v1328 = vadd.f32 %v1259, %v1327
      %v1329 = vpop.f32.mrf.mxu0
      %1330 = vdwg.mxu0
      %v1331 = vld [vmem:[%s15] sm:$0xff]
      %v1332 = vld [vmem:[%s15 + $0x8] sm:$0xff]
      %v1333 = vld [vmem:[%s15 + $0x10] sm:$0xff]
      %v1334 = vld [vmem:[%s15 + $0x18] sm:$0xff]
      %v1335 = vld [vmem:[%s15 + $0x20] sm:$0xff]
      %v1336 = vld [vmem:[%s15 + $0x28] sm:$0xff]
      %v1337 = vld [vmem:[%s15 + $0x30] sm:$0xff]
      %v1338 = vld [vmem:[%s15 + $0x38] sm:$0xff]
      %vm1339 = vcmask 130048
      %v1341 = vsel %vm1339, %v1158, 0
      %v1344 = vsel %vm1339, %v1243, 0
      %1346 = vmatprep.subr.mxu0 0.0
      %1347 = vmatpush1.xpose.msra.mxu0 0.0
      %1348 = vmatprep.subr.mxu0 0.0
      %1349 = vmatpush1.xpose.msra.mxu0 0.0
      %1350 = vmatprep.subr.mxu0 0.0
      %1351 = vmatpush1.xpose.msra.mxu0 0.0
      %1352 = vmatprep.subr.mxu0 0.0
      %1353 = vmatpush1.xpose.msra.mxu0 0.0
      %1354 = vmatprep.subr.mxu0 0.0
      %1355 = vmatpush1.xpose.msra.mxu0 0.0
      %1356 = vmatprep.subr.mxu0 0.0
      %1357 = vmatpush1.xpose.msra.mxu0 0.0
      %1358 = vmatprep.subr.mxu0 0.0
      %1359 = vmatpush1.xpose.msra.mxu0 0.0
      %1360 = vmatprep.subr.mxu0 0.0
      %1361 = vmatpush1.xpose.msra.mxu0 0.0
      %1362 = vmatprep.subr.mxu0 0.0
      %1363 = vmatpush1.xpose.msra.mxu0 0.0
      %1364 = vmatprep.subr.mxu0 0.0
      %1365 = vmatpush1.xpose.msra.mxu0 0.0
      %1366 = vmatprep.subr.mxu0 0.0
      %1367 = vmatpush1.xpose.msra.mxu0 0.0
      %1368 = vmatprep.subr.mxu0 0.0
      %1369 = vmatpush1.xpose.msra.mxu0 0.0
      %1370 = vmatprep.subr.mxu0 0.0
      %1371 = vmatpush1.xpose.msra.mxu0 0.0
      %1372 = vmatprep.subr.mxu0 0.0
      %1373 = vmatpush1.xpose.msra.mxu0 0.0
      %1374 = vmatprep.subr.mxu0 0.0
      %1375 = vmatpush1.xpose.msra.mxu0 0.0
      %1376 = vmatprep.subr.mxu0 0.0
      %1377 = vmatpush1.xpose.msra.mxu0 %v1344
      %1378 = vmatprep.subr.mxu0 0.0
      %1379 = vmatpush2.xpose.msra.mxu0 0.0
      %1380 = vmatprep.subr.mxu0 0.0
      %1381 = vmatpush2.xpose.msra.mxu0 0.0
      %1382 = vmatprep.subr.mxu0 0.0
      %1383 = vmatpush2.xpose.msra.mxu0 0.0
      %1384 = vmatprep.subr.mxu0 0.0
      %1385 = vmatpush2.xpose.msra.mxu0 0.0
      %1386 = vmatprep.subr.mxu0 0.0
      %1387 = vmatpush2.xpose.msra.mxu0 0.0
      %1388 = vmatprep.subr.mxu0 0.0
      %1389 = vmatpush2.xpose.msra.mxu0 0.0
      %1390 = vmatprep.subr.mxu0 0.0
      %1391 = vmatpush2.xpose.msra.mxu0 0.0
      %1392 = vmatprep.subr.mxu0 0.0
      %1393 = vmatpush2.xpose.msra.mxu0 0.0
      %1394 = vmatprep.subr.mxu0 0.0
      %1395 = vmatpush2.xpose.msra.mxu0 0.0
      %1396 = vmatprep.subr.mxu0 0.0
      %1397 = vmatpush2.xpose.msra.mxu0 0.0
      %1398 = vmatprep.subr.mxu0 0.0
      %1399 = vmatpush2.xpose.msra.mxu0 0.0
      %1400 = vmatprep.subr.mxu0 0.0
      %1401 = vmatpush2.xpose.msra.mxu0 0.0
      %1402 = vmatprep.subr.mxu0 0.0
      %1403 = vmatpush2.xpose.msra.mxu0 0.0
      %1404 = vmatprep.subr.mxu0 0.0
      %1405 = vmatpush2.xpose.msra.mxu0 0.0
      %1406 = vmatprep.subr.mxu0 0.0
      %1407 = vmatpush2.xpose.msra.mxu0 0.0
      %1408 = vmatprep.subr.mxu0 0.0
      %1409 = vmatpush2.xpose.msra.mxu0 0.0
      %1410 = vmatprep.mubr.f32.mxu0 0.0
      %1411 = vmatmul.mubr.f32.gmra.mxu0 %v1341
      %v1412 = vpop.f32.mrf.mxu0
      %v1413 = vadd.f32 0.0, %v1412
      %v1414 = vpop.f32.mrf.mxu0
      %1415 = vdwg.mxu0
      %v1416 = vmul.f32 %v1413, 0.25
      %v1417 = vsel %vm1041, %v1416, -1e+30
      %vm1418 = vcmask 64512
      %v1419 = vsel %vm1418, %v1417, -inf
      %1420 = vmax.xlane.f32.xlu0 %v1419
      %v1421 = vpop.xlane.xlu0 %1420
      %v1422 = vsub.f32 %v1417, %v1421
      %v1423 = vmul.f32 %v1422, 1.442695
      %v1424 = vpow.pop %v1423
      %v1425 = vsel %vm1418, %v1424, 0.0
      %1426 = vadd.xlane.f32.xlu0 %v1425
      %v1427 = vpop.xlane.xlu0 %1426
      %v1428 = vrcp.pop %v1427
      %v1429 = vmul.f32 %v1424, %v1428
      %v1431 = vsel %vm1418, %v1429, 0
      %1433 = vmatprep.subr.mxu0 0.0
      %1434 = vmatpush1.msra.mxu0 0.0
      %1435 = vmatprep.subr.mxu0 0.0
      %1436 = vmatpush1.msra.mxu0 0.0
      %1437 = vmatprep.subr.mxu0 0.0
      %1438 = vmatpush1.msra.mxu0 0.0
      %1439 = vmatprep.subr.mxu0 0.0
      %1440 = vmatpush1.msra.mxu0 0.0
      %1441 = vmatprep.subr.mxu0 0.0
      %1442 = vmatpush1.msra.mxu0 0.0
      %1443 = vmatprep.subr.mxu0 0.0
      %1444 = vmatpush1.msra.mxu0 0.0
      %1445 = vmatprep.subr.mxu0 0.0
      %1446 = vmatpush1.msra.mxu0 0.0
      %1447 = vmatprep.subr.mxu0 0.0
      %1448 = vmatpush1.msra.mxu0 0.0
      %1449 = vmatprep.subr.mxu0 0.0
      %1450 = vmatpush1.msra.mxu0 0.0
      %1451 = vmatprep.subr.mxu0 0.0
      %1452 = vmatpush1.msra.mxu0 0.0
      %1453 = vmatprep.subr.mxu0 0.0
      %1454 = vmatpush1.msra.mxu0 0.0
      %1455 = vmatprep.subr.mxu0 0.0
      %1456 = vmatpush1.msra.mxu0 0.0
      %1457 = vmatprep.subr.mxu0 0.0
      %1458 = vmatpush1.msra.mxu0 0.0
      %1459 = vmatprep.subr.mxu0 0.0
      %1460 = vmatpush1.msra.mxu0 0.0
      %1461 = vmatprep.subr.mxu0 0.0
      %1462 = vmatpush1.msra.mxu0 0.0
      %1463 = vmatprep.subr.mxu0 0.0
      %1464 = vmatpush1.msra.mxu0 %v1328
      %1465 = vmatprep.subr.mxu0 0.0
      %1466 = vmatpush2.msra.mxu0 0.0
      %1467 = vmatprep.subr.mxu0 0.0
      %1468 = vmatpush2.msra.mxu0 0.0
      %1469 = vmatprep.subr.mxu0 0.0
      %1470 = vmatpush2.msra.mxu0 0.0
      %1471 = vmatprep.subr.mxu0 0.0
      %1472 = vmatpush2.msra.mxu0 0.0
      %1473 = vmatprep.subr.mxu0 0.0
      %1474 = vmatpush2.msra.mxu0 0.0
      %1475 = vmatprep.subr.mxu0 0.0
      %1476 = vmatpush2.msra.mxu0 0.0
      %1477 = vmatprep.subr.mxu0 0.0
      %1478 = vmatpush2.msra.mxu0 0.0
      %1479 = vmatprep.subr.mxu0 0.0
      %1480 = vmatpush2.msra.mxu0 0.0
      %1481 = vmatprep.subr.mxu0 0.0
      %1482 = vmatpush2.msra.mxu0 0.0
      %1483 = vmatprep.subr.mxu0 0.0
      %1484 = vmatpush2.msra.mxu0 0.0
      %1485 = vmatprep.subr.mxu0 0.0
      %1486 = vmatpush2.msra.mxu0 0.0
      %1487 = vmatprep.subr.mxu0 0.0
      %1488 = vmatpush2.msra.mxu0 0.0
      %1489 = vmatprep.subr.mxu0 0.0
      %1490 = vmatpush2.msra.mxu0 0.0
      %1491 = vmatprep.subr.mxu0 0.0
      %1492 = vmatpush2.msra.mxu0 0.0
      %1493 = vmatprep.subr.mxu0 0.0
      %1494 = vmatpush2.msra.mxu0 0.0
      %1495 = vmatprep.subr.mxu0 0.0
      %1496 = vmatpush2.msra.mxu0 0.0
      %1497 = vmatprep.mubr.f32.mxu0 0.0
      %1498 = vmatmul.mubr.f32.gmra.mxu0 %v1431
      %v1499 = vpop.f32.mrf.mxu0
      %v1500 = vadd.f32 0.0, %v1499
      %v1501 = vpop.f32.mrf.mxu0
      %1502 = vdwg.mxu0
      %1503 = vrot.lane.b32.xlu0 %v1158, 112
      %v1504 = vpop.permute.xlu0 %1503
      %1505 = vrot.lane.b32.xlu0 %v1243, 112
      %v1506 = vpop.permute.xlu0 %1505
      %v1507 = vsel %vm1339, %v1504, 0
      %v1509 = vsel %vm1339, %v1506, 0
      %1511 = vmatprep.subr.mxu0 0.0
      %1512 = vmatpush1.xpose.msra.mxu0 0.0
      %1513 = vmatprep.subr.mxu0 0.0
      %1514 = vmatpush1.xpose.msra.mxu0 0.0
      %1515 = vmatprep.subr.mxu0 0.0
      %1516 = vmatpush1.xpose.msra.mxu0 0.0
      %1517 = vmatprep.subr.mxu0 0.0
      %1518 = vmatpush1.xpose.msra.mxu0 0.0
      %1519 = vmatprep.subr.mxu0 0.0
      %1520 = vmatpush1.xpose.msra.mxu0 0.0
      %1521 = vmatprep.subr.mxu0 0.0
      %1522 = vmatpush1.xpose.msra.mxu0 0.0
      %1523 = vmatprep.subr.mxu0 0.0
      %1524 = vmatpush1.xpose.msra.mxu0 0.0
      %1525 = vmatprep.subr.mxu0 0.0
      %1526 = vmatpush1.xpose.msra.mxu0 0.0
      %1527 = vmatprep.subr.mxu0 0.0
      %1528 = vmatpush1.xpose.msra.mxu0 0.0
      %1529 = vmatprep.subr.mxu0 0.0
      %1530 = vmatpush1.xpose.msra.mxu0 0.0
      %1531 = vmatprep.subr.mxu0 0.0
      %1532 = vmatpush1.xpose.msra.mxu0 0.0
      %1533 = vmatprep.subr.mxu0 0.0
      %1534 = vmatpush1.xpose.msra.mxu0 0.0
      %1535 = vmatprep.subr.mxu0 0.0
      %1536 = vmatpush1.xpose.msra.mxu0 0.0
      %1537 = vmatprep.subr.mxu0 0.0
      %1538 = vmatpush1.xpose.msra.mxu0 0.0
      %1539 = vmatprep.subr.mxu0 0.0
      %1540 = vmatpush1.xpose.msra.mxu0 0.0
      %1541 = vmatprep.subr.mxu0 0.0
      %1542 = vmatpush1.xpose.msra.mxu0 %v1509
      %1543 = vmatprep.subr.mxu0 0.0
      %1544 = vmatpush2.xpose.msra.mxu0 0.0
      %1545 = vmatprep.subr.mxu0 0.0
      %1546 = vmatpush2.xpose.msra.mxu0 0.0
      %1547 = vmatprep.subr.mxu0 0.0
      %1548 = vmatpush2.xpose.msra.mxu0 0.0
      %1549 = vmatprep.subr.mxu0 0.0
      %1550 = vmatpush2.xpose.msra.mxu0 0.0
      %1551 = vmatprep.subr.mxu0 0.0
      %1552 = vmatpush2.xpose.msra.mxu0 0.0
      %1553 = vmatprep.subr.mxu0 0.0
      %1554 = vmatpush2.xpose.msra.mxu0 0.0
      %1555 = vmatprep.subr.mxu0 0.0
      %1556 = vmatpush2.xpose.msra.mxu0 0.0
      %1557 = vmatprep.subr.mxu0 0.0
      %1558 = vmatpush2.xpose.msra.mxu0 0.0
      %1559 = vmatprep.subr.mxu0 0.0
      %1560 = vmatpush2.xpose.msra.mxu0 0.0
      %1561 = vmatprep.subr.mxu0 0.0
      %1562 = vmatpush2.xpose.msra.mxu0 0.0
      %1563 = vmatprep.subr.mxu0 0.0
      %1564 = vmatpush2.xpose.msra.mxu0 0.0
      %1565 = vmatprep.subr.mxu0 0.0
      %1566 = vmatpush2.xpose.msra.mxu0 0.0
      %1567 = vmatprep.subr.mxu0 0.0
      %1568 = vmatpush2.xpose.msra.mxu0 0.0
      %1569 = vmatprep.subr.mxu0 0.0
      %1570 = vmatpush2.xpose.msra.mxu0 0.0
      %1571 = vmatprep.subr.mxu0 0.0
      %1572 = vmatpush2.xpose.msra.mxu0 0.0
      %1573 = vmatprep.subr.mxu0 0.0
      %1574 = vmatpush2.xpose.msra.mxu0 0.0
      %1575 = vmatprep.mubr.f32.mxu0 0.0
      %1576 = vmatmul.mubr.f32.gmra.mxu0 %v1507
      %v1577 = vpop.f32.mrf.mxu0
      %v1578 = vadd.f32 0.0, %v1577
      %v1579 = vpop.f32.mrf.mxu0
      %1580 = vdwg.mxu0
      %v1581 = vmul.f32 %v1578, 0.25
      %v1582 = vsel %vm1041, %v1581, -1e+30
      %v1583 = vsel %vm1418, %v1582, -inf
      %1584 = vmax.xlane.f32.xlu0 %v1583
      %v1585 = vpop.xlane.xlu0 %1584
      %v1586 = vsub.f32 %v1582, %v1585
      %v1587 = vmul.f32 %v1586, 1.442695
      %v1588 = vpow.pop %v1587
      %v1589 = vsel %vm1418, %v1588, 0.0
      %1590 = vadd.xlane.f32.xlu0 %v1589
      %v1591 = vpop.xlane.xlu0 %1590
      %v1592 = vrcp.pop %v1591
      %v1593 = vmul.f32 %v1588, %v1592
      %1595 = vrot.lane.b32.xlu0 %v1328, 112
      %v1596 = vpop.permute.xlu0 %1595
      %v1599 = vsel %vm1418, %v1593, 0
      %1601 = vmatprep.subr.mxu0 0.0
      %1602 = vmatpush1.msra.mxu0 0.0
      %1603 = vmatprep.subr.mxu0 0.0
      %1604 = vmatpush1.msra.mxu0 0.0
      %1605 = vmatprep.subr.mxu0 0.0
      %1606 = vmatpush1.msra.mxu0 0.0
      %1607 = vmatprep.subr.mxu0 0.0
      %1608 = vmatpush1.msra.mxu0 0.0
      %1609 = vmatprep.subr.mxu0 0.0
      %1610 = vmatpush1.msra.mxu0 0.0
      %1611 = vmatprep.subr.mxu0 0.0
      %1612 = vmatpush1.msra.mxu0 0.0
      %1613 = vmatprep.subr.mxu0 0.0
      %1614 = vmatpush1.msra.mxu0 0.0
      %1615 = vmatprep.subr.mxu0 0.0
      %1616 = vmatpush1.msra.mxu0 0.0
      %1617 = vmatprep.subr.mxu0 0.0
      %1618 = vmatpush1.msra.mxu0 0.0
      %1619 = vmatprep.subr.mxu0 0.0
      %1620 = vmatpush1.msra.mxu0 0.0
      %1621 = vmatprep.subr.mxu0 0.0
      %1622 = vmatpush1.msra.mxu0 0.0
      %1623 = vmatprep.subr.mxu0 0.0
      %1624 = vmatpush1.msra.mxu0 0.0
      %1625 = vmatprep.subr.mxu0 0.0
      %1626 = vmatpush1.msra.mxu0 0.0
      %1627 = vmatprep.subr.mxu0 0.0
      %1628 = vmatpush1.msra.mxu0 0.0
      %1629 = vmatprep.subr.mxu0 0.0
      %1630 = vmatpush1.msra.mxu0 0.0
      %1631 = vmatprep.subr.mxu0 0.0
      %1632 = vmatpush1.msra.mxu0 %v1596
      %1633 = vmatprep.subr.mxu0 0.0
      %1634 = vmatpush2.msra.mxu0 0.0
      %1635 = vmatprep.subr.mxu0 0.0
      %1636 = vmatpush2.msra.mxu0 0.0
      %1637 = vmatprep.subr.mxu0 0.0
      %1638 = vmatpush2.msra.mxu0 0.0
      %1639 = vmatprep.subr.mxu0 0.0
      %1640 = vmatpush2.msra.mxu0 0.0
      %1641 = vmatprep.subr.mxu0 0.0
      %1642 = vmatpush2.msra.mxu0 0.0
      %1643 = vmatprep.subr.mxu0 0.0
      %1644 = vmatpush2.msra.mxu0 0.0
      %1645 = vmatprep.subr.mxu0 0.0
      %1646 = vmatpush2.msra.mxu0 0.0
      %1647 = vmatprep.subr.mxu0 0.0
      %1648 = vmatpush2.msra.mxu0 0.0
      %1649 = vmatprep.subr.mxu0 0.0
      %1650 = vmatpush2.msra.mxu0 0.0
      %1651 = vmatprep.subr.mxu0 0.0
      %1652 = vmatpush2.msra.mxu0 0.0
      %1653 = vmatprep.subr.mxu0 0.0
      %1654 = vmatpush2.msra.mxu0 0.0
      %1655 = vmatprep.subr.mxu0 0.0
      %1656 = vmatpush2.msra.mxu0 0.0
      %1657 = vmatprep.subr.mxu0 0.0
      %1658 = vmatpush2.msra.mxu0 0.0
      %1659 = vmatprep.subr.mxu0 0.0
      %1660 = vmatpush2.msra.mxu0 0.0
      %1661 = vmatprep.subr.mxu0 0.0
      %1662 = vmatpush2.msra.mxu0 0.0
      %1663 = vmatprep.subr.mxu0 0.0
      %1664 = vmatpush2.msra.mxu0 0.0
      %1665 = vmatprep.mubr.f32.mxu0 0.0
      %1666 = vmatmul.mubr.f32.gmra.mxu0 %v1599
      %v1667 = vpop.f32.mrf.mxu0
      %v1668 = vadd.f32 0.0, %v1667
      %v1669 = vpop.f32.mrf.mxu0
      %1670 = vdwg.mxu0
      %v1672 = vsel %vm1339, %v1668, 0
      %1674 = vmatprep.subr.mxu0 0.0
      %1675 = vmatpush1.msra.mxu0 0.0
      %1676 = vmatprep.subr.mxu0 0.0
      %1677 = vmatpush1.msra.mxu0 0.0
      %1678 = vmatprep.subr.mxu0 0.0
      %1679 = vmatpush1.msra.mxu0 0.0
      %1680 = vmatprep.subr.mxu0 0.0
      %1681 = vmatpush1.msra.mxu0 0.0
      %1682 = vmatprep.subr.mxu0 0.0
      %1683 = vmatpush1.msra.mxu0 0.0
      %1684 = vmatprep.subr.mxu0 0.0
      %1685 = vmatpush1.msra.mxu0 0.0
      %1686 = vmatprep.subr.mxu0 0.0
      %1687 = vmatpush1.msra.mxu0 0.0
      %1688 = vmatprep.subr.mxu0 0.0
      %1689 = vmatpush1.msra.mxu0 0.0
      %1690 = vmatprep.subr.mxu0 0.0
      %1691 = vmatpush1.msra.mxu0 0.0
      %1692 = vmatprep.subr.mxu0 0.0
      %1693 = vmatpush1.msra.mxu0 0.0
      %1694 = vmatprep.subr.mxu0 0.0
      %1695 = vmatpush1.msra.mxu0 0.0
      %1696 = vmatprep.subr.mxu0 0.0
      %1697 = vmatpush1.msra.mxu0 0.0
      %1698 = vmatprep.subr.mxu0 0.0
      %1699 = vmatpush1.msra.mxu0 0.0
      %1700 = vmatprep.subr.mxu0 0.0
      %1701 = vmatpush1.msra.mxu0 0.0
      %1702 = vmatprep.subr.mxu0 0.0
      %1703 = vmatpush1.msra.mxu0 %v1334
      %1704 = vmatprep.subr.mxu0 0.0
      %1705 = vmatpush1.msra.mxu0 %v1333
      %1706 = vmatprep.subr.mxu0 0.0
      %1707 = vmatpush2.msra.mxu0 0.0
      %1708 = vmatprep.subr.mxu0 0.0
      %1709 = vmatpush2.msra.mxu0 0.0
      %1710 = vmatprep.subr.mxu0 0.0
      %1711 = vmatpush2.msra.mxu0 0.0
      %1712 = vmatprep.subr.mxu0 0.0
      %1713 = vmatpush2.msra.mxu0 0.0
      %1714 = vmatprep.subr.mxu0 0.0
      %1715 = vmatpush2.msra.mxu0 0.0
      %1716 = vmatprep.subr.mxu0 0.0
      %1717 = vmatpush2.msra.mxu0 0.0
      %1718 = vmatprep.subr.mxu0 0.0
      %1719 = vmatpush2.msra.mxu0 0.0
      %1720 = vmatprep.subr.mxu0 0.0
      %1721 = vmatpush2.msra.mxu0 0.0
      %1722 = vmatprep.subr.mxu0 0.0
      %1723 = vmatpush2.msra.mxu0 0.0
      %1724 = vmatprep.subr.mxu0 0.0
      %1725 = vmatpush2.msra.mxu0 0.0
      %1726 = vmatprep.subr.mxu0 0.0
      %1727 = vmatpush2.msra.mxu0 0.0
      %1728 = vmatprep.subr.mxu0 0.0
      %1729 = vmatpush2.msra.mxu0 0.0
      %1730 = vmatprep.subr.mxu0 0.0
      %1731 = vmatpush2.msra.mxu0 0.0
      %1732 = vmatprep.subr.mxu0 0.0
      %1733 = vmatpush2.msra.mxu0 0.0
      %1734 = vmatprep.subr.mxu0 0.0
      %1735 = vmatpush2.msra.mxu0 0.0
      %1736 = vmatprep.subr.mxu0 0.0
      %1737 = vmatpush2.msra.mxu0 0.0
      %1738 = vmatprep.mubr.f32.mxu0 0.0
      %1739 = vmatmul.mubr.f32.gmra.mxu0 %v1672
      %v1740 = vpop.f32.mrf.mxu0
      %v1741 = vadd.f32 0.0, %v1740
      %v1742 = vpop.f32.mrf.mxu0
      %1743 = vdwg.mxu0
      %v1745 = vsel %vm1339, %v1500, 0
      %1747 = vmatprep.subr.mxu0 0.0
      %1748 = vmatpush1.msra.mxu0 0.0
      %1749 = vmatprep.subr.mxu0 0.0
      %1750 = vmatpush1.msra.mxu0 0.0
      %1751 = vmatprep.subr.mxu0 0.0
      %1752 = vmatpush1.msra.mxu0 0.0
      %1753 = vmatprep.subr.mxu0 0.0
      %1754 = vmatpush1.msra.mxu0 0.0
      %1755 = vmatprep.subr.mxu0 0.0
      %1756 = vmatpush1.msra.mxu0 0.0
      %1757 = vmatprep.subr.mxu0 0.0
      %1758 = vmatpush1.msra.mxu0 0.0
      %1759 = vmatprep.subr.mxu0 0.0
      %1760 = vmatpush1.msra.mxu0 0.0
      %1761 = vmatprep.subr.mxu0 0.0
      %1762 = vmatpush1.msra.mxu0 0.0
      %1763 = vmatprep.subr.mxu0 0.0
      %1764 = vmatpush1.msra.mxu0 0.0
      %1765 = vmatprep.subr.mxu0 0.0
      %1766 = vmatpush1.msra.mxu0 0.0
      %1767 = vmatprep.subr.mxu0 0.0
      %1768 = vmatpush1.msra.mxu0 0.0
      %1769 = vmatprep.subr.mxu0 0.0
      %1770 = vmatpush1.msra.mxu0 0.0
      %1771 = vmatprep.subr.mxu0 0.0
      %1772 = vmatpush1.msra.mxu0 0.0
      %1773 = vmatprep.subr.mxu0 0.0
      %1774 = vmatpush1.msra.mxu0 0.0
      %1775 = vmatprep.subr.mxu0 0.0
      %1776 = vmatpush1.msra.mxu0 %v1332
      %1777 = vmatprep.subr.mxu0 0.0
      %1778 = vmatpush1.msra.mxu0 %v1331
      %1779 = vmatprep.subr.mxu0 0.0
      %1780 = vmatpush2.msra.mxu0 0.0
      %1781 = vmatprep.subr.mxu0 0.0
      %1782 = vmatpush2.msra.mxu0 0.0
      %1783 = vmatprep.subr.mxu0 0.0
      %1784 = vmatpush2.msra.mxu0 0.0
      %1785 = vmatprep.subr.mxu0 0.0
      %1786 = vmatpush2.msra.mxu0 0.0
      %1787 = vmatprep.subr.mxu0 0.0
      %1788 = vmatpush2.msra.mxu0 0.0
      %1789 = vmatprep.subr.mxu0 0.0
      %1790 = vmatpush2.msra.mxu0 0.0
      %1791 = vmatprep.subr.mxu0 0.0
      %1792 = vmatpush2.msra.mxu0 0.0
      %1793 = vmatprep.subr.mxu0 0.0
      %1794 = vmatpush2.msra.mxu0 0.0
      %1795 = vmatprep.subr.mxu0 0.0
      %1796 = vmatpush2.msra.mxu0 0.0
      %1797 = vmatprep.subr.mxu0 0.0
      %1798 = vmatpush2.msra.mxu0 0.0
      %1799 = vmatprep.subr.mxu0 0.0
      %1800 = vmatpush2.msra.mxu0 0.0
      %1801 = vmatprep.subr.mxu0 0.0
      %1802 = vmatpush2.msra.mxu0 0.0
      %1803 = vmatprep.subr.mxu0 0.0
      %1804 = vmatpush2.msra.mxu0 0.0
      %1805 = vmatprep.subr.mxu0 0.0
      %1806 = vmatpush2.msra.mxu0 0.0
      %1807 = vmatprep.subr.mxu0 0.0
      %1808 = vmatpush2.msra.mxu0 0.0
      %1809 = vmatprep.subr.mxu0 0.0
      %1810 = vmatpush2.msra.mxu0 0.0
      %1811 = vmatprep.mubr.f32.mxu0 0.0
      %1812 = vmatmul.mubr.f32.gmra.mxu0 %v1745
      %v1813 = vpop.f32.mrf.mxu0
      %v1814 = vadd.f32 %v1741, %v1813
      %v1815 = vpop.f32.mrf.mxu0
      %1816 = vdwg.mxu0
      %1817 = vrot.lane.b32.xlu0 %v1158, 96
      %v1818 = vpop.permute.xlu0 %1817
      %1819 = vrot.lane.b32.xlu0 %v1243, 96
      %v1820 = vpop.permute.xlu0 %1819
      %v1821 = vsel %vm1339, %v1818, 0
      %v1823 = vsel %vm1339, %v1820, 0
      %1825 = vmatprep.subr.mxu0 0.0
      %1826 = vmatpush1.xpose.msra.mxu0 0.0
      %1827 = vmatprep.subr.mxu0 0.0
      %1828 = vmatpush1.xpose.msra.mxu0 0.0
      %1829 = vmatprep.subr.mxu0 0.0
      %1830 = vmatpush1.xpose.msra.mxu0 0.0
      %1831 = vmatprep.subr.mxu0 0.0
      %1832 = vmatpush1.xpose.msra.mxu0 0.0
      %1833 = vmatprep.subr.mxu0 0.0
      %1834 = vmatpush1.xpose.msra.mxu0 0.0
      %1835 = vmatprep.subr.mxu0 0.0
      %1836 = vmatpush1.xpose.msra.mxu0 0.0
      %1837 = vmatprep.subr.mxu0 0.0
      %1838 = vmatpush1.xpose.msra.mxu0 0.0
      %1839 = vmatprep.subr.mxu0 0.0
      %1840 = vmatpush1.xpose.msra.mxu0 0.0
      %1841 = vmatprep.subr.mxu0 0.0
      %1842 = vmatpush1.xpose.msra.mxu0 0.0
      %1843 = vmatprep.subr.mxu0 0.0
      %1844 = vmatpush1.xpose.msra.mxu0 0.0
      %1845 = vmatprep.subr.mxu0 0.0
      %1846 = vmatpush1.xpose.msra.mxu0 0.0
      %1847 = vmatprep.subr.mxu0 0.0
      %1848 = vmatpush1.xpose.msra.mxu0 0.0
      %1849 = vmatprep.subr.mxu0 0.0
      %1850 = vmatpush1.xpose.msra.mxu0 0.0
      %1851 = vmatprep.subr.mxu0 0.0
      %1852 = vmatpush1.xpose.msra.mxu0 0.0
      %1853 = vmatprep.subr.mxu0 0.0
      %1854 = vmatpush1.xpose.msra.mxu0 0.0
      %1855 = vmatprep.subr.mxu0 0.0
      %1856 = vmatpush1.xpose.msra.mxu0 %v1823
      %1857 = vmatprep.subr.mxu0 0.0
      %1858 = vmatpush2.xpose.msra.mxu0 0.0
      %1859 = vmatprep.subr.mxu0 0.0
      %1860 = vmatpush2.xpose.msra.mxu0 0.0
      %1861 = vmatprep.subr.mxu0 0.0
      %1862 = vmatpush2.xpose.msra.mxu0 0.0
      %1863 = vmatprep.subr.mxu0 0.0
      %1864 = vmatpush2.xpose.msra.mxu0 0.0
      %1865 = vmatprep.subr.mxu0 0.0
      %1866 = vmatpush2.xpose.msra.mxu0 0.0
      %1867 = vmatprep.subr.mxu0 0.0
      %1868 = vmatpush2.xpose.msra.mxu0 0.0
      %1869 = vmatprep.subr.mxu0 0.0
      %1870 = vmatpush2.xpose.msra.mxu0 0.0
      %1871 = vmatprep.subr.mxu0 0.0
      %1872 = vmatpush2.xpose.msra.mxu0 0.0
      %1873 = vmatprep.subr.mxu0 0.0
      %1874 = vmatpush2.xpose.msra.mxu0 0.0
      %1875 = vmatprep.subr.mxu0 0.0
      %1876 = vmatpush2.xpose.msra.mxu0 0.0
      %1877 = vmatprep.subr.mxu0 0.0
      %1878 = vmatpush2.xpose.msra.mxu0 0.0
      %1879 = vmatprep.subr.mxu0 0.0
      %1880 = vmatpush2.xpose.msra.mxu0 0.0
      %1881 = vmatprep.subr.mxu0 0.0
      %1882 = vmatpush2.xpose.msra.mxu0 0.0
      %1883 = vmatprep.subr.mxu0 0.0
      %1884 = vmatpush2.xpose.msra.mxu0 0.0
      %1885 = vmatprep.subr.mxu0 0.0
      %1886 = vmatpush2.xpose.msra.mxu0 0.0
      %1887 = vmatprep.subr.mxu0 0.0
      %1888 = vmatpush2.xpose.msra.mxu0 0.0
      %1889 = vmatprep.mubr.f32.mxu0 0.0
      %1890 = vmatmul.mubr.f32.gmra.mxu0 %v1821
      %v1891 = vpop.f32.mrf.mxu0
      %v1892 = vadd.f32 0.0, %v1891
      %v1893 = vpop.f32.mrf.mxu0
      %1894 = vdwg.mxu0
      %v1895 = vmul.f32 %v1892, 0.25
      %v1896 = vsel %vm1041, %v1895, -1e+30
      %v1897 = vsel %vm1418, %v1896, -inf
      %1898 = vmax.xlane.f32.xlu0 %v1897
      %v1899 = vpop.xlane.xlu0 %1898
      %v1900 = vsub.f32 %v1896, %v1899
      %v1901 = vmul.f32 %v1900, 1.442695
      %v1902 = vpow.pop %v1901
      %v1903 = vsel %vm1418, %v1902, 0.0
      %1904 = vadd.xlane.f32.xlu0 %v1903
      %v1905 = vpop.xlane.xlu0 %1904
      %v1906 = vrcp.pop %v1905
      %v1907 = vmul.f32 %v1902, %v1906
      %1908 = vrot.lane.b32.xlu0 %v1328, 96
      %v1909 = vpop.permute.xlu0 %1908
      %v1912 = vsel %vm1418, %v1907, 0
      %1914 = vmatprep.subr.mxu0 0.0
      %1915 = vmatpush1.msra.mxu0 0.0
      %1916 = vmatprep.subr.mxu0 0.0
      %1917 = vmatpush1.msra.mxu0 0.0
      %1918 = vmatprep.subr.mxu0 0.0
      %1919 = vmatpush1.msra.mxu0 0.0
      %1920 = vmatprep.subr.mxu0 0.0
      %1921 = vmatpush1.msra.mxu0 0.0
      %1922 = vmatprep.subr.mxu0 0.0
      %1923 = vmatpush1.msra.mxu0 0.0
      %1924 = vmatprep.subr.mxu0 0.0
      %1925 = vmatpush1.msra.mxu0 0.0
      %1926 = vmatprep.subr.mxu0 0.0
      %1927 = vmatpush1.msra.mxu0 0.0
      %1928 = vmatprep.subr.mxu0 0.0
      %1929 = vmatpush1.msra.mxu0 0.0
      %1930 = vmatprep.subr.mxu0 0.0
      %1931 = vmatpush1.msra.mxu0 0.0
      %1932 = vmatprep.subr.mxu0 0.0
      %1933 = vmatpush1.msra.mxu0 0.0
      %1934 = vmatprep.subr.mxu0 0.0
      %1935 = vmatpush1.msra.mxu0 0.0
      %1936 = vmatprep.subr.mxu0 0.0
      %1937 = vmatpush1.msra.mxu0 0.0
      %1938 = vmatprep.subr.mxu0 0.0
      %1939 = vmatpush1.msra.mxu0 0.0
      %1940 = vmatprep.subr.mxu0 0.0
      %1941 = vmatpush1.msra.mxu0 0.0
      %1942 = vmatprep.subr.mxu0 0.0
      %1943 = vmatpush1.msra.mxu0 0.0
      %1944 = vmatprep.subr.mxu0 0.0
      %1945 = vmatpush1.msra.mxu0 %v1909
      %1946 = vmatprep.subr.mxu0 0.0
      %1947 = vmatpush2.msra.mxu0 0.0
      %1948 = vmatprep.subr.mxu0 0.0
      %1949 = vmatpush2.msra.mxu0 0.0
      %1950 = vmatprep.subr.mxu0 0.0
      %1951 = vmatpush2.msra.mxu0 0.0
      %1952 = vmatprep.subr.mxu0 0.0
      %1953 = vmatpush2.msra.mxu0 0.0
      %1954 = vmatprep.subr.mxu0 0.0
      %1955 = vmatpush2.msra.mxu0 0.0
      %1956 = vmatprep.subr.mxu0 0.0
      %1957 = vmatpush2.msra.mxu0 0.0
      %1958 = vmatprep.subr.mxu0 0.0
      %1959 = vmatpush2.msra.mxu0 0.0
      %1960 = vmatprep.subr.mxu0 0.0
      %1961 = vmatpush2.msra.mxu0 0.0
      %1962 = vmatprep.subr.mxu0 0.0
      %1963 = vmatpush2.msra.mxu0 0.0
      %1964 = vmatprep.subr.mxu0 0.0
      %1965 = vmatpush2.msra.mxu0 0.0
      %1966 = vmatprep.subr.mxu0 0.0
      %1967 = vmatpush2.msra.mxu0 0.0
      %1968 = vmatprep.subr.mxu0 0.0
      %1969 = vmatpush2.msra.mxu0 0.0
      %1970 = vmatprep.subr.mxu0 0.0
      %1971 = vmatpush2.msra.mxu0 0.0
      %1972 = vmatprep.subr.mxu0 0.0
      %1973 = vmatpush2.msra.mxu0 0.0
      %1974 = vmatprep.subr.mxu0 0.0
      %1975 = vmatpush2.msra.mxu0 0.0
      %1976 = vmatprep.subr.mxu0 0.0
      %1977 = vmatpush2.msra.mxu0 0.0
      %1978 = vmatprep.mubr.f32.mxu0 0.0
      %1979 = vmatmul.mubr.f32.gmra.mxu0 %v1912
      %v1980 = vpop.f32.mrf.mxu0
      %v1981 = vadd.f32 0.0, %v1980
      %v1982 = vpop.f32.mrf.mxu0
      %1983 = vdwg.mxu0
      %v1985 = vsel %vm1339, %v1981, 0
      %1987 = vmatprep.subr.mxu0 0.0
      %1988 = vmatpush1.msra.mxu0 0.0
      %1989 = vmatprep.subr.mxu0 0.0
      %1990 = vmatpush1.msra.mxu0 0.0
      %1991 = vmatprep.subr.mxu0 0.0
      %1992 = vmatpush1.msra.mxu0 0.0
      %1993 = vmatprep.subr.mxu0 0.0
      %1994 = vmatpush1.msra.mxu0 0.0
      %1995 = vmatprep.subr.mxu0 0.0
      %1996 = vmatpush1.msra.mxu0 0.0
      %1997 = vmatprep.subr.mxu0 0.0
      %1998 = vmatpush1.msra.mxu0 0.0
      %1999 = vmatprep.subr.mxu0 0.0
      %2000 = vmatpush1.msra.mxu0 0.0
      %2001 = vmatprep.subr.mxu0 0.0
      %2002 = vmatpush1.msra.mxu0 0.0
      %2003 = vmatprep.subr.mxu0 0.0
      %2004 = vmatpush1.msra.mxu0 0.0
      %2005 = vmatprep.subr.mxu0 0.0
      %2006 = vmatpush1.msra.mxu0 0.0
      %2007 = vmatprep.subr.mxu0 0.0
      %2008 = vmatpush1.msra.mxu0 0.0
      %2009 = vmatprep.subr.mxu0 0.0
      %2010 = vmatpush1.msra.mxu0 0.0
      %2011 = vmatprep.subr.mxu0 0.0
      %2012 = vmatpush1.msra.mxu0 0.0
      %2013 = vmatprep.subr.mxu0 0.0
      %2014 = vmatpush1.msra.mxu0 0.0
      %2015 = vmatprep.subr.mxu0 0.0
      %2016 = vmatpush1.msra.mxu0 %v1336
      %2017 = vmatprep.subr.mxu0 0.0
      %2018 = vmatpush1.msra.mxu0 %v1335
      %2019 = vmatprep.subr.mxu0 0.0
      %2020 = vmatpush2.msra.mxu0 0.0
      %2021 = vmatprep.subr.mxu0 0.0
      %2022 = vmatpush2.msra.mxu0 0.0
      %2023 = vmatprep.subr.mxu0 0.0
      %2024 = vmatpush2.msra.mxu0 0.0
      %2025 = vmatprep.subr.mxu0 0.0
      %2026 = vmatpush2.msra.mxu0 0.0
      %2027 = vmatprep.subr.mxu0 0.0
      %2028 = vmatpush2.msra.mxu0 0.0
      %2029 = vmatprep.subr.mxu0 0.0
      %2030 = vmatpush2.msra.mxu0 0.0
      %2031 = vmatprep.subr.mxu0 0.0
      %2032 = vmatpush2.msra.mxu0 0.0
      %2033 = vmatprep.subr.mxu0 0.0
      %2034 = vmatpush2.msra.mxu0 0.0
      %2035 = vmatprep.subr.mxu0 0.0
      %2036 = vmatpush2.msra.mxu0 0.0
      %2037 = vmatprep.subr.mxu0 0.0
      %2038 = vmatpush2.msra.mxu0 0.0
      %2039 = vmatprep.subr.mxu0 0.0
      %2040 = vmatpush2.msra.mxu0 0.0
      %2041 = vmatprep.subr.mxu0 0.0
      %2042 = vmatpush2.msra.mxu0 0.0
      %2043 = vmatprep.subr.mxu0 0.0
      %2044 = vmatpush2.msra.mxu0 0.0
      %2045 = vmatprep.subr.mxu0 0.0
      %2046 = vmatpush2.msra.mxu0 0.0
      %2047 = vmatprep.subr.mxu0 0.0
      %2048 = vmatpush2.msra.mxu0 0.0
      %2049 = vmatprep.subr.mxu0 0.0
      %2050 = vmatpush2.msra.mxu0 0.0
      %2051 = vmatprep.mubr.f32.mxu0 0.0
      %2052 = vmatmul.mubr.f32.gmra.mxu0 %v1985
      %v2053 = vpop.f32.mrf.mxu0
      %v2054 = vadd.f32 0.0, %v2053
      %v2055 = vpop.f32.mrf.mxu0
      %2056 = vdwg.mxu0
      %v2057 = vadd.f32 %v1814, %v2054
      %2058 = vrot.lane.b32.xlu0 %v1158, 80
      %v2059 = vpop.permute.xlu0 %2058
      %2060 = vrot.lane.b32.xlu0 %v1243, 80
      %v2061 = vpop.permute.xlu0 %2060
      %v2062 = vsel %vm1339, %v2059, 0
      %v2064 = vsel %vm1339, %v2061, 0
      %2066 = vmatprep.subr.mxu0 0.0
      %2067 = vmatpush1.xpose.msra.mxu0 0.0
      %2068 = vmatprep.subr.mxu0 0.0
      %2069 = vmatpush1.xpose.msra.mxu0 0.0
      %2070 = vmatprep.subr.mxu0 0.0
      %2071 = vmatpush1.xpose.msra.mxu0 0.0
      %2072 = vmatprep.subr.mxu0 0.0
      %2073 = vmatpush1.xpose.msra.mxu0 0.0
      %2074 = vmatprep.subr.mxu0 0.0
      %2075 = vmatpush1.xpose.msra.mxu0 0.0
      %2076 = vmatprep.subr.mxu0 0.0
      %2077 = vmatpush1.xpose.msra.mxu0 0.0
      %2078 = vmatprep.subr.mxu0 0.0
      %2079 = vmatpush1.xpose.msra.mxu0 0.0
      %2080 = vmatprep.subr.mxu0 0.0
      %2081 = vmatpush1.xpose.msra.mxu0 0.0
      %2082 = vmatprep.subr.mxu0 0.0
      %2083 = vmatpush1.xpose.msra.mxu0 0.0
      %2084 = vmatprep.subr.mxu0 0.0
      %2085 = vmatpush1.xpose.msra.mxu0 0.0
      %2086 = vmatprep.subr.mxu0 0.0
      %2087 = vmatpush1.xpose.msra.mxu0 0.0
      %2088 = vmatprep.subr.mxu0 0.0
      %2089 = vmatpush1.xpose.msra.mxu0 0.0
      %2090 = vmatprep.subr.mxu0 0.0
      %2091 = vmatpush1.xpose.msra.mxu0 0.0
      %2092 = vmatprep.subr.mxu0 0.0
      %2093 = vmatpush1.xpose.msra.mxu0 0.0
      %2094 = vmatprep.subr.mxu0 0.0
      %2095 = vmatpush1.xpose.msra.mxu0 0.0
      %2096 = vmatprep.subr.mxu0 0.0
      %2097 = vmatpush1.xpose.msra.mxu0 %v2064
      %2098 = vmatprep.subr.mxu0 0.0
      %2099 = vmatpush2.xpose.msra.mxu0 0.0
      %2100 = vmatprep.subr.mxu0 0.0
      %2101 = vmatpush2.xpose.msra.mxu0 0.0
      %2102 = vmatprep.subr.mxu0 0.0
      %2103 = vmatpush2.xpose.msra.mxu0 0.0
      %2104 = vmatprep.subr.mxu0 0.0
      %2105 = vmatpush2.xpose.msra.mxu0 0.0
      %2106 = vmatprep.subr.mxu0 0.0
      %2107 = vmatpush2.xpose.msra.mxu0 0.0
      %2108 = vmatprep.subr.mxu0 0.0
      %2109 = vmatpush2.xpose.msra.mxu0 0.0
      %2110 = vmatprep.subr.mxu0 0.0
      %2111 = vmatpush2.xpose.msra.mxu0 0.0
      %2112 = vmatprep.subr.mxu0 0.0
      %2113 = vmatpush2.xpose.msra.mxu0 0.0
      %2114 = vmatprep.subr.mxu0 0.0
      %2115 = vmatpush2.xpose.msra.mxu0 0.0
      %2116 = vmatprep.subr.mxu0 0.0
      %2117 = vmatpush2.xpose.msra.mxu0 0.0
      %2118 = vmatprep.subr.mxu0 0.0
      %2119 = vmatpush2.xpose.msra.mxu0 0.0
      %2120 = vmatprep.subr.mxu0 0.0
      %2121 = vmatpush2.xpose.msra.mxu0 0.0
      %2122 = vmatprep.subr.mxu0 0.0
      %2123 = vmatpush2.xpose.msra.mxu0 0.0
      %2124 = vmatprep.subr.mxu0 0.0
      %2125 = vmatpush2.xpose.msra.mxu0 0.0
      %2126 = vmatprep.subr.mxu0 0.0
      %2127 = vmatpush2.xpose.msra.mxu0 0.0
      %2128 = vmatprep.subr.mxu0 0.0
      %2129 = vmatpush2.xpose.msra.mxu0 0.0
      %2130 = vmatprep.mubr.f32.mxu0 0.0
      %2131 = vmatmul.mubr.f32.gmra.mxu0 %v2062
      %v2132 = vpop.f32.mrf.mxu0
      %v2133 = vadd.f32 0.0, %v2132
      %v2134 = vpop.f32.mrf.mxu0
      %2135 = vdwg.mxu0
      %v2136 = vmul.f32 %v2133, 0.25
      %v2137 = vsel %vm1041, %v2136, -1e+30
      %v2138 = vsel %vm1418, %v2137, -inf
      %2139 = vmax.xlane.f32.xlu0 %v2138
      %v2140 = vpop.xlane.xlu0 %2139
      %v2141 = vsub.f32 %v2137, %v2140
      %v2142 = vmul.f32 %v2141, 1.442695
      %v2143 = vpow.pop %v2142
      %v2144 = vsel %vm1418, %v2143, 0.0
      %2145 = vadd.xlane.f32.xlu0 %v2144
      %v2146 = vpop.xlane.xlu0 %2145
      %v2147 = vrcp.pop %v2146
      %v2148 = vmul.f32 %v2143, %v2147
      %2149 = vrot.lane.b32.xlu0 %v1328, 80
      %v2150 = vpop.permute.xlu0 %2149
      %v2153 = vsel %vm1418, %v2148, 0
      %2155 = vmatprep.subr.mxu0 0.0
      %2156 = vmatpush1.msra.mxu0 0.0
      %2157 = vmatprep.subr.mxu0 0.0
      %2158 = vmatpush1.msra.mxu0 0.0
      %2159 = vmatprep.subr.mxu0 0.0
      %2160 = vmatpush1.msra.mxu0 0.0
      %2161 = vmatprep.subr.mxu0 0.0
      %2162 = vmatpush1.msra.mxu0 0.0
      %2163 = vmatprep.subr.mxu0 0.0
      %2164 = vmatpush1.msra.mxu0 0.0
      %2165 = vmatprep.subr.mxu0 0.0
      %2166 = vmatpush1.msra.mxu0 0.0
      %2167 = vmatprep.subr.mxu0 0.0
      %2168 = vmatpush1.msra.mxu0 0.0
      %2169 = vmatprep.subr.mxu0 0.0
      %2170 = vmatpush1.msra.mxu0 0.0
      %2171 = vmatprep.subr.mxu0 0.0
      %2172 = vmatpush1.msra.mxu0 0.0
      %2173 = vmatprep.subr.mxu0 0.0
      %2174 = vmatpush1.msra.mxu0 0.0
      %2175 = vmatprep.subr.mxu0 0.0
      %2176 = vmatpush1.msra.mxu0 0.0
      %2177 = vmatprep.subr.mxu0 0.0
      %2178 = vmatpush1.msra.mxu0 0.0
      %2179 = vmatprep.subr.mxu0 0.0
      %2180 = vmatpush1.msra.mxu0 0.0
      %2181 = vmatprep.subr.mxu0 0.0
      %2182 = vmatpush1.msra.mxu0 0.0
      %2183 = vmatprep.subr.mxu0 0.0
      %2184 = vmatpush1.msra.mxu0 0.0
      %2185 = vmatprep.subr.mxu0 0.0
      %2186 = vmatpush1.msra.mxu0 %v2150
      %2187 = vmatprep.subr.mxu0 0.0
      %2188 = vmatpush2.msra.mxu0 0.0
      %2189 = vmatprep.subr.mxu0 0.0
      %2190 = vmatpush2.msra.mxu0 0.0
      %2191 = vmatprep.subr.mxu0 0.0
      %2192 = vmatpush2.msra.mxu0 0.0
      %2193 = vmatprep.subr.mxu0 0.0
      %2194 = vmatpush2.msra.mxu0 0.0
      %2195 = vmatprep.subr.mxu0 0.0
      %2196 = vmatpush2.msra.mxu0 0.0
      %2197 = vmatprep.subr.mxu0 0.0
      %2198 = vmatpush2.msra.mxu0 0.0
      %2199 = vmatprep.subr.mxu0 0.0
      %2200 = vmatpush2.msra.mxu0 0.0
      %2201 = vmatprep.subr.mxu0 0.0
      %2202 = vmatpush2.msra.mxu0 0.0
      %2203 = vmatprep.subr.mxu0 0.0
      %2204 = vmatpush2.msra.mxu0 0.0
      %2205 = vmatprep.subr.mxu0 0.0
      %2206 = vmatpush2.msra.mxu0 0.0
      %2207 = vmatprep.subr.mxu0 0.0
      %2208 = vmatpush2.msra.mxu0 0.0
      %2209 = vmatprep.subr.mxu0 0.0
      %2210 = vmatpush2.msra.mxu0 0.0
      %2211 = vmatprep.subr.mxu0 0.0
      %2212 = vmatpush2.msra.mxu0 0.0
      %2213 = vmatprep.subr.mxu0 0.0
      %2214 = vmatpush2.msra.mxu0 0.0
      %2215 = vmatprep.subr.mxu0 0.0
      %2216 = vmatpush2.msra.mxu0 0.0
      %2217 = vmatprep.subr.mxu0 0.0
      %2218 = vmatpush2.msra.mxu0 0.0
      %2219 = vmatprep.mubr.f32.mxu0 0.0
      %2220 = vmatmul.mubr.f32.gmra.mxu0 %v2153
      %v2221 = vpop.f32.mrf.mxu0
      %v2222 = vadd.f32 0.0, %v2221
      %v2223 = vpop.f32.mrf.mxu0
      %2224 = vdwg.mxu0
      %v2226 = vsel %vm1339, %v2222, 0
      %2228 = vmatprep.subr.mxu0 0.0
      %2229 = vmatpush1.msra.mxu0 0.0
      %2230 = vmatprep.subr.mxu0 0.0
      %2231 = vmatpush1.msra.mxu0 0.0
      %2232 = vmatprep.subr.mxu0 0.0
      %2233 = vmatpush1.msra.mxu0 0.0
      %2234 = vmatprep.subr.mxu0 0.0
      %2235 = vmatpush1.msra.mxu0 0.0
      %2236 = vmatprep.subr.mxu0 0.0
      %2237 = vmatpush1.msra.mxu0 0.0
      %2238 = vmatprep.subr.mxu0 0.0
      %2239 = vmatpush1.msra.mxu0 0.0
      %2240 = vmatprep.subr.mxu0 0.0
      %2241 = vmatpush1.msra.mxu0 0.0
      %2242 = vmatprep.subr.mxu0 0.0
      %2243 = vmatpush1.msra.mxu0 0.0
      %2244 = vmatprep.subr.mxu0 0.0
      %2245 = vmatpush1.msra.mxu0 0.0
      %2246 = vmatprep.subr.mxu0 0.0
      %2247 = vmatpush1.msra.mxu0 0.0
      %2248 = vmatprep.subr.mxu0 0.0
      %2249 = vmatpush1.msra.mxu0 0.0
      %2250 = vmatprep.subr.mxu0 0.0
      %2251 = vmatpush1.msra.mxu0 0.0
      %2252 = vmatprep.subr.mxu0 0.0
      %2253 = vmatpush1.msra.mxu0 0.0
      %2254 = vmatprep.subr.mxu0 0.0
      %2255 = vmatpush1.msra.mxu0 0.0
      %2256 = vmatprep.subr.mxu0 0.0
      %2257 = vmatpush1.msra.mxu0 %v1338
      %2258 = vmatprep.subr.mxu0 0.0
      %2259 = vmatpush1.msra.mxu0 %v1337
      %2260 = vmatprep.subr.mxu0 0.0
      %2261 = vmatpush2.msra.mxu0 0.0
      %2262 = vmatprep.subr.mxu0 0.0
      %2263 = vmatpush2.msra.mxu0 0.0
      %2264 = vmatprep.subr.mxu0 0.0
      %2265 = vmatpush2.msra.mxu0 0.0
      %2266 = vmatprep.subr.mxu0 0.0
      %2267 = vmatpush2.msra.mxu0 0.0
      %2268 = vmatprep.subr.mxu0 0.0
      %2269 = vmatpush2.msra.mxu0 0.0
      %2270 = vmatprep.subr.mxu0 0.0
      %2271 = vmatpush2.msra.mxu0 0.0
      %2272 = vmatprep.subr.mxu0 0.0
      %2273 = vmatpush2.msra.mxu0 0.0
      %2274 = vmatprep.subr.mxu0 0.0
      %2275 = vmatpush2.msra.mxu0 0.0
      %2276 = vmatprep.subr.mxu0 0.0
      %2277 = vmatpush2.msra.mxu0 0.0
      %2278 = vmatprep.subr.mxu0 0.0
      %2279 = vmatpush2.msra.mxu0 0.0
      %2280 = vmatprep.subr.mxu0 0.0
      %2281 = vmatpush2.msra.mxu0 0.0
      %2282 = vmatprep.subr.mxu0 0.0
      %2283 = vmatpush2.msra.mxu0 0.0
      %2284 = vmatprep.subr.mxu0 0.0
      %2285 = vmatpush2.msra.mxu0 0.0
      %2286 = vmatprep.subr.mxu0 0.0
      %2287 = vmatpush2.msra.mxu0 0.0
      %2288 = vmatprep.subr.mxu0 0.0
      %2289 = vmatpush2.msra.mxu0 0.0
      %2290 = vmatprep.subr.mxu0 0.0
      %2291 = vmatpush2.msra.mxu0 0.0
      %2292 = vmatprep.mubr.f32.mxu0 0.0
      %2293 = vmatmul.mubr.f32.gmra.mxu0 %v2226
      %v2294 = vpop.f32.mrf.mxu0
      %v2295 = vadd.f32 0.0, %v2294
      %v2296 = vpop.f32.mrf.mxu0
      %2297 = vdwg.mxu0
      %v2298 = vadd.f32 %v2057, %v2295
      %v2299 = vadd.f32 %v1036, %v2298
      %v2300 = vld [vmem:[%s16] sm:$0x1]
      %v2302 = vlaneseq
      %v2303 = vshrl.u32 %v2302, 7
      %v2304 = vsub.s32 0, %v2303
      %v2305 = vrot.slane %v2300, %v2304
      %v2307 = vadd.f32 %v2299, %v2305
      %v2308 = vld [vmem:[%s17] sm:$0x1]
      %v2309 = vld [vmem:[%s18] sm:$0x1]
      %v2310 = vsel %vm1044, %v2307, 0.0
      %2311 = vadd.xlane.f32.xlu0 %v2310
      %v2312 = vpop.xlane.xlu0 %2311
      %v2313 = vmul.f32 %v2312, %v1048
      %v2314 = vsub.f32 %v2307, %v2313
      %v2315 = vmul.f32 %v2314, %v2314
      %v2316 = vsel %vm1044, %v2315, 0.0
      %2317 = vadd.xlane.f32.xlu0 %v2316
      %v2318 = vpop.xlane.xlu0 %2317
      %v2319 = vmul.f32 %v2318, %v1048
      %v2320 = vadd.f32 %v2319, 1e-06
      %v2321 = vrsqrt.pop %v2320
      %v2322 = vmul.f32 %v2314, %v2321
      %v2324 = vlaneseq
      %v2325 = vshrl.u32 %v2324, 7
      %v2326 = vsub.s32 0, %v2325
      %v2327 = vrot.slane %v2308, %v2326
      %v2329 = vmul.f32 %v2322, %v2327
      %v2331 = vlaneseq
      %v2332 = vshrl.u32 %v2331, 7
      %v2333 = vsub.s32 0, %v2332
      %v2334 = vrot.slane %v2309, %v2333
      %v2336 = vadd.f32 %v2329, %v2334
      %v2337 = vld [vmem:[%s19] sm:$0xff]
      %v2338 = vld [vmem:[%s19 + $0x8] sm:$0xff]
      %v2339 = vld [vmem:[%s19 + $0x10] sm:$0xff]
      %v2340 = vld [vmem:[%s19 + $0x18] sm:$0xff]
      %v2341 = vld [vmem:[%s19 + $0x20] sm:$0xff]
      %v2342 = vld [vmem:[%s19 + $0x28] sm:$0xff]
      %v2343 = vld [vmem:[%s19 + $0x30] sm:$0xff]
      %v2344 = vld [vmem:[%s19 + $0x38] sm:$0xff]
      %v2345 = vld [vmem:[%s20] sm:$0x1]
      %v2347 = vlaneseq
      %v2348 = vshrl.u32 %v2347, 7
      %v2349 = vsub.s32 0, %v2348
      %v2350 = vrot.slane %v2345, %v2349
      %v2353 = vsel %vm1044, %v2336, 0
      %2355 = vmatprep.subr.mxu0 0.0
      %2356 = vmatpush1.msra.mxu0 0.0
      %2357 = vmatprep.subr.mxu0 0.0
      %2358 = vmatpush1.msra.mxu0 0.0
      %2359 = vmatprep.subr.mxu0 0.0
      %2360 = vmatpush1.msra.mxu0 0.0
      %2361 = vmatprep.subr.mxu0 0.0
      %2362 = vmatpush1.msra.mxu0 0.0
      %2363 = vmatprep.subr.mxu0 0.0
      %2364 = vmatpush1.msra.mxu0 0.0
      %2365 = vmatprep.subr.mxu0 0.0
      %2366 = vmatpush1.msra.mxu0 0.0
      %2367 = vmatprep.subr.mxu0 0.0
      %2368 = vmatpush1.msra.mxu0 0.0
      %2369 = vmatprep.subr.mxu0 0.0
      %2370 = vmatpush1.msra.mxu0 0.0
      %2371 = vmatprep.subr.mxu0 0.0
      %2372 = vmatpush1.msra.mxu0 %v2344
      %2373 = vmatprep.subr.mxu0 0.0
      %2374 = vmatpush1.msra.mxu0 %v2343
      %2375 = vmatprep.subr.mxu0 0.0
      %2376 = vmatpush1.msra.mxu0 %v2342
      %2377 = vmatprep.subr.mxu0 0.0
      %2378 = vmatpush1.msra.mxu0 %v2341
      %2379 = vmatprep.subr.mxu0 0.0
      %2380 = vmatpush1.msra.mxu0 %v2340
      %2381 = vmatprep.subr.mxu0 0.0
      %2382 = vmatpush1.msra.mxu0 %v2339
      %2383 = vmatprep.subr.mxu0 0.0
      %2384 = vmatpush1.msra.mxu0 %v2338
      %2385 = vmatprep.subr.mxu0 0.0
      %2386 = vmatpush1.msra.mxu0 %v2337
      %2387 = vmatprep.subr.mxu0 0.0
      %2388 = vmatpush2.msra.mxu0 0.0
      %2389 = vmatprep.subr.mxu0 0.0
      %2390 = vmatpush2.msra.mxu0 0.0
      %2391 = vmatprep.subr.mxu0 0.0
      %2392 = vmatpush2.msra.mxu0 0.0
      %2393 = vmatprep.subr.mxu0 0.0
      %2394 = vmatpush2.msra.mxu0 0.0
      %2395 = vmatprep.subr.mxu0 0.0
      %2396 = vmatpush2.msra.mxu0 0.0
      %2397 = vmatprep.subr.mxu0 0.0
      %2398 = vmatpush2.msra.mxu0 0.0
      %2399 = vmatprep.subr.mxu0 0.0
      %2400 = vmatpush2.msra.mxu0 0.0
      %2401 = vmatprep.subr.mxu0 0.0
      %2402 = vmatpush2.msra.mxu0 0.0
      %2403 = vmatprep.subr.mxu0 0.0
      %2404 = vmatpush2.msra.mxu0 0.0
      %2405 = vmatprep.subr.mxu0 0.0
      %2406 = vmatpush2.msra.mxu0 0.0
      %2407 = vmatprep.subr.mxu0 0.0
      %2408 = vmatpush2.msra.mxu0 0.0
      %2409 = vmatprep.subr.mxu0 0.0
      %2410 = vmatpush2.msra.mxu0 0.0
      %2411 = vmatprep.subr.mxu0 0.0
      %2412 = vmatpush2.msra.mxu0 0.0
      %2413 = vmatprep.subr.mxu0 0.0
      %2414 = vmatpush2.msra.mxu0 0.0
      %2415 = vmatprep.subr.mxu0 0.0
      %2416 = vmatpush2.msra.mxu0 0.0
      %2417 = vmatprep.subr.mxu0 0.0
      %2418 = vmatpush2.msra.mxu0 0.0
      %2419 = vmatprep.mubr.f32.mxu0 0.0
      %2420 = vmatmul.mubr.f32.gmra.mxu0 %v2353
      %v2421 = vpop.f32.mrf.mxu0
      %v2422 = vadd.f32 %v2350, %v2421
      %v2423 = vpop.f32.mrf.mxu0
      %2424 = vdwg.mxu0
      %v2425 = vmul.f32 %v2422, 0.5
      %v2426 = vmul.f32 %v2422, 0.044715
      %v2427 = vmul.f32 %v2426, %v2422
      %v2428 = vmul.f32 %v2427, %v2422
      %v2429 = vadd.f32 %v2422, %v2428
      %v2430 = vmul.f32 %v2429, 0.7978846
      %v2431 = vtanh.pop %v2430
      %v2432 = vadd.f32 %v2431, 1.0
      %v2433 = vmul.f32 %v2425, %v2432
      %v2434 = vld [vmem:[%s21] sm:$0xff]
      %v2435 = vld [vmem:[%s21 + $0x8] sm:$0xff]
      %v2436 = vld [vmem:[%s21 + $0x10] sm:$0xff]
      %v2437 = vld [vmem:[%s21 + $0x18] sm:$0xff]
      %v2438 = vld [vmem:[%s21 + $0x20] sm:$0xff]
      %v2439 = vld [vmem:[%s21 + $0x28] sm:$0xff]
      %v2440 = vld [vmem:[%s21 + $0x30] sm:$0xff]
      %v2441 = vld [vmem:[%s21 + $0x38] sm:$0xff]
      %v2442 = vld [vmem:[%s21 + $0x40] sm:$0xff]
      %v2443 = vld [vmem:[%s21 + $0x48] sm:$0xff]
      %v2444 = vld [vmem:[%s21 + $0x50] sm:$0xff]
      %v2445 = vld [vmem:[%s21 + $0x58] sm:$0xff]
      %v2446 = vld [vmem:[%s21 + $0x60] sm:$0xff]
      %v2447 = vld [vmem:[%s21 + $0x68] sm:$0xff]
      %v2448 = vld [vmem:[%s21 + $0x70] sm:$0xff]
      %v2449 = vld [vmem:[%s21 + $0x78] sm:$0xff]
      %2450 = vmatprep.subr.mxu0 0.0
      %2451 = vmatpush1.msra.mxu0 %v2449
      %2452 = vmatprep.subr.mxu0 0.0
      %2453 = vmatpush1.msra.mxu0 %v2448
      %2454 = vmatprep.subr.mxu0 0.0
      %2455 = vmatpush1.msra.mxu0 %v2447
      %2456 = vmatprep.subr.mxu0 0.0
      %2457 = vmatpush1.msra.mxu0 %v2446
      %2458 = vmatprep.subr.mxu0 0.0
      %2459 = vmatpush1.msra.mxu0 %v2445
      %2460 = vmatprep.subr.mxu0 0.0
      %2461 = vmatpush1.msra.mxu0 %v2444
      %2462 = vmatprep.subr.mxu0 0.0
      %2463 = vmatpush1.msra.mxu0 %v2443
      %2464 = vmatprep.subr.mxu0 0.0
      %2465 = vmatpush1.msra.mxu0 %v2442
      %2466 = vmatprep.subr.mxu0 0.0
      %2467 = vmatpush1.msra.mxu0 %v2441
      %2468 = vmatprep.subr.mxu0 0.0
      %2469 = vmatpush1.msra.mxu0 %v2440
      %2470 = vmatprep.subr.mxu0 0.0
      %2471 = vmatpush1.msra.mxu0 %v2439
      %2472 = vmatprep.subr.mxu0 0.0
      %2473 = vmatpush1.msra.mxu0 %v2438
      %2474 = vmatprep.subr.mxu0 0.0
      %2475 = vmatpush1.msra.mxu0 %v2437
      %2476 = vmatprep.subr.mxu0 0.0
      %2477 = vmatpush1.msra.mxu0 %v2436
      %2478 = vmatprep.subr.mxu0 0.0
      %2479 = vmatpush1.msra.mxu0 %v2435
      %2480 = vmatprep.subr.mxu0 0.0
      %2481 = vmatpush1.msra.mxu0 %v2434
      %2482 = vmatprep.subr.mxu0 0.0
      %2483 = vmatpush2.msra.mxu0 0.0
      %2484 = vmatprep.subr.mxu0 0.0
      %2485 = vmatpush2.msra.mxu0 0.0
      %2486 = vmatprep.subr.mxu0 0.0
      %2487 = vmatpush2.msra.mxu0 0.0
      %2488 = vmatprep.subr.mxu0 0.0
      %2489 = vmatpush2.msra.mxu0 0.0
      %2490 = vmatprep.subr.mxu0 0.0
      %2491 = vmatpush2.msra.mxu0 0.0
      %2492 = vmatprep.subr.mxu0 0.0
      %2493 = vmatpush2.msra.mxu0 0.0
      %2494 = vmatprep.subr.mxu0 0.0
      %2495 = vmatpush2.msra.mxu0 0.0
      %2496 = vmatprep.subr.mxu0 0.0
      %2497 = vmatpush2.msra.mxu0 0.0
      %2498 = vmatprep.subr.mxu0 0.0
      %2499 = vmatpush2.msra.mxu0 0.0
      %2500 = vmatprep.subr.mxu0 0.0
      %2501 = vmatpush2.msra.mxu0 0.0
      %2502 = vmatprep.subr.mxu0 0.0
      %2503 = vmatpush2.msra.mxu0 0.0
      %2504 = vmatprep.subr.mxu0 0.0
      %2505 = vmatpush2.msra.mxu0 0.0
      %2506 = vmatprep.subr.mxu0 0.0
      %2507 = vmatpush2.msra.mxu0 0.0
      %2508 = vmatprep.subr.mxu0 0.0
      %2509 = vmatpush2.msra.mxu0 0.0
      %2510 = vmatprep.subr.mxu0 0.0
      %2511 = vmatpush2.msra.mxu0 0.0
      %2512 = vmatprep.subr.mxu0 0.0
      %2513 = vmatpush2.msra.mxu0 0.0
      %2514 = vmatprep.mubr.f32.mxu0 0.0
      %2515 = vmatmul.mubr.f32.gmra.mxu0 %v2433
      %v2516 = vpop.f32.mrf.mxu0
      %v2517 = vadd.f32 0.0, %v2516
      %v2518 = vpop.f32.mrf.mxu0
      %2519 = vdwg.mxu0
      %v2520 = vadd.f32 %v2307, %v2517
      %v2521 = vld [vmem:[%s22] sm:$0x1]
      %v2523 = vlaneseq
      %v2524 = vshrl.u32 %v2523, 7
      %v2525 = vsub.s32 0, %v2524
      %v2526 = vrot.slane %v2521, %v2525
      %v2528 = vadd.f32 %v2520, %v2526
      %s2529 = scalar_lea.vmem %s7, 1
      %v2530 = vld [vmem:[%s2529] sm:$0x1]
      %s2531 = scalar_lea.vmem %s8, 1
      %v2532 = vld [vmem:[%s2531] sm:$0x1]
      %v2533 = vsel %vm1044, %v2528, 0.0
      %2534 = vadd.xlane.f32.xlu0 %v2533
      %v2535 = vpop.xlane.xlu0 %2534
      %v2536 = vmul.f32 %v2535, %v1048
      %v2537 = vsub.f32 %v2528, %v2536
      %v2538 = vmul.f32 %v2537, %v2537
      %v2539 = vsel %vm1044, %v2538, 0.0
      %2540 = vadd.xlane.f32.xlu0 %v2539
      %v2541 = vpop.xlane.xlu0 %2540
      %v2542 = vmul.f32 %v2541, %v1048
      %v2543 = vadd.f32 %v2542, 1e-06
      %v2544 = vrsqrt.pop %v2543
      %v2545 = vmul.f32 %v2537, %v2544
      %v2547 = vlaneseq
      %v2548 = vshrl.u32 %v2547, 7
      %v2549 = vsub.s32 0, %v2548
      %v2550 = vrot.slane %v2530, %v2549
      %v2552 = vmul.f32 %v2545, %v2550
      %v2554 = vlaneseq
      %v2555 = vshrl.u32 %v2554, 7
      %v2556 = vsub.s32 0, %v2555
      %v2557 = vrot.slane %v2532, %v2556
      %v2559 = vadd.f32 %v2552, %v2557
      %s2560 = scalar_lea.vmem %s9, 64
      %v2561 = vld [vmem:[%s2560] sm:$0xff]
      %v2562 = vld [vmem:[%s2560 + $0x8] sm:$0xff]
      %v2563 = vld [vmem:[%s2560 + $0x10] sm:$0xff]
      %v2564 = vld [vmem:[%s2560 + $0x18] sm:$0xff]
      %v2565 = vld [vmem:[%s2560 + $0x20] sm:$0xff]
      %v2566 = vld [vmem:[%s2560 + $0x28] sm:$0xff]
      %v2567 = vld [vmem:[%s2560 + $0x30] sm:$0xff]
      %v2568 = vld [vmem:[%s2560 + $0x38] sm:$0xff]
      %s2569 = scalar_lea.vmem %s10, 1
      %v2570 = vld [vmem:[%s2569] sm:$0x1]
      %v2572 = vlaneseq
      %v2573 = vshrl.u32 %v2572, 7
      %v2574 = vsub.s32 0, %v2573
      %v2575 = vrot.slane %v2570, %v2574
      %v2578 = vsel %vm1044, %v2559, 0
      %2580 = vmatprep.subr.mxu0 0.0
      %2581 = vmatpush1.msra.mxu0 0.0
      %2582 = vmatprep.subr.mxu0 0.0
      %2583 = vmatpush1.msra.mxu0 0.0
      %2584 = vmatprep.subr.mxu0 0.0
      %2585 = vmatpush1.msra.mxu0 0.0
      %2586 = vmatprep.subr.mxu0 0.0
      %2587 = vmatpush1.msra.mxu0 0.0
      %2588 = vmatprep.subr.mxu0 0.0
      %2589 = vmatpush1.msra.mxu0 0.0
      %2590 = vmatprep.subr.mxu0 0.0
      %2591 = vmatpush1.msra.mxu0 0.0
      %2592 = vmatprep.subr.mxu0 0.0
      %2593 = vmatpush1.msra.mxu0 0.0
      %2594 = vmatprep.subr.mxu0 0.0
      %2595 = vmatpush1.msra.mxu0 0.0
      %2596 = vmatprep.subr.mxu0 0.0
      %2597 = vmatpush1.msra.mxu0 %v2568
      %2598 = vmatprep.subr.mxu0 0.0
      %2599 = vmatpush1.msra.mxu0 %v2567
      %2600 = vmatprep.subr.mxu0 0.0
      %2601 = vmatpush1.msra.mxu0 %v2566
      %2602 = vmatprep.subr.mxu0 0.0
      %2603 = vmatpush1.msra.mxu0 %v2565
      %2604 = vmatprep.subr.mxu0 0.0
      %2605 = vmatpush1.msra.mxu0 %v2564
      %2606 = vmatprep.subr.mxu0 0.0
      %2607 = vmatpush1.msra.mxu0 %v2563
      %2608 = vmatprep.subr.mxu0 0.0
      %2609 = vmatpush1.msra.mxu0 %v2562
      %2610 = vmatprep.subr.mxu0 0.0
      %2611 = vmatpush1.msra.mxu0 %v2561
      %2612 = vmatprep.subr.mxu0 0.0
      %2613 = vmatpush2.msra.mxu0 0.0
      %2614 = vmatprep.subr.mxu0 0.0
      %2615 = vmatpush2.msra.mxu0 0.0
      %2616 = vmatprep.subr.mxu0 0.0
      %2617 = vmatpush2.msra.mxu0 0.0
      %2618 = vmatprep.subr.mxu0 0.0
      %2619 = vmatpush2.msra.mxu0 0.0
      %2620 = vmatprep.subr.mxu0 0.0
      %2621 = vmatpush2.msra.mxu0 0.0
      %2622 = vmatprep.subr.mxu0 0.0
      %2623 = vmatpush2.msra.mxu0 0.0
      %2624 = vmatprep.subr.mxu0 0.0
      %2625 = vmatpush2.msra.mxu0 0.0
      %2626 = vmatprep.subr.mxu0 0.0
      %2627 = vmatpush2.msra.mxu0 0.0
      %2628 = vmatprep.subr.mxu0 0.0
      %2629 = vmatpush2.msra.mxu0 0.0
      %2630 = vmatprep.subr.mxu0 0.0
      %2631 = vmatpush2.msra.mxu0 0.0
      %2632 = vmatprep.subr.mxu0 0.0
      %2633 = vmatpush2.msra.mxu0 0.0
      %2634 = vmatprep.subr.mxu0 0.0
      %2635 = vmatpush2.msra.mxu0 0.0
      %2636 = vmatprep.subr.mxu0 0.0
      %2637 = vmatpush2.msra.mxu0 0.0
      %2638 = vmatprep.subr.mxu0 0.0
      %2639 = vmatpush2.msra.mxu0 0.0
      %2640 = vmatprep.subr.mxu0 0.0
      %2641 = vmatpush2.msra.mxu0 0.0
      %2642 = vmatprep.subr.mxu0 0.0
      %2643 = vmatpush2.msra.mxu0 0.0
      %2644 = vmatprep.mubr.f32.mxu0 0.0
      %2645 = vmatmul.mubr.f32.gmra.mxu0 %v2578
      %v2646 = vpop.f32.mrf.mxu0
      %v2647 = vadd.f32 %v2575, %v2646
      %v2648 = vpop.f32.mrf.mxu0
      %2649 = vdwg.mxu0
      %s2650 = scalar_lea.vmem %s11, 64
      %v2651 = vld [vmem:[%s2650] sm:$0xff]
      %v2652 = vld [vmem:[%s2650 + $0x8] sm:$0xff]
      %v2653 = vld [vmem:[%s2650 + $0x10] sm:$0xff]
      %v2654 = vld [vmem:[%s2650 + $0x18] sm:$0xff]
      %v2655 = vld [vmem:[%s2650 + $0x20] sm:$0xff]
      %v2656 = vld [vmem:[%s2650 + $0x28] sm:$0xff]
      %v2657 = vld [vmem:[%s2650 + $0x30] sm:$0xff]
      %v2658 = vld [vmem:[%s2650 + $0x38] sm:$0xff]
      %s2659 = scalar_lea.vmem %s12, 1
      %v2660 = vld [vmem:[%s2659] sm:$0x1]
      %v2662 = vlaneseq
      %v2663 = vshrl.u32 %v2662, 7
      %v2664 = vsub.s32 0, %v2663
      %v2665 = vrot.slane %v2660, %v2664
      %2667 = vmatprep.subr.mxu0 0.0
      %2668 = vmatpush1.msra.mxu0 0.0
      %2669 = vmatprep.subr.mxu0 0.0
      %2670 = vmatpush1.msra.mxu0 0.0
      %2671 = vmatprep.subr.mxu0 0.0
      %2672 = vmatpush1.msra.mxu0 0.0
      %2673 = vmatprep.subr.mxu0 0.0
      %2674 = vmatpush1.msra.mxu0 0.0
      %2675 = vmatprep.subr.mxu0 0.0
      %2676 = vmatpush1.msra.mxu0 0.0
      %2677 = vmatprep.subr.mxu0 0.0
      %2678 = vmatpush1.msra.mxu0 0.0
      %2679 = vmatprep.subr.mxu0 0.0
      %2680 = vmatpush1.msra.mxu0 0.0
      %2681 = vmatprep.subr.mxu0 0.0
      %2682 = vmatpush1.msra.mxu0 0.0
      %2683 = vmatprep.subr.mxu0 0.0
      %2684 = vmatpush1.msra.mxu0 %v2658
      %2685 = vmatprep.subr.mxu0 0.0
      %2686 = vmatpush1.msra.mxu0 %v2657
      %2687 = vmatprep.subr.mxu0 0.0
      %2688 = vmatpush1.msra.mxu0 %v2656
      %2689 = vmatprep.subr.mxu0 0.0
      %2690 = vmatpush1.msra.mxu0 %v2655
      %2691 = vmatprep.subr.mxu0 0.0
      %2692 = vmatpush1.msra.mxu0 %v2654
      %2693 = vmatprep.subr.mxu0 0.0
      %2694 = vmatpush1.msra.mxu0 %v2653
      %2695 = vmatprep.subr.mxu0 0.0
      %2696 = vmatpush1.msra.mxu0 %v2652
      %2697 = vmatprep.subr.mxu0 0.0
      %2698 = vmatpush1.msra.mxu0 %v2651
      %2699 = vmatprep.subr.mxu0 0.0
      %2700 = vmatpush2.msra.mxu0 0.0
      %2701 = vmatprep.subr.mxu0 0.0
      %2702 = vmatpush2.msra.mxu0 0.0
      %2703 = vmatprep.subr.mxu0 0.0
      %2704 = vmatpush2.msra.mxu0 0.0
      %2705 = vmatprep.subr.mxu0 0.0
      %2706 = vmatpush2.msra.mxu0 0.0
      %2707 = vmatprep.subr.mxu0 0.0
      %2708 = vmatpush2.msra.mxu0 0.0
      %2709 = vmatprep.subr.mxu0 0.0
      %2710 = vmatpush2.msra.mxu0 0.0
      %2711 = vmatprep.subr.mxu0 0.0
      %2712 = vmatpush2.msra.mxu0 0.0
      %2713 = vmatprep.subr.mxu0 0.0
      %2714 = vmatpush2.msra.mxu0 0.0
      %2715 = vmatprep.subr.mxu0 0.0
      %2716 = vmatpush2.msra.mxu0 0.0
      %2717 = vmatprep.subr.mxu0 0.0
      %2718 = vmatpush2.msra.mxu0 0.0
      %2719 = vmatprep.subr.mxu0 0.0
      %2720 = vmatpush2.msra.mxu0 0.0
      %2721 = vmatprep.subr.mxu0 0.0
      %2722 = vmatpush2.msra.mxu0 0.0
      %2723 = vmatprep.subr.mxu0 0.0
      %2724 = vmatpush2.msra.mxu0 0.0
      %2725 = vmatprep.subr.mxu0 0.0
      %2726 = vmatpush2.msra.mxu0 0.0
      %2727 = vmatprep.subr.mxu0 0.0
      %2728 = vmatpush2.msra.mxu0 0.0
      %2729 = vmatprep.subr.mxu0 0.0
      %2730 = vmatpush2.msra.mxu0 0.0
      %2731 = vmatprep.mubr.f32.mxu0 0.0
      %2732 = vmatmul.mubr.f32.gmra.mxu0 %v2578
      %v2733 = vpop.f32.mrf.mxu0
      %v2734 = vadd.f32 %v2665, %v2733
      %v2735 = vpop.f32.mrf.mxu0
      %2736 = vdwg.mxu0
      %s2737 = scalar_lea.vmem %s13, 64
      %v2738 = vld [vmem:[%s2737] sm:$0xff]
      %v2739 = vld [vmem:[%s2737 + $0x8] sm:$0xff]
      %v2740 = vld [vmem:[%s2737 + $0x10] sm:$0xff]
      %v2741 = vld [vmem:[%s2737 + $0x18] sm:$0xff]
      %v2742 = vld [vmem:[%s2737 + $0x20] sm:$0xff]
      %v2743 = vld [vmem:[%s2737 + $0x28] sm:$0xff]
      %v2744 = vld [vmem:[%s2737 + $0x30] sm:$0xff]
      %v2745 = vld [vmem:[%s2737 + $0x38] sm:$0xff]
      %s2746 = scalar_lea.vmem %s14, 1
      %v2747 = vld [vmem:[%s2746] sm:$0x1]
      %v2749 = vlaneseq
      %v2750 = vshrl.u32 %v2749, 7
      %v2751 = vsub.s32 0, %v2750
      %v2752 = vrot.slane %v2747, %v2751
      %2754 = vmatprep.subr.mxu0 0.0
      %2755 = vmatpush1.msra.mxu0 0.0
      %2756 = vmatprep.subr.mxu0 0.0
      %2757 = vmatpush1.msra.mxu0 0.0
      %2758 = vmatprep.subr.mxu0 0.0
      %2759 = vmatpush1.msra.mxu0 0.0
      %2760 = vmatprep.subr.mxu0 0.0
      %2761 = vmatpush1.msra.mxu0 0.0
      %2762 = vmatprep.subr.mxu0 0.0
      %2763 = vmatpush1.msra.mxu0 0.0
      %2764 = vmatprep.subr.mxu0 0.0
      %2765 = vmatpush1.msra.mxu0 0.0
      %2766 = vmatprep.subr.mxu0 0.0
      %2767 = vmatpush1.msra.mxu0 0.0
      %2768 = vmatprep.subr.mxu0 0.0
      %2769 = vmatpush1.msra.mxu0 0.0
      %2770 = vmatprep.subr.mxu0 0.0
      %2771 = vmatpush1.msra.mxu0 %v2745
      %2772 = vmatprep.subr.mxu0 0.0
      %2773 = vmatpush1.msra.mxu0 %v2744
      %2774 = vmatprep.subr.mxu0 0.0
      %2775 = vmatpush1.msra.mxu0 %v2743
      %2776 = vmatprep.subr.mxu0 0.0
      %2777 = vmatpush1.msra.mxu0 %v2742
      %2778 = vmatprep.subr.mxu0 0.0
      %2779 = vmatpush1.msra.mxu0 %v2741
      %2780 = vmatprep.subr.mxu0 0.0
      %2781 = vmatpush1.msra.mxu0 %v2740
      %2782 = vmatprep.subr.mxu0 0.0
      %2783 = vmatpush1.msra.mxu0 %v2739
      %2784 = vmatprep.subr.mxu0 0.0
      %2785 = vmatpush1.msra.mxu0 %v2738
      %2786 = vmatprep.subr.mxu0 0.0
      %2787 = vmatpush2.msra.mxu0 0.0
      %2788 = vmatprep.subr.mxu0 0.0
      %2789 = vmatpush2.msra.mxu0 0.0
      %2790 = vmatprep.subr.mxu0 0.0
      %2791 = vmatpush2.msra.mxu0 0.0
      %2792 = vmatprep.subr.mxu0 0.0
      %2793 = vmatpush2.msra.mxu0 0.0
      %2794 = vmatprep.subr.mxu0 0.0
      %2795 = vmatpush2.msra.mxu0 0.0
      %2796 = vmatprep.subr.mxu0 0.0
      %2797 = vmatpush2.msra.mxu0 0.0
      %2798 = vmatprep.subr.mxu0 0.0
      %2799 = vmatpush2.msra.mxu0 0.0
      %2800 = vmatprep.subr.mxu0 0.0
      %2801 = vmatpush2.msra.mxu0 0.0
      %2802 = vmatprep.subr.mxu0 0.0
      %2803 = vmatpush2.msra.mxu0 0.0
      %2804 = vmatprep.subr.mxu0 0.0
      %2805 = vmatpush2.msra.mxu0 0.0
      %2806 = vmatprep.subr.mxu0 0.0
      %2807 = vmatpush2.msra.mxu0 0.0
      %2808 = vmatprep.subr.mxu0 0.0
      %2809 = vmatpush2.msra.mxu0 0.0
      %2810 = vmatprep.subr.mxu0 0.0
      %2811 = vmatpush2.msra.mxu0 0.0
      %2812 = vmatprep.subr.mxu0 0.0
      %2813 = vmatpush2.msra.mxu0 0.0
      %2814 = vmatprep.subr.mxu0 0.0
      %2815 = vmatpush2.msra.mxu0 0.0
      %2816 = vmatprep.subr.mxu0 0.0
      %2817 = vmatpush2.msra.mxu0 0.0
      %2818 = vmatprep.mubr.f32.mxu0 0.0
      %2819 = vmatmul.mubr.f32.gmra.mxu0 %v2578
      %v2820 = vpop.f32.mrf.mxu0
      %v2821 = vadd.f32 %v2752, %v2820
      %v2822 = vpop.f32.mrf.mxu0
      %2823 = vdwg.mxu0
      %s2824 = scalar_lea.vmem %s15, 64
      %v2825 = vld [vmem:[%s2824] sm:$0xff]
      %v2826 = vld [vmem:[%s2824 + $0x8] sm:$0xff]
      %v2827 = vld [vmem:[%s2824 + $0x10] sm:$0xff]
      %v2828 = vld [vmem:[%s2824 + $0x18] sm:$0xff]
      %v2829 = vld [vmem:[%s2824 + $0x20] sm:$0xff]
      %v2830 = vld [vmem:[%s2824 + $0x28] sm:$0xff]
      %v2831 = vld [vmem:[%s2824 + $0x30] sm:$0xff]
      %v2832 = vld [vmem:[%s2824 + $0x38] sm:$0xff]
      %v2834 = vsel %vm1339, %v2647, 0
      %v2837 = vsel %vm1339, %v2734, 0
      %2839 = vmatprep.subr.mxu0 0.0
      %2840 = vmatpush1.xpose.msra.mxu0 0.0
      %2841 = vmatprep.subr.mxu0 0.0
      %2842 = vmatpush1.xpose.msra.mxu0 0.0
      %2843 = vmatprep.subr.mxu0 0.0
      %2844 = vmatpush1.xpose.msra.mxu0 0.0
      %2845 = vmatprep.subr.mxu0 0.0
      %2846 = vmatpush1.xpose.msra.mxu0 0.0
      %2847 = vmatprep.subr.mxu0 0.0
      %2848 = vmatpush1.xpose.msra.mxu0 0.0
      %2849 = vmatprep.subr.mxu0 0.0
      %2850 = vmatpush1.xpose.msra.mxu0 0.0
      %2851 = vmatprep.subr.mxu0 0.0
      %2852 = vmatpush1.xpose.msra.mxu0 0.0
      %2853 = vmatprep.subr.mxu0 0.0
      %2854 = vmatpush1.xpose.msra.mxu0 0.0
      %2855 = vmatprep.subr.mxu0 0.0
      %2856 = vmatpush1.xpose.msra.mxu0 0.0
      %2857 = vmatprep.subr.mxu0 0.0
      %2858 = vmatpush1.xpose.msra.mxu0 0.0
      %2859 = vmatprep.subr.mxu0 0.0
      %2860 = vmatpush1.xpose.msra.mxu0 0.0
      %2861 = vmatprep.subr.mxu0 0.0
      %2862 = vmatpush1.xpose.msra.mxu0 0.0
      %2863 = vmatprep.subr.mxu0 0.0
      %2864 = vmatpush1.xpose.msra.mxu0 0.0
      %2865 = vmatprep.subr.mxu0 0.0
      %2866 = vmatpush1.xpose.msra.mxu0 0.0
      %2867 = vmatprep.subr.mxu0 0.0
      %2868 = vmatpush1.xpose.msra.mxu0 0.0
      %2869 = vmatprep.subr.mxu0 0.0
      %2870 = vmatpush1.xpose.msra.mxu0 %v2837
      %2871 = vmatprep.subr.mxu0 0.0
      %2872 = vmatpush2.xpose.msra.mxu0 0.0
      %2873 = vmatprep.subr.mxu0 0.0
      %2874 = vmatpush2.xpose.msra.mxu0 0.0
      %2875 = vmatprep.subr.mxu0 0.0
      %2876 = vmatpush2.xpose.msra.mxu0 0.0
      %2877 = vmatprep.subr.mxu0 0.0
      %2878 = vmatpush2.xpose.msra.mxu0 0.0
      %2879 = vmatprep.subr.mxu0 0.0
      %2880 = vmatpush2.xpose.msra.mxu0 0.0
      %2881 = vmatprep.subr.mxu0 0.0
      %2882 = vmatpush2.xpose.msra.mxu0 0.0
      %2883 = vmatprep.subr.mxu0 0.0
      %2884 = vmatpush2.xpose.msra.mxu0 0.0
      %2885 = vmatprep.subr.mxu0 0.0
      %2886 = vmatpush2.xpose.msra.mxu0 0.0
      %2887 = vmatprep.subr.mxu0 0.0
      %2888 = vmatpush2.xpose.msra.mxu0 0.0
      %2889 = vmatprep.subr.mxu0 0.0
      %2890 = vmatpush2.xpose.msra.mxu0 0.0
      %2891 = vmatprep.subr.mxu0 0.0
      %2892 = vmatpush2.xpose.msra.mxu0 0.0
      %2893 = vmatprep.subr.mxu0 0.0
      %2894 = vmatpush2.xpose.msra.mxu0 0.0
      %2895 = vmatprep.subr.mxu0 0.0
      %2896 = vmatpush2.xpose.msra.mxu0 0.0
      %2897 = vmatprep.subr.mxu0 0.0
      %2898 = vmatpush2.xpose.msra.mxu0 0.0
      %2899 = vmatprep.subr.mxu0 0.0
      %2900 = vmatpush2.xpose.msra.mxu0 0.0
      %2901 = vmatprep.subr.mxu0 0.0
      %2902 = vmatpush2.xpose.msra.mxu0 0.0
      %2903 = vmatprep.mubr.f32.mxu0 0.0
      %2904 = vmatmul.mubr.f32.gmra.mxu0 %v2834
      %v2905 = vpop.f32.mrf.mxu0
      %v2906 = vadd.f32 0.0, %v2905
      %v2907 = vpop.f32.mrf.mxu0
      %2908 = vdwg.mxu0
      %v2909 = vmul.f32 %v2906, 0.25
      %v2910 = vsel %vm1041, %v2909, -1e+30
      %v2911 = vsel %vm1418, %v2910, -inf
      %2912 = vmax.xlane.f32.xlu0 %v2911
      %v2913 = vpop.xlane.xlu0 %2912
      %v2914 = vsub.f32 %v2910, %v2913
      %v2915 = vmul.f32 %v2914, 1.442695
      %v2916 = vpow.pop %v2915
      %v2917 = vsel %vm1418, %v2916, 0.0
      %2918 = vadd.xlane.f32.xlu0 %v2917
      %v2919 = vpop.xlane.xlu0 %2918
      %v2920 = vrcp.pop %v2919
      %v2921 = vmul.f32 %v2916, %v2920
      %v2923 = vsel %vm1418, %v2921, 0
      %2925 = vmatprep.subr.mxu0 0.0
      %2926 = vmatpush1.msra.mxu0 0.0
      %2927 = vmatprep.subr.mxu0 0.0
      %2928 = vmatpush1.msra.mxu0 0.0
      %2929 = vmatprep.subr.mxu0 0.0
      %2930 = vmatpush1.msra.mxu0 0.0
      %2931 = vmatprep.subr.mxu0 0.0
      %2932 = vmatpush1.msra.mxu0 0.0
      %2933 = vmatprep.subr.mxu0 0.0
      %2934 = vmatpush1.msra.mxu0 0.0
      %2935 = vmatprep.subr.mxu0 0.0
      %2936 = vmatpush1.msra.mxu0 0.0
      %2937 = vmatprep.subr.mxu0 0.0
      %2938 = vmatpush1.msra.mxu0 0.0
      %2939 = vmatprep.subr.mxu0 0.0
      %2940 = vmatpush1.msra.mxu0 0.0
      %2941 = vmatprep.subr.mxu0 0.0
      %2942 = vmatpush1.msra.mxu0 0.0
      %2943 = vmatprep.subr.mxu0 0.0
      %2944 = vmatpush1.msra.mxu0 0.0
      %2945 = vmatprep.subr.mxu0 0.0
      %2946 = vmatpush1.msra.mxu0 0.0
      %2947 = vmatprep.subr.mxu0 0.0
      %2948 = vmatpush1.msra.mxu0 0.0
      %2949 = vmatprep.subr.mxu0 0.0
      %2950 = vmatpush1.msra.mxu0 0.0
      %2951 = vmatprep.subr.mxu0 0.0
      %2952 = vmatpush1.msra.mxu0 0.0
      %2953 = vmatprep.subr.mxu0 0.0
      %2954 = vmatpush1.msra.mxu0 0.0
      %2955 = vmatprep.subr.mxu0 0.0
      %2956 = vmatpush1.msra.mxu0 %v2821
      %2957 = vmatprep.subr.mxu0 0.0
      %2958 = vmatpush2.msra.mxu0 0.0
      %2959 = vmatprep.subr.mxu0 0.0
      %2960 = vmatpush2.msra.mxu0 0.0
      %2961 = vmatprep.subr.mxu0 0.0
      %2962 = vmatpush2.msra.mxu0 0.0
      %2963 = vmatprep.subr.mxu0 0.0
      %2964 = vmatpush2.msra.mxu0 0.0
      %2965 = vmatprep.subr.mxu0 0.0
      %2966 = vmatpush2.msra.mxu0 0.0
      %2967 = vmatprep.subr.mxu0 0.0
      %2968 = vmatpush2.msra.mxu0 0.0
      %2969 = vmatprep.subr.mxu0 0.0
      %2970 = vmatpush2.msra.mxu0 0.0
      %2971 = vmatprep.subr.mxu0 0.0
      %2972 = vmatpush2.msra.mxu0 0.0
      %2973 = vmatprep.subr.mxu0 0.0
      %2974 = vmatpush2.msra.mxu0 0.0
      %2975 = vmatprep.subr.mxu0 0.0
      %2976 = vmatpush2.msra.mxu0 0.0
      %2977 = vmatprep.subr.mxu0 0.0
      %2978 = vmatpush2.msra.mxu0 0.0
      %2979 = vmatprep.subr.mxu0 0.0
      %2980 = vmatpush2.msra.mxu0 0.0
      %2981 = vmatprep.subr.mxu0 0.0
      %2982 = vmatpush2.msra.mxu0 0.0
      %2983 = vmatprep.subr.mxu0 0.0
      %2984 = vmatpush2.msra.mxu0 0.0
      %2985 = vmatprep.subr.mxu0 0.0
      %2986 = vmatpush2.msra.mxu0 0.0
      %2987 = vmatprep.subr.mxu0 0.0
      %2988 = vmatpush2.msra.mxu0 0.0
      %2989 = vmatprep.mubr.f32.mxu0 0.0
      %2990 = vmatmul.mubr.f32.gmra.mxu0 %v2923
      %v2991 = vpop.f32.mrf.mxu0
      %v2992 = vadd.f32 0.0, %v2991
      %v2993 = vpop.f32.mrf.mxu0
      %2994 = vdwg.mxu0
      %2995 = vrot.lane.b32.xlu0 %v2647, 112
      %v2996 = vpop.permute.xlu0 %2995
      %2997 = vrot.lane.b32.xlu0 %v2734, 112
      %v2998 = vpop.permute.xlu0 %2997
      %v2999 = vsel %vm1339, %v2996, 0
      %v3001 = vsel %vm1339, %v2998, 0
      %3003 = vmatprep.subr.mxu0 0.0
      %3004 = vmatpush1.xpose.msra.mxu0 0.0
      %3005 = vmatprep.subr.mxu0 0.0
      %3006 = vmatpush1.xpose.msra.mxu0 0.0
      %3007 = vmatprep.subr.mxu0 0.0
      %3008 = vmatpush1.xpose.msra.mxu0 0.0
      %3009 = vmatprep.subr.mxu0 0.0
      %3010 = vmatpush1.xpose.msra.mxu0 0.0
      %3011 = vmatprep.subr.mxu0 0.0
      %3012 = vmatpush1.xpose.msra.mxu0 0.0
      %3013 = vmatprep.subr.mxu0 0.0
      %3014 = vmatpush1.xpose.msra.mxu0 0.0
      %3015 = vmatprep.subr.mxu0 0.0
      %3016 = vmatpush1.xpose.msra.mxu0 0.0
      %3017 = vmatprep.subr.mxu0 0.0
      %3018 = vmatpush1.xpose.msra.mxu0 0.0
      %3019 = vmatprep.subr.mxu0 0.0
      %3020 = vmatpush1.xpose.msra.mxu0 0.0
      %3021 = vmatprep.subr.mxu0 0.0
      %3022 = vmatpush1.xpose.msra.mxu0 0.0
      %3023 = vmatprep.subr.mxu0 0.0
      %3024 = vmatpush1.xpose.msra.mxu0 0.0
      %3025 = vmatprep.subr.mxu0 0.0
      %3026 = vmatpush1.xpose.msra.mxu0 0.0
      %3027 = vmatprep.subr.mxu0 0.0
      %3028 = vmatpush1.xpose.msra.mxu0 0.0
      %3029 = vmatprep.subr.mxu0 0.0
      %3030 = vmatpush1.xpose.msra.mxu0 0.0
      %3031 = vmatprep.subr.mxu0 0.0
      %3032 = vmatpush1.xpose.msra.mxu0 0.0
      %3033 = vmatprep.subr.mxu0 0.0
      %3034 = vmatpush1.xpose.msra.mxu0 %v3001
      %3035 = vmatprep.subr.mxu0 0.0
      %3036 = vmatpush2.xpose.msra.mxu0 0.0
      %3037 = vmatprep.subr.mxu0 0.0
      %3038 = vmatpush2.xpose.msra.mxu0 0.0
      %3039 = vmatprep.subr.mxu0 0.0
      %3040 = vmatpush2.xpose.msra.mxu0 0.0
      %3041 = vmatprep.subr.mxu0 0.0
      %3042 = vmatpush2.xpose.msra.mxu0 0.0
      %3043 = vmatprep.subr.mxu0 0.0
      %3044 = vmatpush2.xpose.msra.mxu0 0.0
      %3045 = vmatprep.subr.mxu0 0.0
      %3046 = vmatpush2.xpose.msra.mxu0 0.0
      %3047 = vmatprep.subr.mxu0 0.0
      %3048 = vmatpush2.xpose.msra.mxu0 0.0
      %3049 = vmatprep.subr.mxu0 0.0
      %3050 = vmatpush2.xpose.msra.mxu0 0.0
      %3051 = vmatprep.subr.mxu0 0.0
      %3052 = vmatpush2.xpose.msra.mxu0 0.0
      %3053 = vmatprep.subr.mxu0 0.0
      %3054 = vmatpush2.xpose.msra.mxu0 0.0
      %3055 = vmatprep.subr.mxu0 0.0
      %3056 = vmatpush2.xpose.msra.mxu0 0.0
      %3057 = vmatprep.subr.mxu0 0.0
      %3058 = vmatpush2.xpose.msra.mxu0 0.0
      %3059 = vmatprep.subr.mxu0 0.0
      %3060 = vmatpush2.xpose.msra.mxu0 0.0
      %3061 = vmatprep.subr.mxu0 0.0
      %3062 = vmatpush2.xpose.msra.mxu0 0.0
      %3063 = vmatprep.subr.mxu0 0.0
      %3064 = vmatpush2.xpose.msra.mxu0 0.0
      %3065 = vmatprep.subr.mxu0 0.0
      %3066 = vmatpush2.xpose.msra.mxu0 0.0
      %3067 = vmatprep.mubr.f32.mxu0 0.0
      %3068 = vmatmul.mubr.f32.gmra.mxu0 %v2999
      %v3069 = vpop.f32.mrf.mxu0
      %v3070 = vadd.f32 0.0, %v3069
      %v3071 = vpop.f32.mrf.mxu0
      %3072 = vdwg.mxu0
      %v3073 = vmul.f32 %v3070, 0.25
      %v3074 = vsel %vm1041, %v3073, -1e+30
      %v3075 = vsel %vm1418, %v3074, -inf
      %3076 = vmax.xlane.f32.xlu0 %v3075
      %v3077 = vpop.xlane.xlu0 %3076
      %v3078 = vsub.f32 %v3074, %v3077
      %v3079 = vmul.f32 %v3078, 1.442695
      %v3080 = vpow.pop %v3079
      %v3081 = vsel %vm1418, %v3080, 0.0
      %3082 = vadd.xlane.f32.xlu0 %v3081
      %v3083 = vpop.xlane.xlu0 %3082
      %v3084 = vrcp.pop %v3083
      %v3085 = vmul.f32 %v3080, %v3084
      %3087 = vrot.lane.b32.xlu0 %v2821, 112
      %v3088 = vpop.permute.xlu0 %3087
      %v3091 = vsel %vm1418, %v3085, 0
      %3093 = vmatprep.subr.mxu0 0.0
      %3094 = vmatpush1.msra.mxu0 0.0
      %3095 = vmatprep.subr.mxu0 0.0
      %3096 = vmatpush1.msra.mxu0 0.0
      %3097 = vmatprep.subr.mxu0 0.0
      %3098 = vmatpush1.msra.mxu0 0.0
      %3099 = vmatprep.subr.mxu0 0.0
      %3100 = vmatpush1.msra.mxu0 0.0
      %3101 = vmatprep.subr.mxu0 0.0
      %3102 = vmatpush1.msra.mxu0 0.0
      %3103 = vmatprep.subr.mxu0 0.0
      %3104 = vmatpush1.msra.mxu0 0.0
      %3105 = vmatprep.subr.mxu0 0.0
      %3106 = vmatpush1.msra.mxu0 0.0
      %3107 = vmatprep.subr.mxu0 0.0
      %3108 = vmatpush1.msra.mxu0 0.0
      %3109 = vmatprep.subr.mxu0 0.0
      %3110 = vmatpush1.msra.mxu0 0.0
      %3111 = vmatprep.subr.mxu0 0.0
      %3112 = vmatpush1.msra.mxu0 0.0
      %3113 = vmatprep.subr.mxu0 0.0
      %3114 = vmatpush1.msra.mxu0 0.0
      %3115 = vmatprep.subr.mxu0 0.0
      %3116 = vmatpush1.msra.mxu0 0.0
      %3117 = vmatprep.subr.mxu0 0.0
      %3118 = vmatpush1.msra.mxu0 0.0
      %3119 = vmatprep.subr.mxu0 0.0
      %3120 = vmatpush1.msra.mxu0 0.0
      %3121 = vmatprep.subr.mxu0 0.0
      %3122 = vmatpush1.msra.mxu0 0.0
      %3123 = vmatprep.subr.mxu0 0.0
      %3124 = vmatpush1.msra.mxu0 %v3088
      %3125 = vmatprep.subr.mxu0 0.0
      %3126 = vmatpush2.msra.mxu0 0.0
      %3127 = vmatprep.subr.mxu0 0.0
      %3128 = vmatpush2.msra.mxu0 0.0
      %3129 = vmatprep.subr.mxu0 0.0
      %3130 = vmatpush2.msra.mxu0 0.0
      %3131 = vmatprep.subr.mxu0 0.0
      %3132 = vmatpush2.msra.mxu0 0.0
      %3133 = vmatprep.subr.mxu0 0.0
      %3134 = vmatpush2.msra.mxu0 0.0
      %3135 = vmatprep.subr.mxu0 0.0
      %3136 = vmatpush2.msra.mxu0 0.0
      %3137 = vmatprep.subr.mxu0 0.0
      %3138 = vmatpush2.msra.mxu0 0.0
      %3139 = vmatprep.subr.mxu0 0.0
      %3140 = vmatpush2.msra.mxu0 0.0
      %3141 = vmatprep.subr.mxu0 0.0
      %3142 = vmatpush2.msra.mxu0 0.0
      %3143 = vmatprep.subr.mxu0 0.0
      %3144 = vmatpush2.msra.mxu0 0.0
      %3145 = vmatprep.subr.mxu0 0.0
      %3146 = vmatpush2.msra.mxu0 0.0
      %3147 = vmatprep.subr.mxu0 0.0
      %3148 = vmatpush2.msra.mxu0 0.0
      %3149 = vmatprep.subr.mxu0 0.0
      %3150 = vmatpush2.msra.mxu0 0.0
      %3151 = vmatprep.subr.mxu0 0.0
      %3152 = vmatpush2.msra.mxu0 0.0
      %3153 = vmatprep.subr.mxu0 0.0
      %3154 = vmatpush2.msra.mxu0 0.0
      %3155 = vmatprep.subr.mxu0 0.0
      %3156 = vmatpush2.msra.mxu0 0.0
      %3157 = vmatprep.mubr.f32.mxu0 0.0
      %3158 = vmatmul.mubr.f32.gmra.mxu0 %v3091
      %v3159 = vpop.f32.mrf.mxu0
      %v3160 = vadd.f32 0.0, %v3159
      %v3161 = vpop.f32.mrf.mxu0
      %3162 = vdwg.mxu0
      %v3164 = vsel %vm1339, %v3160, 0
      %3166 = vmatprep.subr.mxu0 0.0
      %3167 = vmatpush1.msra.mxu0 0.0
      %3168 = vmatprep.subr.mxu0 0.0
      %3169 = vmatpush1.msra.mxu0 0.0
      %3170 = vmatprep.subr.mxu0 0.0
      %3171 = vmatpush1.msra.mxu0 0.0
      %3172 = vmatprep.subr.mxu0 0.0
      %3173 = vmatpush1.msra.mxu0 0.0
      %3174 = vmatprep.subr.mxu0 0.0
      %3175 = vmatpush1.msra.mxu0 0.0
      %3176 = vmatprep.subr.mxu0 0.0
      %3177 = vmatpush1.msra.mxu0 0.0
      %3178 = vmatprep.subr.mxu0 0.0
      %3179 = vmatpush1.msra.mxu0 0.0
      %3180 = vmatprep.subr.mxu0 0.0
      %3181 = vmatpush1.msra.mxu0 0.0
      %3182 = vmatprep.subr.mxu0 0.0
      %3183 = vmatpush1.msra.mxu0 0.0
      %3184 = vmatprep.subr.mxu0 0.0
      %3185 = vmatpush1.msra.mxu0 0.0
      %3186 = vmatprep.subr.mxu0 0.0
      %3187 = vmatpush1.msra.mxu0 0.0
      %3188 = vmatprep.subr.mxu0 0.0
      %3189 = vmatpush1.msra.mxu0 0.0
      %3190 = vmatprep.subr.mxu0 0.0
      %3191 = vmatpush1.msra.mxu0 0.0
      %3192 = vmatprep.subr.mxu0 0.0
      %3193 = vmatpush1.msra.mxu0 0.0
      %3194 = vmatprep.subr.mxu0 0.0
      %3195 = vmatpush1.msra.mxu0 %v2828
      %3196 = vmatprep.subr.mxu0 0.0
      %3197 = vmatpush1.msra.mxu0 %v2827
      %3198 = vmatprep.subr.mxu0 0.0
      %3199 = vmatpush2.msra.mxu0 0.0
      %3200 = vmatprep.subr.mxu0 0.0
      %3201 = vmatpush2.msra.mxu0 0.0
      %3202 = vmatprep.subr.mxu0 0.0
      %3203 = vmatpush2.msra.mxu0 0.0
      %3204 = vmatprep.subr.mxu0 0.0
      %3205 = vmatpush2.msra.mxu0 0.0
      %3206 = vmatprep.subr.mxu0 0.0
      %3207 = vmatpush2.msra.mxu0 0.0
      %3208 = vmatprep.subr.mxu0 0.0
      %3209 = vmatpush2.msra.mxu0 0.0
      %3210 = vmatprep.subr.mxu0 0.0
      %3211 = vmatpush2.msra.mxu0 0.0
      %3212 = vmatprep.subr.mxu0 0.0
      %3213 = vmatpush2.msra.mxu0 0.0
      %3214 = vmatprep.subr.mxu0 0.0
      %3215 = vmatpush2.msra.mxu0 0.0
      %3216 = vmatprep.subr.mxu0 0.0
      %3217 = vmatpush2.msra.mxu0 0.0
      %3218 = vmatprep.subr.mxu0 0.0
      %3219 = vmatpush2.msra.mxu0 0.0
      %3220 = vmatprep.subr.mxu0 0.0
      %3221 = vmatpush2.msra.mxu0 0.0
      %3222 = vmatprep.subr.mxu0 0.0
      %3223 = vmatpush2.msra.mxu0 0.0
      %3224 = vmatprep.subr.mxu0 0.0
      %3225 = vmatpush2.msra.mxu0 0.0
      %3226 = vmatprep.subr.mxu0 0.0
      %3227 = vmatpush2.msra.mxu0 0.0
      %3228 = vmatprep.subr.mxu0 0.0
      %3229 = vmatpush2.msra.mxu0 0.0
      %3230 = vmatprep.mubr.f32.mxu0 0.0
      %3231 = vmatmul.mubr.f32.gmra.mxu0 %v3164
      %v3232 = vpop.f32.mrf.mxu0
      %v3233 = vadd.f32 0.0, %v3232
      %v3234 = vpop.f32.mrf.mxu0
      %3235 = vdwg.mxu0
      %v3237 = vsel %vm1339, %v2992, 0
      %3239 = vmatprep.subr.mxu0 0.0
      %3240 = vmatpush1.msra.mxu0 0.0
      %3241 = vmatprep.subr.mxu0 0.0
      %3242 = vmatpush1.msra.mxu0 0.0
      %3243 = vmatprep.subr.mxu0 0.0
      %3244 = vmatpush1.msra.mxu0 0.0
      %3245 = vmatprep.subr.mxu0 0.0
      %3246 = vmatpush1.msra.mxu0 0.0
      %3247 = vmatprep.subr.mxu0 0.0
      %3248 = vmatpush1.msra.mxu0 0.0
      %3249 = vmatprep.subr.mxu0 0.0
      %3250 = vmatpush1.msra.mxu0 0.0
      %3251 = vmatprep.subr.mxu0 0.0
      %3252 = vmatpush1.msra.mxu0 0.0
      %3253 = vmatprep.subr.mxu0 0.0
      %3254 = vmatpush1.msra.mxu0 0.0
      %3255 = vmatprep.subr.mxu0 0.0
      %3256 = vmatpush1.msra.mxu0 0.0
      %3257 = vmatprep.subr.mxu0 0.0
      %3258 = vmatpush1.msra.mxu0 0.0
      %3259 = vmatprep.subr.mxu0 0.0
      %3260 = vmatpush1.msra.mxu0 0.0
      %3261 = vmatprep.subr.mxu0 0.0
      %3262 = vmatpush1.msra.mxu0 0.0
      %3263 = vmatprep.subr.mxu0 0.0
      %3264 = vmatpush1.msra.mxu0 0.0
      %3265 = vmatprep.subr.mxu0 0.0
      %3266 = vmatpush1.msra.mxu0 0.0
      %3267 = vmatprep.subr.mxu0 0.0
      %3268 = vmatpush1.msra.mxu0 %v2826
      %3269 = vmatprep.subr.mxu0 0.0
      %3270 = vmatpush1.msra.mxu0 %v2825
      %3271 = vmatprep.subr.mxu0 0.0
      %3272 = vmatpush2.msra.mxu0 0.0
      %3273 = vmatprep.subr.mxu0 0.0
      %3274 = vmatpush2.msra.mxu0 0.0
      %3275 = vmatprep.subr.mxu0 0.0
      %3276 = vmatpush2.msra.mxu0 0.0
      %3277 = vmatprep.subr.mxu0 0.0
      %3278 = vmatpush2.msra.mxu0 0.0
      %3279 = vmatprep.subr.mxu0 0.0
      %3280 = vmatpush2.msra.mxu0 0.0
      %3281 = vmatprep.subr.mxu0 0.0
      %3282 = vmatpush2.msra.mxu0 0.0
      %3283 = vmatprep.subr.mxu0 0.0
      %3284 = vmatpush2.msra.mxu0 0.0
      %3285 = vmatprep.subr.mxu0 0.0
      %3286 = vmatpush2.msra.mxu0 0.0
      %3287 = vmatprep.subr.mxu0 0.0
      %3288 = vmatpush2.msra.mxu0 0.0
      %3289 = vmatprep.subr.mxu0 0.0
      %3290 = vmatpush2.msra.mxu0 0.0
      %3291 = vmatprep.subr.mxu0 0.0
      %3292 = vmatpush2.msra.mxu0 0.0
      %3293 = vmatprep.subr.mxu0 0.0
      %3294 = vmatpush2.msra.mxu0 0.0
      %3295 = vmatprep.subr.mxu0 0.0
      %3296 = vmatpush2.msra.mxu0 0.0
      %3297 = vmatprep.subr.mxu0 0.0
      %3298 = vmatpush2.msra.mxu0 0.0
      %3299 = vmatprep.subr.mxu0 0.0
      %3300 = vmatpush2.msra.mxu0 0.0
      %3301 = vmatprep.subr.mxu0 0.0
      %3302 = vmatpush2.msra.mxu0 0.0
      %3303 = vmatprep.mubr.f32.mxu0 0.0
      %3304 = vmatmul.mubr.f32.gmra.mxu0 %v3237
      %v3305 = vpop.f32.mrf.mxu0
      %v3306 = vadd.f32 %v3233, %v3305
      %v3307 = vpop.f32.mrf.mxu0
      %3308 = vdwg.mxu0
      %3309 = vrot.lane.b32.xlu0 %v2647, 96
      %v3310 = vpop.permute.xlu0 %3309
      %3311 = vrot.lane.b32.xlu0 %v2734, 96
      %v3312 = vpop.permute.xlu0 %3311
      %v3313 = vsel %vm1339, %v3310, 0
      %v3315 = vsel %vm1339, %v3312, 0
      %3317 = vmatprep.subr.mxu0 0.0
      %3318 = vmatpush1.xpose.msra.mxu0 0.0
      %3319 = vmatprep.subr.mxu0 0.0
      %3320 = vmatpush1.xpose.msra.mxu0 0.0
      %3321 = vmatprep.subr.mxu0 0.0
      %3322 = vmatpush1.xpose.msra.mxu0 0.0
      %3323 = vmatprep.subr.mxu0 0.0
      %3324 = vmatpush1.xpose.msra.mxu0 0.0
      %3325 = vmatprep.subr.mxu0 0.0
      %3326 = vmatpush1.xpose.msra.mxu0 0.0
      %3327 = vmatprep.subr.mxu0 0.0
      %3328 = vmatpush1.xpose.msra.mxu0 0.0
      %3329 = vmatprep.subr.mxu0 0.0
      %3330 = vmatpush1.xpose.msra.mxu0 0.0
      %3331 = vmatprep.subr.mxu0 0.0
      %3332 = vmatpush1.xpose.msra.mxu0 0.0
      %3333 = vmatprep.subr.mxu0 0.0
      %3334 = vmatpush1.xpose.msra.mxu0 0.0
      %3335 = vmatprep.subr.mxu0 0.0
      %3336 = vmatpush1.xpose.msra.mxu0 0.0
      %3337 = vmatprep.subr.mxu0 0.0
      %3338 = vmatpush1.xpose.msra.mxu0 0.0
      %3339 = vmatprep.subr.mxu0 0.0
      %3340 = vmatpush1.xpose.msra.mxu0 0.0
      %3341 = vmatprep.subr.mxu0 0.0
      %3342 = vmatpush1.xpose.msra.mxu0 0.0
      %3343 = vmatprep.subr.mxu0 0.0
      %3344 = vmatpush1.xpose.msra.mxu0 0.0
      %3345 = vmatprep.subr.mxu0 0.0
      %3346 = vmatpush1.xpose.msra.mxu0 0.0
      %3347 = vmatprep.subr.mxu0 0.0
      %3348 = vmatpush1.xpose.msra.mxu0 %v3315
      %3349 = vmatprep.subr.mxu0 0.0
      %3350 = vmatpush2.xpose.msra.mxu0 0.0
      %3351 = vmatprep.subr.mxu0 0.0
      %3352 = vmatpush2.xpose.msra.mxu0 0.0
      %3353 = vmatprep.subr.mxu0 0.0
      %3354 = vmatpush2.xpose.msra.mxu0 0.0
      %3355 = vmatprep.subr.mxu0 0.0
      %3356 = vmatpush2.xpose.msra.mxu0 0.0
      %3357 = vmatprep.subr.mxu0 0.0
      %3358 = vmatpush2.xpose.msra.mxu0 0.0
      %3359 = vmatprep.subr.mxu0 0.0
      %3360 = vmatpush2.xpose.msra.mxu0 0.0
      %3361 = vmatprep.subr.mxu0 0.0
      %3362 = vmatpush2.xpose.msra.mxu0 0.0
      %3363 = vmatprep.subr.mxu0 0.0
      %3364 = vmatpush2.xpose.msra.mxu0 0.0
      %3365 = vmatprep.subr.mxu0 0.0
      %3366 = vmatpush2.xpose.msra.mxu0 0.0
      %3367 = vmatprep.subr.mxu0 0.0
      %3368 = vmatpush2.xpose.msra.mxu0 0.0
      %3369 = vmatprep.subr.mxu0 0.0
      %3370 = vmatpush2.xpose.msra.mxu0 0.0
      %3371 = vmatprep.subr.mxu0 0.0
      %3372 = vmatpush2.xpose.msra.mxu0 0.0
      %3373 = vmatprep.subr.mxu0 0.0
      %3374 = vmatpush2.xpose.msra.mxu0 0.0
      %3375 = vmatprep.subr.mxu0 0.0
      %3376 = vmatpush2.xpose.msra.mxu0 0.0
      %3377 = vmatprep.subr.mxu0 0.0
      %3378 = vmatpush2.xpose.msra.mxu0 0.0
      %3379 = vmatprep.subr.mxu0 0.0
      %3380 = vmatpush2.xpose.msra.mxu0 0.0
      %3381 = vmatprep.mubr.f32.mxu0 0.0
      %3382 = vmatmul.mubr.f32.gmra.mxu0 %v3313
      %v3383 = vpop.f32.mrf.mxu0
      %v3384 = vadd.f32 0.0, %v3383
      %v3385 = vpop.f32.mrf.mxu0
      %3386 = vdwg.mxu0
      %v3387 = vmul.f32 %v3384, 0.25
      %v3388 = vsel %vm1041, %v3387, -1e+30
      %v3389 = vsel %vm1418, %v3388, -inf
      %3390 = vmax.xlane.f32.xlu0 %v3389
      %v3391 = vpop.xlane.xlu0 %3390
      %v3392 = vsub.f32 %v3388, %v3391
      %v3393 = vmul.f32 %v3392, 1.442695
      %v3394 = vpow.pop %v3393
      %v3395 = vsel %vm1418, %v3394, 0.0
      %3396 = vadd.xlane.f32.xlu0 %v3395
      %v3397 = vpop.xlane.xlu0 %3396
      %v3398 = vrcp.pop %v3397
      %v3399 = vmul.f32 %v3394, %v3398
      %3400 = vrot.lane.b32.xlu0 %v2821, 96
      %v3401 = vpop.permute.xlu0 %3400
      %v3404 = vsel %vm1418, %v3399, 0
      %3406 = vmatprep.subr.mxu0 0.0
      %3407 = vmatpush1.msra.mxu0 0.0
      %3408 = vmatprep.subr.mxu0 0.0
      %3409 = vmatpush1.msra.mxu0 0.0
      %3410 = vmatprep.subr.mxu0 0.0
      %3411 = vmatpush1.msra.mxu0 0.0
      %3412 = vmatprep.subr.mxu0 0.0
      %3413 = vmatpush1.msra.mxu0 0.0
      %3414 = vmatprep.subr.mxu0 0.0
      %3415 = vmatpush1.msra.mxu0 0.0
      %3416 = vmatprep.subr.mxu0 0.0
      %3417 = vmatpush1.msra.mxu0 0.0
      %3418 = vmatprep.subr.mxu0 0.0
      %3419 = vmatpush1.msra.mxu0 0.0
      %3420 = vmatprep.subr.mxu0 0.0
      %3421 = vmatpush1.msra.mxu0 0.0
      %3422 = vmatprep.subr.mxu0 0.0
      %3423 = vmatpush1.msra.mxu0 0.0
      %3424 = vmatprep.subr.mxu0 0.0
      %3425 = vmatpush1.msra.mxu0 0.0
      %3426 = vmatprep.subr.mxu0 0.0
      %3427 = vmatpush1.msra.mxu0 0.0
      %3428 = vmatprep.subr.mxu0 0.0
      %3429 = vmatpush1.msra.mxu0 0.0
      %3430 = vmatprep.subr.mxu0 0.0
      %3431 = vmatpush1.msra.mxu0 0.0
      %3432 = vmatprep.subr.mxu0 0.0
      %3433 = vmatpush1.msra.mxu0 0.0
      %3434 = vmatprep.subr.mxu0 0.0
      %3435 = vmatpush1.msra.mxu0 0.0
      %3436 = vmatprep.subr.mxu0 0.0
      %3437 = vmatpush1.msra.mxu0 %v3401
      %3438 = vmatprep.subr.mxu0 0.0
      %3439 = vmatpush2.msra.mxu0 0.0
      %3440 = vmatprep.subr.mxu0 0.0
      %3441 = vmatpush2.msra.mxu0 0.0
      %3442 = vmatprep.subr.mxu0 0.0
      %3443 = vmatpush2.msra.mxu0 0.0
      %3444 = vmatprep.subr.mxu0 0.0
      %3445 = vmatpush2.msra.mxu0 0.0
      %3446 = vmatprep.subr.mxu0 0.0
      %3447 = vmatpush2.msra.mxu0 0.0
      %3448 = vmatprep.subr.mxu0 0.0
      %3449 = vmatpush2.msra.mxu0 0.0
      %3450 = vmatprep.subr.mxu0 0.0
      %3451 = vmatpush2.msra.mxu0 0.0
      %3452 = vmatprep.subr.mxu0 0.0
      %3453 = vmatpush2.msra.mxu0 0.0
      %3454 = vmatprep.subr.mxu0 0.0
      %3455 = vmatpush2.msra.mxu0 0.0
      %3456 = vmatprep.subr.mxu0 0.0
      %3457 = vmatpush2.msra.mxu0 0.0
      %3458 = vmatprep.subr.mxu0 0.0
      %3459 = vmatpush2.msra.mxu0 0.0
      %3460 = vmatprep.subr.mxu0 0.0
      %3461 = vmatpush2.msra.mxu0 0.0
      %3462 = vmatprep.subr.mxu0 0.0
      %3463 = vmatpush2.msra.mxu0 0.0
      %3464 = vmatprep.subr.mxu0 0.0
      %3465 = vmatpush2.msra.mxu0 0.0
      %3466 = vmatprep.subr.mxu0 0.0
      %3467 = vmatpush2.msra.mxu0 0.0
      %3468 = vmatprep.subr.mxu0 0.0
      %3469 = vmatpush2.msra.mxu0 0.0
      %3470 = vmatprep.mubr.f32.mxu0 0.0
      %3471 = vmatmul.mubr.f32.gmra.mxu0 %v3404
      %v3472 = vpop.f32.mrf.mxu0
      %v3473 = vadd.f32 0.0, %v3472
      %v3474 = vpop.f32.mrf.mxu0
      %3475 = vdwg.mxu0
      %v3477 = vsel %vm1339, %v3473, 0
      %3479 = vmatprep.subr.mxu0 0.0
      %3480 = vmatpush1.msra.mxu0 0.0
      %3481 = vmatprep.subr.mxu0 0.0
      %3482 = vmatpush1.msra.mxu0 0.0
      %3483 = vmatprep.subr.mxu0 0.0
      %3484 = vmatpush1.msra.mxu0 0.0
      %3485 = vmatprep.subr.mxu0 0.0
      %3486 = vmatpush1.msra.mxu0 0.0
      %3487 = vmatprep.subr.mxu0 0.0
      %3488 = vmatpush1.msra.mxu0 0.0
      %3489 = vmatprep.subr.mxu0 0.0
      %3490 = vmatpush1.msra.mxu0 0.0
      %3491 = vmatprep.subr.mxu0 0.0
      %3492 = vmatpush1.msra.mxu0 0.0
      %3493 = vmatprep.subr.mxu0 0.0
      %3494 = vmatpush1.msra.mxu0 0.0
      %3495 = vmatprep.subr.mxu0 0.0
      %3496 = vmatpush1.msra.mxu0 0.0
      %3497 = vmatprep.subr.mxu0 0.0
      %3498 = vmatpush1.msra.mxu0 0.0
      %3499 = vmatprep.subr.mxu0 0.0
      %3500 = vmatpush1.msra.mxu0 0.0
      %3501 = vmatprep.subr.mxu0 0.0
      %3502 = vmatpush1.msra.mxu0 0.0
      %3503 = vmatprep.subr.mxu0 0.0
      %3504 = vmatpush1.msra.mxu0 0.0
      %3505 = vmatprep.subr.mxu0 0.0
      %3506 = vmatpush1.msra.mxu0 0.0
      %3507 = vmatprep.subr.mxu0 0.0
      %3508 = vmatpush1.msra.mxu0 %v2830
      %3509 = vmatprep.subr.mxu0 0.0
      %3510 = vmatpush1.msra.mxu0 %v2829
      %3511 = vmatprep.subr.mxu0 0.0
      %3512 = vmatpush2.msra.mxu0 0.0
      %3513 = vmatprep.subr.mxu0 0.0
      %3514 = vmatpush2.msra.mxu0 0.0
      %3515 = vmatprep.subr.mxu0 0.0
      %3516 = vmatpush2.msra.mxu0 0.0
      %3517 = vmatprep.subr.mxu0 0.0
      %3518 = vmatpush2.msra.mxu0 0.0
      %3519 = vmatprep.subr.mxu0 0.0
      %3520 = vmatpush2.msra.mxu0 0.0
      %3521 = vmatprep.subr.mxu0 0.0
      %3522 = vmatpush2.msra.mxu0 0.0
      %3523 = vmatprep.subr.mxu0 0.0
      %3524 = vmatpush2.msra.mxu0 0.0
      %3525 = vmatprep.subr.mxu0 0.0
      %3526 = vmatpush2.msra.mxu0 0.0
      %3527 = vmatprep.subr.mxu0 0.0
      %3528 = vmatpush2.msra.mxu0 0.0
      %3529 = vmatprep.subr.mxu0 0.0
      %3530 = vmatpush2.msra.mxu0 0.0
      %3531 = vmatprep.subr.mxu0 0.0
      %3532 = vmatpush2.msra.mxu0 0.0
      %3533 = vmatprep.subr.mxu0 0.0
      %3534 = vmatpush2.msra.mxu0 0.0
      %3535 = vmatprep.subr.mxu0 0.0
      %3536 = vmatpush2.msra.mxu0 0.0
      %3537 = vmatprep.subr.mxu0 0.0
      %3538 = vmatpush2.msra.mxu0 0.0
      %3539 = vmatprep.subr.mxu0 0.0
      %3540 = vmatpush2.msra.mxu0 0.0
      %3541 = vmatprep.subr.mxu0 0.0
      %3542 = vmatpush2.msra.mxu0 0.0
      %3543 = vmatprep.mubr.f32.mxu0 0.0
      %3544 = vmatmul.mubr.f32.gmra.mxu0 %v3477
      %v3545 = vpop.f32.mrf.mxu0
      %v3546 = vadd.f32 0.0, %v3545
      %v3547 = vpop.f32.mrf.mxu0
      %3548 = vdwg.mxu0
      %v3549 = vadd.f32 %v3306, %v3546
      %3550 = vrot.lane.b32.xlu0 %v2647, 80
      %v3551 = vpop.permute.xlu0 %3550
      %3552 = vrot.lane.b32.xlu0 %v2734, 80
      %v3553 = vpop.permute.xlu0 %3552
      %v3554 = vsel %vm1339, %v3551, 0
      %v3556 = vsel %vm1339, %v3553, 0
      %3558 = vmatprep.subr.mxu0 0.0
      %3559 = vmatpush1.xpose.msra.mxu0 0.0
      %3560 = vmatprep.subr.mxu0 0.0
      %3561 = vmatpush1.xpose.msra.mxu0 0.0
      %3562 = vmatprep.subr.mxu0 0.0
      %3563 = vmatpush1.xpose.msra.mxu0 0.0
      %3564 = vmatprep.subr.mxu0 0.0
      %3565 = vmatpush1.xpose.msra.mxu0 0.0
      %3566 = vmatprep.subr.mxu0 0.0
      %3567 = vmatpush1.xpose.msra.mxu0 0.0
      %3568 = vmatprep.subr.mxu0 0.0
      %3569 = vmatpush1.xpose.msra.mxu0 0.0
      %3570 = vmatprep.subr.mxu0 0.0
      %3571 = vmatpush1.xpose.msra.mxu0 0.0
      %3572 = vmatprep.subr.mxu0 0.0
      %3573 = vmatpush1.xpose.msra.mxu0 0.0
      %3574 = vmatprep.subr.mxu0 0.0
      %3575 = vmatpush1.xpose.msra.mxu0 0.0
      %3576 = vmatprep.subr.mxu0 0.0
      %3577 = vmatpush1.xpose.msra.mxu0 0.0
      %3578 = vmatprep.subr.mxu0 0.0
      %3579 = vmatpush1.xpose.msra.mxu0 0.0
      %3580 = vmatprep.subr.mxu0 0.0
      %3581 = vmatpush1.xpose.msra.mxu0 0.0
      %3582 = vmatprep.subr.mxu0 0.0
      %3583 = vmatpush1.xpose.msra.mxu0 0.0
      %3584 = vmatprep.subr.mxu0 0.0
      %3585 = vmatpush1.xpose.msra.mxu0 0.0
      %3586 = vmatprep.subr.mxu0 0.0
      %3587 = vmatpush1.xpose.msra.mxu0 0.0
      %3588 = vmatprep.subr.mxu0 0.0
      %3589 = vmatpush1.xpose.msra.mxu0 %v3556
      %3590 = vmatprep.subr.mxu0 0.0
      %3591 = vmatpush2.xpose.msra.mxu0 0.0
      %3592 = vmatprep.subr.mxu0 0.0
      %3593 = vmatpush2.xpose.msra.mxu0 0.0
      %3594 = vmatprep.subr.mxu0 0.0
      %3595 = vmatpush2.xpose.msra.mxu0 0.0
      %3596 = vmatprep.subr.mxu0 0.0
      %3597 = vmatpush2.xpose.msra.mxu0 0.0
      %3598 = vmatprep.subr.mxu0 0.0
      %3599 = vmatpush2.xpose.msra.mxu0 0.0
      %3600 = vmatprep.subr.mxu0 0.0
      %3601 = vmatpush2.xpose.msra.mxu0 0.0
      %3602 = vmatprep.subr.mxu0 0.0
      %3603 = vmatpush2.xpose.msra.mxu0 0.0
      %3604 = vmatprep.subr.mxu0 0.0
      %3605 = vmatpush2.xpose.msra.mxu0 0.0
      %3606 = vmatprep.subr.mxu0 0.0
      %3607 = vmatpush2.xpose.msra.mxu0 0.0
      %3608 = vmatprep.subr.mxu0 0.0
      %3609 = vmatpush2.xpose.msra.mxu0 0.0
      %3610 = vmatprep.subr.mxu0 0.0
      %3611 = vmatpush2.xpose.msra.mxu0 0.0
      %3612 = vmatprep.subr.mxu0 0.0
      %3613 = vmatpush2.xpose.msra.mxu0 0.0
      %3614 = vmatprep.subr.mxu0 0.0
      %3615 = vmatpush2.xpose.msra.mxu0 0.0
      %3616 = vmatprep.subr.mxu0 0.0
      %3617 = vmatpush2.xpose.msra.mxu0 0.0
      %3618 = vmatprep.subr.mxu0 0.0
      %3619 = vmatpush2.xpose.msra.mxu0 0.0
      %3620 = vmatprep.subr.mxu0 0.0
      %3621 = vmatpush2.xpose.msra.mxu0 0.0
      %3622 = vmatprep.mubr.f32.mxu0 0.0
      %3623 = vmatmul.mubr.f32.gmra.mxu0 %v3554
      %v3624 = vpop.f32.mrf.mxu0
      %v3625 = vadd.f32 0.0, %v3624
      %v3626 = vpop.f32.mrf.mxu0
      %3627 = vdwg.mxu0
      %v3628 = vmul.f32 %v3625, 0.25
      %v3629 = vsel %vm1041, %v3628, -1e+30
      %v3630 = vsel %vm1418, %v3629, -inf
      %3631 = vmax.xlane.f32.xlu0 %v3630
      %v3632 = vpop.xlane.xlu0 %3631
      %v3633 = vsub.f32 %v3629, %v3632
      %v3634 = vmul.f32 %v3633, 1.442695
      %v3635 = vpow.pop %v3634
      %v3636 = vsel %vm1418, %v3635, 0.0
      %3637 = vadd.xlane.f32.xlu0 %v3636
      %v3638 = vpop.xlane.xlu0 %3637
      %v3639 = vrcp.pop %v3638
      %v3640 = vmul.f32 %v3635, %v3639
      %3641 = vrot.lane.b32.xlu0 %v2821, 80
      %v3642 = vpop.permute.xlu0 %3641
      %v3645 = vsel %vm1418, %v3640, 0
      %3647 = vmatprep.subr.mxu0 0.0
      %3648 = vmatpush1.msra.mxu0 0.0
      %3649 = vmatprep.subr.mxu0 0.0
      %3650 = vmatpush1.msra.mxu0 0.0
      %3651 = vmatprep.subr.mxu0 0.0
      %3652 = vmatpush1.msra.mxu0 0.0
      %3653 = vmatprep.subr.mxu0 0.0
      %3654 = vmatpush1.msra.mxu0 0.0
      %3655 = vmatprep.subr.mxu0 0.0
      %3656 = vmatpush1.msra.mxu0 0.0
      %3657 = vmatprep.subr.mxu0 0.0
      %3658 = vmatpush1.msra.mxu0 0.0
      %3659 = vmatprep.subr.mxu0 0.0
      %3660 = vmatpush1.msra.mxu0 0.0
      %3661 = vmatprep.subr.mxu0 0.0
      %3662 = vmatpush1.msra.mxu0 0.0
      %3663 = vmatprep.subr.mxu0 0.0
      %3664 = vmatpush1.msra.mxu0 0.0
      %3665 = vmatprep.subr.mxu0 0.0
      %3666 = vmatpush1.msra.mxu0 0.0
      %3667 = vmatprep.subr.mxu0 0.0
      %3668 = vmatpush1.msra.mxu0 0.0
      %3669 = vmatprep.subr.mxu0 0.0
      %3670 = vmatpush1.msra.mxu0 0.0
      %3671 = vmatprep.subr.mxu0 0.0
      %3672 = vmatpush1.msra.mxu0 0.0
      %3673 = vmatprep.subr.mxu0 0.0
      %3674 = vmatpush1.msra.mxu0 0.0
      %3675 = vmatprep.subr.mxu0 0.0
      %3676 = vmatpush1.msra.mxu0 0.0
      %3677 = vmatprep.subr.mxu0 0.0
      %3678 = vmatpush1.msra.mxu0 %v3642
      %3679 = vmatprep.subr.mxu0 0.0
      %3680 = vmatpush2.msra.mxu0 0.0
      %3681 = vmatprep.subr.mxu0 0.0
      %3682 = vmatpush2.msra.mxu0 0.0
      %3683 = vmatprep.subr.mxu0 0.0
      %3684 = vmatpush2.msra.mxu0 0.0
      %3685 = vmatprep.subr.mxu0 0.0
      %3686 = vmatpush2.msra.mxu0 0.0
      %3687 = vmatprep.subr.mxu0 0.0
      %3688 = vmatpush2.msra.mxu0 0.0
      %3689 = vmatprep.subr.mxu0 0.0
      %3690 = vmatpush2.msra.mxu0 0.0
      %3691 = vmatprep.subr.mxu0 0.0
      %3692 = vmatpush2.msra.mxu0 0.0
      %3693 = vmatprep.subr.mxu0 0.0
      %3694 = vmatpush2.msra.mxu0 0.0
      %3695 = vmatprep.subr.mxu0 0.0
      %3696 = vmatpush2.msra.mxu0 0.0
      %3697 = vmatprep.subr.mxu0 0.0
      %3698 = vmatpush2.msra.mxu0 0.0
      %3699 = vmatprep.subr.mxu0 0.0
      %3700 = vmatpush2.msra.mxu0 0.0
      %3701 = vmatprep.subr.mxu0 0.0
      %3702 = vmatpush2.msra.mxu0 0.0
      %3703 = vmatprep.subr.mxu0 0.0
      %3704 = vmatpush2.msra.mxu0 0.0
      %3705 = vmatprep.subr.mxu0 0.0
      %3706 = vmatpush2.msra.mxu0 0.0
      %3707 = vmatprep.subr.mxu0 0.0
      %3708 = vmatpush2.msra.mxu0 0.0
      %3709 = vmatprep.subr.mxu0 0.0
      %3710 = vmatpush2.msra.mxu0 0.0
      %3711 = vmatprep.mubr.f32.mxu0 0.0
      %3712 = vmatmul.mubr.f32.gmra.mxu0 %v3645
      %v3713 = vpop.f32.mrf.mxu0
      %v3714 = vadd.f32 0.0, %v3713
      %v3715 = vpop.f32.mrf.mxu0
      %3716 = vdwg.mxu0
      %v3718 = vsel %vm1339, %v3714, 0
      %3720 = vmatprep.subr.mxu0 0.0
      %3721 = vmatpush1.msra.mxu0 0.0
      %3722 = vmatprep.subr.mxu0 0.0
      %3723 = vmatpush1.msra.mxu0 0.0
      %3724 = vmatprep.subr.mxu0 0.0
      %3725 = vmatpush1.msra.mxu0 0.0
      %3726 = vmatprep.subr.mxu0 0.0
      %3727 = vmatpush1.msra.mxu0 0.0
      %3728 = vmatprep.subr.mxu0 0.0
      %3729 = vmatpush1.msra.mxu0 0.0
      %3730 = vmatprep.subr.mxu0 0.0
      %3731 = vmatpush1.msra.mxu0 0.0
      %3732 = vmatprep.subr.mxu0 0.0
      %3733 = vmatpush1.msra.mxu0 0.0
      %3734 = vmatprep.subr.mxu0 0.0
      %3735 = vmatpush1.msra.mxu0 0.0
      %3736 = vmatprep.subr.mxu0 0.0
      %3737 = vmatpush1.msra.mxu0 0.0
      %3738 = vmatprep.subr.mxu0 0.0
      %3739 = vmatpush1.msra.mxu0 0.0
      %3740 = vmatprep.subr.mxu0 0.0
      %3741 = vmatpush1.msra.mxu0 0.0
      %3742 = vmatprep.subr.mxu0 0.0
      %3743 = vmatpush1.msra.mxu0 0.0
      %3744 = vmatprep.subr.mxu0 0.0
      %3745 = vmatpush1.msra.mxu0 0.0
      %3746 = vmatprep.subr.mxu0 0.0
      %3747 = vmatpush1.msra.mxu0 0.0
      %3748 = vmatprep.subr.mxu0 0.0
      %3749 = vmatpush1.msra.mxu0 %v2832
      %3750 = vmatprep.subr.mxu0 0.0
      %3751 = vmatpush1.msra.mxu0 %v2831
      %3752 = vmatprep.subr.mxu0 0.0
      %3753 = vmatpush2.msra.mxu0 0.0
      %3754 = vmatprep.subr.mxu0 0.0
      %3755 = vmatpush2.msra.mxu0 0.0
      %3756 = vmatprep.subr.mxu0 0.0
      %3757 = vmatpush2.msra.mxu0 0.0
      %3758 = vmatprep.subr.mxu0 0.0
      %3759 = vmatpush2.msra.mxu0 0.0
      %3760 = vmatprep.subr.mxu0 0.0
      %3761 = vmatpush2.msra.mxu0 0.0
      %3762 = vmatprep.subr.mxu0 0.0
      %3763 = vmatpush2.msra.mxu0 0.0
      %3764 = vmatprep.subr.mxu0 0.0
      %3765 = vmatpush2.msra.mxu0 0.0
      %3766 = vmatprep.subr.mxu0 0.0
      %3767 = vmatpush2.msra.mxu0 0.0
      %3768 = vmatprep.subr.mxu0 0.0
      %3769 = vmatpush2.msra.mxu0 0.0
      %3770 = vmatprep.subr.mxu0 0.0
      %3771 = vmatpush2.msra.mxu0 0.0
      %3772 = vmatprep.subr.mxu0 0.0
      %3773 = vmatpush2.msra.mxu0 0.0
      %3774 = vmatprep.subr.mxu0 0.0
      %3775 = vmatpush2.msra.mxu0 0.0
      %3776 = vmatprep.subr.mxu0 0.0
      %3777 = vmatpush2.msra.mxu0 0.0
      %3778 = vmatprep.subr.mxu0 0.0
      %3779 = vmatpush2.msra.mxu0 0.0
      %3780 = vmatprep.subr.mxu0 0.0
      %3781 = vmatpush2.msra.mxu0 0.0
      %3782 = vmatprep.subr.mxu0 0.0
      %3783 = vmatpush2.msra.mxu0 0.0
      %3784 = vmatprep.mubr.f32.mxu0 0.0
      %3785 = vmatmul.mubr.f32.gmra.mxu0 %v3718
      %v3786 = vpop.f32.mrf.mxu0
      %v3787 = vadd.f32 0.0, %v3786
      %v3788 = vpop.f32.mrf.mxu0
      %3789 = vdwg.mxu0
      %v3790 = vadd.f32 %v3549, %v3787
      %v3791 = vadd.f32 %v2528, %v3790
      %s3792 = scalar_lea.vmem %s16, 1
      %v3793 = vld [vmem:[%s3792] sm:$0x1]
      %v3795 = vlaneseq
      %v3796 = vshrl.u32 %v3795, 7
      %v3797 = vsub.s32 0, %v3796
      %v3798 = vrot.slane %v3793, %v3797
      %v3800 = vadd.f32 %v3791, %v3798
      %s3801 = scalar_lea.vmem %s17, 1
      %v3802 = vld [vmem:[%s3801] sm:$0x1]
      %s3803 = scalar_lea.vmem %s18, 1
      %v3804 = vld [vmem:[%s3803] sm:$0x1]
      %v3805 = vsel %vm1044, %v3800, 0.0
      %3806 = vadd.xlane.f32.xlu0 %v3805
      %v3807 = vpop.xlane.xlu0 %3806
      %v3808 = vmul.f32 %v3807, %v1048
      %v3809 = vsub.f32 %v3800, %v3808
      %v3810 = vmul.f32 %v3809, %v3809
      %v3811 = vsel %vm1044, %v3810, 0.0
      %3812 = vadd.xlane.f32.xlu0 %v3811
      %v3813 = vpop.xlane.xlu0 %3812
      %v3814 = vmul.f32 %v3813, %v1048
      %v3815 = vadd.f32 %v3814, 1e-06
      %v3816 = vrsqrt.pop %v3815
      %v3817 = vmul.f32 %v3809, %v3816
      %v3819 = vlaneseq
      %v3820 = vshrl.u32 %v3819, 7
      %v3821 = vsub.s32 0, %v3820
      %v3822 = vrot.slane %v3802, %v3821
      %v3824 = vmul.f32 %v3817, %v3822
      %v3826 = vlaneseq
      %v3827 = vshrl.u32 %v3826, 7
      %v3828 = vsub.s32 0, %v3827
      %v3829 = vrot.slane %v3804, %v3828
      %v3831 = vadd.f32 %v3824, %v3829
      %s3832 = scalar_lea.vmem %s19, 64
      %v3833 = vld [vmem:[%s3832] sm:$0xff]
      %v3834 = vld [vmem:[%s3832 + $0x8] sm:$0xff]
      %v3835 = vld [vmem:[%s3832 + $0x10] sm:$0xff]
      %v3836 = vld [vmem:[%s3832 + $0x18] sm:$0xff]
      %v3837 = vld [vmem:[%s3832 + $0x20] sm:$0xff]
      %v3838 = vld [vmem:[%s3832 + $0x28] sm:$0xff]
      %v3839 = vld [vmem:[%s3832 + $0x30] sm:$0xff]
      %v3840 = vld [vmem:[%s3832 + $0x38] sm:$0xff]
      %s3841 = scalar_lea.vmem %s20, 1
      %v3842 = vld [vmem:[%s3841] sm:$0x1]
      %v3844 = vlaneseq
      %v3845 = vshrl.u32 %v3844, 7
      %v3846 = vsub.s32 0, %v3845
      %v3847 = vrot.slane %v3842, %v3846
      %v3850 = vsel %vm1044, %v3831, 0
      %3852 = vmatprep.subr.mxu0 0.0
      %3853 = vmatpush1.msra.mxu0 0.0
      %3854 = vmatprep.subr.mxu0 0.0
      %3855 = vmatpush1.msra.mxu0 0.0
      %3856 = vmatprep.subr.mxu0 0.0
      %3857 = vmatpush1.msra.mxu0 0.0
      %3858 = vmatprep.subr.mxu0 0.0
      %3859 = vmatpush1.msra.mxu0 0.0
      %3860 = vmatprep.subr.mxu0 0.0
      %3861 = vmatpush1.msra.mxu0 0.0
      %3862 = vmatprep.subr.mxu0 0.0
      %3863 = vmatpush1.msra.mxu0 0.0
      %3864 = vmatprep.subr.mxu0 0.0
      %3865 = vmatpush1.msra.mxu0 0.0
      %3866 = vmatprep.subr.mxu0 0.0
      %3867 = vmatpush1.msra.mxu0 0.0
      %3868 = vmatprep.subr.mxu0 0.0
      %3869 = vmatpush1.msra.mxu0 %v3840
      %3870 = vmatprep.subr.mxu0 0.0
      %3871 = vmatpush1.msra.mxu0 %v3839
      %3872 = vmatprep.subr.mxu0 0.0
      %3873 = vmatpush1.msra.mxu0 %v3838
      %3874 = vmatprep.subr.mxu0 0.0
      %3875 = vmatpush1.msra.mxu0 %v3837
      %3876 = vmatprep.subr.mxu0 0.0
      %3877 = vmatpush1.msra.mxu0 %v3836
      %3878 = vmatprep.subr.mxu0 0.0
      %3879 = vmatpush1.msra.mxu0 %v3835
      %3880 = vmatprep.subr.mxu0 0.0
      %3881 = vmatpush1.msra.mxu0 %v3834
      %3882 = vmatprep.subr.mxu0 0.0
      %3883 = vmatpush1.msra.mxu0 %v3833
      %3884 = vmatprep.subr.mxu0 0.0
      %3885 = vmatpush2.msra.mxu0 0.0
      %3886 = vmatprep.subr.mxu0 0.0
      %3887 = vmatpush2.msra.mxu0 0.0
      %3888 = vmatprep.subr.mxu0 0.0
      %3889 = vmatpush2.msra.mxu0 0.0
      %3890 = vmatprep.subr.mxu0 0.0
      %3891 = vmatpush2.msra.mxu0 0.0
      %3892 = vmatprep.subr.mxu0 0.0
      %3893 = vmatpush2.msra.mxu0 0.0
      %3894 = vmatprep.subr.mxu0 0.0
      %3895 = vmatpush2.msra.mxu0 0.0
      %3896 = vmatprep.subr.mxu0 0.0
      %3897 = vmatpush2.msra.mxu0 0.0
      %3898 = vmatprep.subr.mxu0 0.0
      %3899 = vmatpush2.msra.mxu0 0.0
      %3900 = vmatprep.subr.mxu0 0.0
      %3901 = vmatpush2.msra.mxu0 0.0
      %3902 = vmatprep.subr.mxu0 0.0
      %3903 = vmatpush2.msra.mxu0 0.0
      %3904 = vmatprep.subr.mxu0 0.0
      %3905 = vmatpush2.msra.mxu0 0.0
      %3906 = vmatprep.subr.mxu0 0.0
      %3907 = vmatpush2.msra.mxu0 0.0
      %3908 = vmatprep.subr.mxu0 0.0
      %3909 = vmatpush2.msra.mxu0 0.0
      %3910 = vmatprep.subr.mxu0 0.0
      %3911 = vmatpush2.msra.mxu0 0.0
      %3912 = vmatprep.subr.mxu0 0.0
      %3913 = vmatpush2.msra.mxu0 0.0
      %3914 = vmatprep.subr.mxu0 0.0
      %3915 = vmatpush2.msra.mxu0 0.0
      %3916 = vmatprep.mubr.f32.mxu0 0.0
      %3917 = vmatmul.mubr.f32.gmra.mxu0 %v3850
      %v3918 = vpop.f32.mrf.mxu0
      %v3919 = vadd.f32 %v3847, %v3918
      %v3920 = vpop.f32.mrf.mxu0
      %3921 = vdwg.mxu0
      %v3922 = vmul.f32 %v3919, 0.5
      %v3923 = vmul.f32 %v3919, 0.044715
      %v3924 = vmul.f32 %v3923, %v3919
      %v3925 = vmul.f32 %v3924, %v3919
      %v3926 = vadd.f32 %v3919, %v3925
      %v3927 = vmul.f32 %v3926, 0.7978846
      %v3928 = vtanh.pop %v3927
      %v3929 = vadd.f32 %v3928, 1.0
      %v3930 = vmul.f32 %v3922, %v3929
      %s3931 = scalar_lea.vmem %s21, 128
      %v3932 = vld [vmem:[%s3931] sm:$0xff]
      %v3933 = vld [vmem:[%s3931 + $0x8] sm:$0xff]
      %v3934 = vld [vmem:[%s3931 + $0x10] sm:$0xff]
      %v3935 = vld [vmem:[%s3931 + $0x18] sm:$0xff]
      %v3936 = vld [vmem:[%s3931 + $0x20] sm:$0xff]
      %v3937 = vld [vmem:[%s3931 + $0x28] sm:$0xff]
      %v3938 = vld [vmem:[%s3931 + $0x30] sm:$0xff]
      %v3939 = vld [vmem:[%s3931 + $0x38] sm:$0xff]
      %v3940 = vld [vmem:[%s3931 + $0x40] sm:$0xff]
      %v3941 = vld [vmem:[%s3931 + $0x48] sm:$0xff]
      %v3942 = vld [vmem:[%s3931 + $0x50] sm:$0xff]
      %v3943 = vld [vmem:[%s3931 + $0x58] sm:$0xff]
      %v3944 = vld [vmem:[%s3931 + $0x60] sm:$0xff]
      %v3945 = vld [vmem:[%s3931 + $0x68] sm:$0xff]
      %v3946 = vld [vmem:[%s3931 + $0x70] sm:$0xff]
      %v3947 = vld [vmem:[%s3931 + $0x78] sm:$0xff]
      %3948 = vmatprep.subr.mxu0 0.0
      %3949 = vmatpush1.msra.mxu0 %v3947
      %3950 = vmatprep.subr.mxu0 0.0
      %3951 = vmatpush1.msra.mxu0 %v3946
      %3952 = vmatprep.subr.mxu0 0.0
      %3953 = vmatpush1.msra.mxu0 %v3945
      %3954 = vmatprep.subr.mxu0 0.0
      %3955 = vmatpush1.msra.mxu0 %v3944
      %3956 = vmatprep.subr.mxu0 0.0
      %3957 = vmatpush1.msra.mxu0 %v3943
      %3958 = vmatprep.subr.mxu0 0.0
      %3959 = vmatpush1.msra.mxu0 %v3942
      %3960 = vmatprep.subr.mxu0 0.0
      %3961 = vmatpush1.msra.mxu0 %v3941
      %3962 = vmatprep.subr.mxu0 0.0
      %3963 = vmatpush1.msra.mxu0 %v3940
      %3964 = vmatprep.subr.mxu0 0.0
      %3965 = vmatpush1.msra.mxu0 %v3939
      %3966 = vmatprep.subr.mxu0 0.0
      %3967 = vmatpush1.msra.mxu0 %v3938
      %3968 = vmatprep.subr.mxu0 0.0
      %3969 = vmatpush1.msra.mxu0 %v3937
      %3970 = vmatprep.subr.mxu0 0.0
      %3971 = vmatpush1.msra.mxu0 %v3936
      %3972 = vmatprep.subr.mxu0 0.0
      %3973 = vmatpush1.msra.mxu0 %v3935
      %3974 = vmatprep.subr.mxu0 0.0
      %3975 = vmatpush1.msra.mxu0 %v3934
      %3976 = vmatprep.subr.mxu0 0.0
      %3977 = vmatpush1.msra.mxu0 %v3933
      %3978 = vmatprep.subr.mxu0 0.0
      %3979 = vmatpush1.msra.mxu0 %v3932
      %3980 = vmatprep.subr.mxu0 0.0
      %3981 = vmatpush2.msra.mxu0 0.0
      %3982 = vmatprep.subr.mxu0 0.0
      %3983 = vmatpush2.msra.mxu0 0.0
      %3984 = vmatprep.subr.mxu0 0.0
      %3985 = vmatpush2.msra.mxu0 0.0
      %3986 = vmatprep.subr.mxu0 0.0
      %3987 = vmatpush2.msra.mxu0 0.0
      %3988 = vmatprep.subr.mxu0 0.0
      %3989 = vmatpush2.msra.mxu0 0.0
      %3990 = vmatprep.subr.mxu0 0.0
      %3991 = vmatpush2.msra.mxu0 0.0
      %3992 = vmatprep.subr.mxu0 0.0
      %3993 = vmatpush2.msra.mxu0 0.0
      %3994 = vmatprep.subr.mxu0 0.0
      %3995 = vmatpush2.msra.mxu0 0.0
      %3996 = vmatprep.subr.mxu0 0.0
      %3997 = vmatpush2.msra.mxu0 0.0
      %3998 = vmatprep.subr.mxu0 0.0
      %3999 = vmatpush2.msra.mxu0 0.0
      %4000 = vmatprep.subr.mxu0 0.0
      %4001 = vmatpush2.msra.mxu0 0.0
      %4002 = vmatprep.subr.mxu0 0.0
      %4003 = vmatpush2.msra.mxu0 0.0
      %4004 = vmatprep.subr.mxu0 0.0
      %4005 = vmatpush2.msra.mxu0 0.0
      %4006 = vmatprep.subr.mxu0 0.0
      %4007 = vmatpush2.msra.mxu0 0.0
      %4008 = vmatprep.subr.mxu0 0.0
      %4009 = vmatpush2.msra.mxu0 0.0
      %4010 = vmatprep.subr.mxu0 0.0
      %4011 = vmatpush2.msra.mxu0 0.0
      %4012 = vmatprep.mubr.f32.mxu0 0.0
      %4013 = vmatmul.mubr.f32.gmra.mxu0 %v3930
      %v4014 = vpop.f32.mrf.mxu0
      %v4015 = vadd.f32 0.0, %v4014
      %v4016 = vpop.f32.mrf.mxu0
      %4017 = vdwg.mxu0
      %v4018 = vadd.f32 %v3800, %v4015
      %s4019 = scalar_lea.vmem %s22, 1
      %v4020 = vld [vmem:[%s4019] sm:$0x1]
      %v4022 = vlaneseq
      %v4023 = vshrl.u32 %v4022, 7
      %v4024 = vsub.s32 0, %v4023
      %v4025 = vrot.slane %v4020, %v4024
      %v4027 = vadd.f32 %v4018, %v4025
      %v4028 = vld [vmem:[%s3] sm:$0x1]
      %v4029 = vld [vmem:[%s4] sm:$0x1]
      %v4030 = vsel %vm1044, %v4027, 0.0
      %4031 = vadd.xlane.f32.xlu0 %v4030
      %v4032 = vpop.xlane.xlu0 %4031
      %v4033 = vmul.f32 %v4032, %v1048
      %v4034 = vsub.f32 %v4027, %v4033
      %v4035 = vmul.f32 %v4034, %v4034
      %v4036 = vsel %vm1044, %v4035, 0.0
      %4037 = vadd.xlane.f32.xlu0 %v4036
      %v4038 = vpop.xlane.xlu0 %4037
      %v4039 = vmul.f32 %v4038, %v1048
      %v4040 = vadd.f32 %v4039, 1e-06
      %v4041 = vrsqrt.pop %v4040
      %v4042 = vmul.f32 %v4034, %v4041
      %v4044 = vlaneseq
      %v4045 = vshrl.u32 %v4044, 7
      %v4046 = vsub.s32 0, %v4045
      %v4047 = vrot.slane %v4028, %v4046
      %v4049 = vmul.f32 %v4042, %v4047
      %v4051 = vlaneseq
      %v4052 = vshrl.u32 %v4051, 7
      %v4053 = vsub.s32 0, %v4052
      %v4054 = vrot.slane %v4029, %v4053
      %v4056 = vadd.f32 %v4049, %v4054
      %v4057 = vld [vmem:[%s5] sm:$0xff]
      %v4058 = vld [vmem:[%s5 + $0x8] sm:$0xff]
      %v4059 = vld [vmem:[%s5 + $0x10] sm:$0xff]
      %v4060 = vld [vmem:[%s5 + $0x18] sm:$0xff]
      %v4061 = vld [vmem:[%s5 + $0x20] sm:$0xff]
      %v4062 = vld [vmem:[%s5 + $0x28] sm:$0xff]
      %v4063 = vld [vmem:[%s5 + $0x30] sm:$0xff]
      %v4064 = vld [vmem:[%s5 + $0x38] sm:$0xff]
      %v4065 = vld [vmem:[%s6] sm:$0x1]
      %v4067 = vlaneseq
      %v4068 = vshrl.u32 %v4067, 7
      %v4069 = vsub.s32 0, %v4068
      %v4070 = vrot.slane %v4065, %v4069
      %v4073 = vsel %vm1044, %v4056, 0
      %4075 = vmatprep.subr.mxu0 0.0
      %4076 = vmatpush1.msra.mxu0 0.0
      %4077 = vmatprep.subr.mxu0 0.0
      %4078 = vmatpush1.msra.mxu0 0.0
      %4079 = vmatprep.subr.mxu0 0.0
      %4080 = vmatpush1.msra.mxu0 0.0
      %4081 = vmatprep.subr.mxu0 0.0
      %4082 = vmatpush1.msra.mxu0 0.0
      %4083 = vmatprep.subr.mxu0 0.0
      %4084 = vmatpush1.msra.mxu0 0.0
      %4085 = vmatprep.subr.mxu0 0.0
      %4086 = vmatpush1.msra.mxu0 0.0
      %4087 = vmatprep.subr.mxu0 0.0
      %4088 = vmatpush1.msra.mxu0 0.0
      %4089 = vmatprep.subr.mxu0 0.0
      %4090 = vmatpush1.msra.mxu0 0.0
      %4091 = vmatprep.subr.mxu0 0.0
      %4092 = vmatpush1.msra.mxu0 %v4064
      %4093 = vmatprep.subr.mxu0 0.0
      %4094 = vmatpush1.msra.mxu0 %v4063
      %4095 = vmatprep.subr.mxu0 0.0
      %4096 = vmatpush1.msra.mxu0 %v4062
      %4097 = vmatprep.subr.mxu0 0.0
      %4098 = vmatpush1.msra.mxu0 %v4061
      %4099 = vmatprep.subr.mxu0 0.0
      %4100 = vmatpush1.msra.mxu0 %v4060
      %4101 = vmatprep.subr.mxu0 0.0
      %4102 = vmatpush1.msra.mxu0 %v4059
      %4103 = vmatprep.subr.mxu0 0.0
      %4104 = vmatpush1.msra.mxu0 %v4058
      %4105 = vmatprep.subr.mxu0 0.0
      %4106 = vmatpush1.msra.mxu0 %v4057
      %4107 = vmatprep.subr.mxu0 0.0
      %4108 = vmatpush2.msra.mxu0 0.0
      %4109 = vmatprep.subr.mxu0 0.0
      %4110 = vmatpush2.msra.mxu0 0.0
      %4111 = vmatprep.subr.mxu0 0.0
      %4112 = vmatpush2.msra.mxu0 0.0
      %4113 = vmatprep.subr.mxu0 0.0
      %4114 = vmatpush2.msra.mxu0 0.0
      %4115 = vmatprep.subr.mxu0 0.0
      %4116 = vmatpush2.msra.mxu0 0.0
      %4117 = vmatprep.subr.mxu0 0.0
      %4118 = vmatpush2.msra.mxu0 0.0
      %4119 = vmatprep.subr.mxu0 0.0
      %4120 = vmatpush2.msra.mxu0 0.0
      %4121 = vmatprep.subr.mxu0 0.0
      %4122 = vmatpush2.msra.mxu0 0.0
      %4123 = vmatprep.subr.mxu0 0.0
      %4124 = vmatpush2.msra.mxu0 0.0
      %4125 = vmatprep.subr.mxu0 0.0
      %4126 = vmatpush2.msra.mxu0 0.0
      %4127 = vmatprep.subr.mxu0 0.0
      %4128 = vmatpush2.msra.mxu0 0.0
      %4129 = vmatprep.subr.mxu0 0.0
      %4130 = vmatpush2.msra.mxu0 0.0
      %4131 = vmatprep.subr.mxu0 0.0
      %4132 = vmatpush2.msra.mxu0 0.0
      %4133 = vmatprep.subr.mxu0 0.0
      %4134 = vmatpush2.msra.mxu0 0.0
      %4135 = vmatprep.subr.mxu0 0.0
      %4136 = vmatpush2.msra.mxu0 0.0
      %4137 = vmatprep.subr.mxu0 0.0
      %4138 = vmatpush2.msra.mxu0 0.0
      %4139 = vmatprep.mubr.f32.mxu0 0.0
      %4140 = vmatmul.mubr.f32.gmra.mxu0 %v4073
      %v4141 = vpop.f32.mrf.mxu0
      %v4142 = vadd.f32 %v4070, %v4141
      %v4143 = vpop.f32.mrf.mxu0
      %4144 = vdwg.mxu0
      %v4145 = vxor.u32 %v4142, 2147483648
      %v4146 = vmul.f32 %v4145, 1.442695
      %v4147 = vpow.pop %v4146
      %v4148 = vadd.f32 %v4147, 1.0
      %v4149 = vrcp.pop %v4148
      %v4150 = vmul.f32 1.0, %v4149
      %v4151 = vmul.f32 %v4150, 18.0
      %4152 = vst [vmem:[%s725] sm:$0xff] %v4151
      %p4153 = scmp.lt.s32.totalorder %s34, 1
      %s4154 = scalar_select %p4153, %s34, 1
      %s4155 = smul.addr %s4154, 8
      %s4156 = scalar_lea.vmem %s23, %s4155
      // Predicated region
      $region113: #{covid_vit_forward.1} parent=111 // pred_check
        %p4157 = pneg %p545
      $region114: #{covid_vit_forward.1} parent=111 // pred_check_branch
        %4159 = sbr.rel (%p4157) target = $region116
      $region115: #{covid_vit_forward.1} parent=111 // pred_region
        _
      $region116: #{covid_vit_forward.1} parent=111 // pred_fallthru
        _
    $region112: #{covid_vit_forward.1} parent=5 // pred_fallthru
      _
    %p4160 = scmp.le.s32.totalorder 2, %s29
    // Predicated region
    $region117: #{covid_vit_forward.1} parent=5 // pred_check
      %p4161 = pneg %p4160
    $region118: #{covid_vit_forward.1} parent=5 // pred_check_branch
      %4163 = sbr.rel (%p4161) target = $region120
    $region119: #{covid_vit_forward.1} parent=5 // pred_region
      %s4164 = ssub.s32 %s29, 2
      // Predicated region
      $region121: #{covid_vit_forward.1} parent=119 // pred_check
        %p4165 = pneg %p551
      $region122: #{covid_vit_forward.1} parent=119 // pred_check_branch
        %4167 = sbr.rel (%p4165) target = $region124
      $region123: #{covid_vit_forward.1} parent=119 // pred_region
        %p4168 = scmp.lt.s32.totalorder %s35, 1
        %s4169 = scalar_select %p4168, %s35, 1
        %s4170 = smul.addr %s4169, 8
        %s4171 = scalar_lea.vmem %s23, %s4170
      $region124: #{covid_vit_forward.1} parent=119 // pred_fallthru
        _
    $region120: #{covid_vit_forward.1} parent=5 // pred_fallthru
      _
  $region6: #{covid_vit_forward.1} parent=0 // loop_footer
    %s33 = sadd.s32 1, %s29
  $region7: #{covid_vit_forward.1} parent=0 // loop_footer_branch
    %28 = sbr.rel target = $region3
  $region8: #{covid_vit_forward.1} parent=0 // loop_exit
    _

</llo_original>
